<compile_context>
chip_gen: v6e
topology: v6e:2x2x1
jax: 0.10.0
libtpu: 0.0.40
codegen_flags: <defaults>
</compile_context>

<pallas_src>
import functools

import jax
import jax.numpy as jnp
import numpy as np
from jax.experimental import pallas as pl
from jax.experimental.pallas import tpu as pltpu


def _round_up(x, m):
    return (x + m - 1) // m * m


# ---------------------------------------------------------------------------
# Kernel
# ---------------------------------------------------------------------------
def wavenet_kernel(x_ref, w_start_ref, w01_ref, b_ref, wres_ref,
                   w_end1_ref, w_end2_ref, out_ref, *,
                   dilations, seq_len, groups):
    """One grid step = `bg_tile` packed batch groups (G batch elems per lane).

    x_ref:      (M, G*C)          packed input, row = bg*L + t, lanes = (g, c)
    w_start_ref:(G*C, G*R)        block-diagonal start 1x1 conv
    w01_ref:    (NL, 2*G*R, G*D)  fused causal conv [tap t-d ; tap t], blk-diag
    b_ref:      (NL, 1, G*D)      causal-conv bias, tiled per group (f32)
    wres_ref:   (NL, G*D, G*R)    block-diagonal 1x1 residual/skip conv
    w_end1_ref: (G*R, G*S)        block-diagonal end 1x1 conv #1
    w_end2_ref: (S, C)            end 1x1 conv #2 (shared, unpacked)
    out_ref:    (M, G*C)          packed logits
    """
    M = x_ref.shape[0]
    GR = w_start_ref.shape[1]          # groups * residual_dim (lane-dense)
    S, C = w_end2_ref.shape

    def mm(a, w):  # MXU matmul in the weights' dtype (bf16), f32 accumulation
        return jnp.dot(a.astype(w.dtype), w, preferred_element_type=jnp.float32)

    residual = mm(x_ref[...], w_start_ref[...])                  # (M, GR) f32
    skips = jnp.zeros_like(residual)

    # Local time index of every row (rows are batch-group-major: row = bg*L+t).
    t_local = jax.lax.broadcasted_iota(jnp.int32, (M, GR), 0) % seq_len

    # TODO(synk): for deep stacks (num_block*num_layer >~ 16) convert this
    # unrolled Python loop into lax.fori_loop over the leading NL axis of
    # w01/b/wres with the dilations held in SMEM to bound live ranges.
    for l, d in enumerate(dilations):
        # Causal shift by d: sublane roll (XLU slot, off the MXU/VPU path)
        # plus a t < d mask; the mask also kills cross-batch-group leakage of
        # the flat roll and is correct even when d >= L.
        # TODO(synk): if a bundle dump shows the vector-extended slot binding,
        # replace the roll with offset reads from a pre-padded VMEM scratch.
        rolled = pltpu.roll(residual, shift=d, axis=0)
        shifted = jnp.where(t_local >= d, rolled, 0.0)
        # Fused causal conv: both taps in a single K = 2*GR matmul (both
        # halves are 128-lane aligned, so the concat is layout-free).
        xcat = jnp.concatenate([shifted, residual], axis=1)      # (M, 2*GR)
        conv = mm(xcat, w01_ref[l]) + b_ref[l]                   # (M, GD) f32
        # Gate: tanh(x)*sigmoid(x) == u*(u-1)/(u*u+1) with u = exp(x).
        # One EUP exp + one reciprocal instead of tanh + sigmoid; the clamp
        # keeps exp in f32 range and is exact to f32 precision at the bounds.
        # (pl.reciprocal(..., approx=True) is a further EUP saving on
        #  v6e/v7x if ~2^-12 gate error is acceptable.)
        u = jnp.exp(jnp.clip(conv, -20.0, 20.0))
        gated = u * (u - 1.0) * pl.reciprocal(u * u + 1.0, approx=False)
        skip = mm(gated, wres_ref[l])                            # (M, GR)
        residual = residual + skip
        skips = skips + skip

    h = mm(jnp.maximum(skips, 0.0), w_end1_ref[...])             # (M, G*S)
    h = jnp.maximum(h, 0.0)
    # Unpack the lane groups through the final 1x1 conv: per-group slices are
    # 256-lane / 128-aligned (no relayout) and w_end2 stays dense (S, C), so
    # the big end matmul pays no block-diagonal overhead.
    for g in range(groups):
        out_ref[:, g * C:(g + 1) * C] = mm(h[:, g * S:(g + 1) * S],
                                           w_end2_ref[...])


# ---------------------------------------------------------------------------
# Parameter packing (block-diagonal over the G lane groups)
# ---------------------------------------------------------------------------
def pack_params(params, groups, matmul_dtype):
    C, R = params["w_start"].shape
    NL, _, D = params["w0"].shape
    S = params["w_end1"].shape[1]
    G = groups

    def bdiag2(w):                     # (K, N) -> (G*K, G*N) block diagonal
        K, N = w.shape
        out = jnp.zeros((G * K, G * N), jnp.float32)
        for g in range(G):
            out = out.at[g * K:(g + 1) * K, g * N:(g + 1) * N].set(w)
        return out

    def bdiag3(w):                     # (NL, K, N) -> (NL, G*K, G*N)
        _, K, N = w.shape
        out = jnp.zeros((NL, G * K, G * N), jnp.float32)
        for g in range(G):
            out = out.at[:, g * K:(g + 1) * K, g * N:(g + 1) * N].set(w)
        return out

    # Fused causal taps: rows [0, G*R) = shifted tap (t-d), rows [G*R, 2*G*R)
    # = current tap (t), block-diagonal over the G groups in both halves.
    w01 = jnp.zeros((NL, 2 * G * R, G * D), jnp.float32)
    for g in range(G):
        w01 = w01.at[:, g * R:(g + 1) * R, g * D:(g + 1) * D].set(params["w0"])
        w01 = w01.at[:, G * R + g * R:G * R + (g + 1) * R,
                     g * D:(g + 1) * D].set(params["w1"])

    packed = dict(
        w_start=bdiag2(params["w_start"]),
        w01=w01,
        b=jnp.tile(params["b"], (1, 1, G)),      # same bias in every group
        wres=bdiag3(params["wres"]),
        w_end1=bdiag2(params["w_end1"]),
        w_end2=params["w_end2"],
    )
    for k in ("w_start", "w01", "wres", "w_end1", "w_end2"):
        packed[k] = packed[k].astype(matmul_dtype)
    packed["b"] = packed["b"].astype(jnp.float32)  # bias stays f32
    return packed


# ---------------------------------------------------------------------------
# Wrapper
# ---------------------------------------------------------------------------
def wavenet_forward(x_ncl, params, dilations, *, groups=None, bg_tile=None,
                    matmul_dtype=jnp.bfloat16):
    """PyTorch-style NCL in / NCL out; one fused Pallas kernel inside."""
    B, C, L = x_ncl.shape
    if L % 8:
        raise ValueError("sequence length must be a multiple of 8")
    R = params["w_start"].shape[1]
    D = params["w0"].shape[2]
    S = params["w_end1"].shape[1]
    NL = params["w0"].shape[0]

    if groups is None:
        g = 128 // max(R, D) if 128 % max(R, D) == 0 else 1
        groups = max(1, min(g, B))
    G = groups

    # Pad batch to a multiple of G with zero sequences (output rows discarded;
    # batches never interact thanks to the t<d mask on the causal roll).
    B_pad = _round_up(B, G)
    x_blc = jnp.transpose(x_ncl, (0, 2, 1))                      # (B, L, C)
    if B_pad != B:
        x_blc = jnp.concatenate(
            [x_blc, jnp.zeros((B_pad - B, L, C), x_blc.dtype)], axis=0)
    NBG = B_pad // G
    GC = G * C

    # Lane-pack G batch elements side by side: row = bg*L + t, lanes = (g, c).
    # Streamed to the kernel in bf16 (halves HBM DMA / VMEM of the big slab).
    x_packed = (x_blc.reshape(NBG, G, L, C).transpose(0, 2, 1, 3)
                .reshape(NBG * L, GC).astype(matmul_dtype))

    p = pack_params(params, G, matmul_dtype)
    GR = p["w_start"].shape[1]
    GD = p["w01"].shape[2]
    GS = p["w_end1"].shape[1]

    # Batch-group tile: the largest divisor of NBG that (a) keeps >= 2 grid
    # steps whenever possible (double-buffer pipelining + both v7x
    # TensorCores on the "parallel" axis) and (b) keeps the double-buffered
    # activation slabs within a conservative budget for v7x's 64 MiB VMEM.
    if bg_tile is None:
        budget = 20 * 1024 * 1024
        best = 1
        for cand in range(1, NBG + 1):
            if NBG % cand:
                continue
            rows_c = cand * L
            act = 2 * rows_c * GC * (2 + 4) + 8 * rows_c * (2 * GR) * 4
            if act > budget:
                continue
            if NBG >= 2 and NBG // cand < 2:
                continue
            best = cand
        bg_tile = best
    if NBG % bg_tile:
        raise ValueError("bg_tile must divide the number of batch groups")
    rows = bg_tile * L
    Mq = NBG * L

    def full_spec(a):
        n = a.ndim
        return pl.BlockSpec(a.shape, lambda i, n=n: (0,) * n)

    weight_bytes = sum(int(v.size) * v.dtype.itemsize for v in p.values())
    flops = 2 * Mq * (GC * GR + NL * (2 * GR * GD + GD * GR) + GR * GS
                      + G * S * C)
    cost = pl.CostEstimate(
        flops=int(flops),
        transcendentals=int(Mq * GD * NL),            # one exp per gate elem
        bytes_accessed=int(Mq * GC * (2 + 4) + weight_bytes),
    )

    out_packed = pl.pallas_call(
        functools.partial(wavenet_kernel,
                          dilations=tuple(int(d) for d in dilations),
                          seq_len=L, groups=G),
        out_shape=jax.ShapeDtypeStruct((Mq, GC), jnp.float32),
        grid=(NBG // bg_tile,),
        in_specs=[
            pl.BlockSpec((rows, GC), lambda i: (i, 0)),   # activations/step
            full_spec(p["w_start"]),                      # weights stay resident
            full_spec(p["w01"]),
            full_spec(p["b"]),
            full_spec(p["wres"]),
            full_spec(p["w_end1"]),
            full_spec(p["w_end2"]),
        ],
        out_specs=pl.BlockSpec((rows, GC), lambda i: (i, 0)),
        compiler_params=pltpu.CompilerParams(
            dimension_semantics=("parallel",),            # batch-group tiles
            vmem_limit_bytes=32 * 1024 * 1024,            # safe on 64 MiB v7x
        ),
        cost_estimate=cost,
    )(x_packed, p["w_start"], p["w01"], p["b"], p["wres"],
      p["w_end1"], p["w_end2"])
    # TODO(synk): for B == 1 on v7x, add a second "parallel" grid axis over
    # L-tiles (carrying a max(dilations) left halo) so both TensorCores work.

    out = (out_packed.reshape(NBG, L, G, C).transpose(0, 2, 1, 3)
           .reshape(B_pad, L, C)[:B])
    return jnp.transpose(out, (0, 2, 1))                          # back to NCL


# ---------------------------------------------------------------------------
# Params & pure-JAX reference
# ---------------------------------------------------------------------------
def init_params(key, class_dim, residual_dim, dilation_dim, skip_dim,
                num_layers, kernel_size=2):
    """Deterministic init mimicking PyTorch Conv1d uniform(-1/sqrt(fan_in), .)."""
    ks = jax.random.split(key, 8)

    def u(k, shape, fan_in):
        bound = 1.0 / np.sqrt(fan_in)
        return jax.random.uniform(k, shape, jnp.float32, -bound, bound)

    C, R, D, S, NL = class_dim, residual_dim, dilation_dim, skip_dim, num_layers
    return dict(
        w_start=u(ks[0], (C, R), C),                  # 1x1, bias=False
        w0=u(ks[1], (NL, R, D), R * kernel_size),     # causal tap t-d
        w1=u(ks[2], (NL, R, D), R * kernel_size),     # causal tap t
        b=u(ks[3], (NL, 1, D), R * kernel_size),      # causal bias
        wres=u(ks[4], (NL, D, R), D),                 # 1x1, bias=False
        w_end1=u(ks[5], (R, S), R),                   # 1x1, bias=False
        w_end2=u(ks[6], (S, C), S),                   # 1x1, bias=False
    )


def wavenet_ref(x_ncl, params, dilations, matmul_dtype=jnp.bfloat16):
    """Pure-JAX reference on the unpacked params (same math & matmul dtype)."""
    def mm(a, w):
        return jnp.einsum("blk,kn->bln", a.astype(matmul_dtype),
                          w.astype(matmul_dtype),
                          preferred_element_type=jnp.float32)

    x = jnp.transpose(x_ncl, (0, 2, 1)).astype(jnp.float32)       # (B, L, C)
    L = x.shape[1]
    residual = mm(x, params["w_start"])
    skips = jnp.zeros_like(residual)
    for l, d in enumerate(dilations):
        shifted = jnp.pad(residual, ((0, 0), (d, 0), (0, 0)))[:, :L, :]
        conv = (mm(shifted, params["w0"][l]) + mm(residual, params["w1"][l])
                + params["b"][l])
        gated = jnp.tanh(conv) * jax.nn.sigmoid(conv)
        skip = mm(gated, params["wres"][l])
        residual = residual + skip
        skips = skips + skip
    h = jnp.maximum(skips, 0.0)
    h = mm(h, params["w_end1"])
    h = jnp.maximum(h, 0.0)
    return jnp.transpose(mm(h, params["w_end2"]), (0, 2, 1))      # NCL


if __name__ == "__main__":
    # Small but structurally faithful hyper-parameters: class/skip dims keep
    # the PyTorch defaults (256); the 32-wide residual/dilation channels are
    # lane-packed 4 batch elements wide inside the kernel (no zero padding).
    num_block, num_layer = 2, 3
    class_dim, residual_dim, dilation_dim, skip_dim = 256, 32, 32, 256
    kernel_size = 2
    B, L = 8, 64

    dilations = []
    for _b in range(num_block):
        d = 1
        for _k in range(num_layer):
            dilations.append(d)                        # 1, 2, 4, 1, 2, 4
            d *= 2

    key = jax.random.PRNGKey(0)
    kx, kp = jax.random.split(key)

    # PyTorch-style NCL input.
    x_ncl = jax.random.normal(kx, (B, class_dim, L), jnp.float32)

    params = init_params(kp, class_dim, residual_dim, dilation_dim, skip_dim,
                         num_layers=len(dilations), kernel_size=kernel_size)

    out = wavenet_forward(x_ncl, params, dilations, matmul_dtype=jnp.bfloat16)
    out = jax.block_until_ready(out)
    assert out.shape == (B, class_dim, L)

    ref = wavenet_ref(x_ncl, params, dilations, matmul_dtype=jnp.bfloat16)
    np.testing.assert_allclose(np.asarray(out), np.asarray(ref),
                               rtol=2e-3, atol=2e-3)
    print("KERNEL_OK")
</pallas_src>

<mosaic_0001>
module attributes {stable_mosaic.version = 11 : i64} {
  func.func @wavenet_kernel(%arg0: i32, %arg1: memref<64x1024xbf16, #tpu.memory_space<vmem>>, %arg2: memref<1024x128xbf16, #tpu.memory_space<vmem>>, %arg3: memref<6x256x128xbf16, #tpu.memory_space<vmem>>, %arg4: memref<6x1x128xf32, #tpu.memory_space<vmem>>, %arg5: memref<6x128x128xbf16, #tpu.memory_space<vmem>>, %arg6: memref<128x1024xbf16, #tpu.memory_space<vmem>>, %arg7: memref<256x256xbf16, #tpu.memory_space<vmem>>, %arg8: memref<64x1024xf32, #tpu.memory_space<vmem>>) attributes {dimension_semantics = [#tpu.dimension_semantics<parallel>], iteration_bounds = array<i64: 2>, scalar_prefetch = 0 : i64, scratch_operands = 0 : i64, tpu.core_type = #tpu.core_type<tc>, window_params = [{transform_indices = @transform_0, window_bounds = array<i64: 64, 1024>}, {pipeline_mode = #tpu.pipeline_mode<synchronous>, transform_indices = @transform_1, window_bounds = array<i64: 1024, 128>}, {pipeline_mode = #tpu.pipeline_mode<synchronous>, transform_indices = @transform_2, window_bounds = array<i64: 6, 256, 128>}, {pipeline_mode = #tpu.pipeline_mode<synchronous>, transform_indices = @transform_3, window_bounds = array<i64: 6, 1, 128>}, {pipeline_mode = #tpu.pipeline_mode<synchronous>, transform_indices = @transform_4, window_bounds = array<i64: 6, 128, 128>}, {pipeline_mode = #tpu.pipeline_mode<synchronous>, transform_indices = @transform_5, window_bounds = array<i64: 128, 1024>}, {pipeline_mode = #tpu.pipeline_mode<synchronous>, transform_indices = @transform_6, window_bounds = array<i64: 256, 256>}, {transform_indices = @transform_7, window_bounds = array<i64: 64, 1024>}]} {
    %c0 = arith.constant 0 : index
    %c0_0 = arith.constant 0 : index
    %0 = vector.load %arg1[%c0, %c0_0] : memref<64x1024xbf16, #tpu.memory_space<vmem>>, vector<64x1024xbf16>
    %c0_1 = arith.constant 0 : index
    %c0_2 = arith.constant 0 : index
    %1 = vector.load %arg2[%c0_1, %c0_2] : memref<1024x128xbf16, #tpu.memory_space<vmem>>, vector<1024x128xbf16>
    %cst = arith.constant dense<0.000000e+00> : vector<64x128xf32>
    %2 = tpu.matmul %0, %1, %cst {dimension_numbers = #tpu.dot_dimension_numbers<[1], [0], [0], [1], [0, 0, 1, 1], [], []>} : vector<64x1024xbf16>, vector<1024x128xbf16>, vector<64x128xf32> -> vector<64x128xf32>
    %cst_3 = arith.constant 0.000000e+00 : f32
    %3 = vector.broadcast %cst_3 : f32 to vector<64x128xf32>
    %4 = tpu.iota {dimensions = array<i32: 0>} : vector<64x128xi32>
    %c64_i32 = arith.constant 64 : i32
    %c0_i32 = arith.constant 0 : i32
    %5 = arith.cmpi eq, %c64_i32, %c0_i32 : i32
    %c1_i32 = arith.constant 1 : i32
    %6 = arith.select %5, %c1_i32, %c64_i32 : i32
    %7 = vector.broadcast %6 : i32 to vector<64x128xi32>
    %8 = arith.remsi %4, %7 : vector<64x128xi32>
    %c0_i32_4 = arith.constant 0 : i32
    %9 = vector.broadcast %c0_i32_4 : i32 to vector<64x128xi32>
    %10 = arith.cmpi ne, %8, %9 : vector<64x128xi32>
    %c0_i32_5 = arith.constant 0 : i32
    %11 = vector.broadcast %c0_i32_5 : i32 to vector<64x128xi32>
    %12 = arith.cmpi slt, %8, %11 : vector<64x128xi32>
    %c0_i32_6 = arith.constant 0 : i32
    %13 = arith.cmpi slt, %6, %c0_i32_6 : i32
    %14 = vector.broadcast %13 : i1 to vector<64x128xi1>
    %15 = vector.broadcast %14 : vector<64x128xi1> to vector<64x128xi1>
    %16 = arith.xori %12, %15 : vector<64x128xi1>
    %17 = arith.andi %16, %10 : vector<64x128xi1>
    %18 = vector.broadcast %6 : i32 to vector<64x128xi32>
    %19 = arith.addi %8, %18 : vector<64x128xi32>
    %20 = arith.select %17, %19, %8 : vector<64x128xi1>, vector<64x128xi32>
    %c1_i32_7 = arith.constant 1 : i32
    %21 = tpu.dynamic_rotate %2 by %c1_i32_7 dim 0 : vector<64x128xf32>, i32 -> vector<64x128xf32>
    %c1_i32_8 = arith.constant 1 : i32
    %22 = vector.broadcast %c1_i32_8 : i32 to vector<64x128xi32>
    %23 = arith.cmpi sge, %20, %22 : vector<64x128xi32>
    %cst_9 = arith.constant 0.000000e+00 : f32
    %24 = vector.broadcast %cst_9 : f32 to vector<64x128xf32>
    %25 = arith.select %23, %21, %24 : vector<64x128xi1>, vector<64x128xf32>
    %26 = tpu.concatenate %25, %2 in 1 : vector<64x128xf32>, vector<64x128xf32> -> vector<64x256xf32>
    %c0_10 = arith.constant 0 : index
    %c0_11 = arith.constant 0 : index
    %c0_12 = arith.constant 0 : index
    %27 = vector.load %arg3[%c0_10, %c0_11, %c0_12] : memref<6x256x128xbf16, #tpu.memory_space<vmem>>, vector<1x256x128xbf16>
    %28 = vector.shape_cast %27 : vector<1x256x128xbf16> to vector<256x128xbf16>
    %29 = arith.truncf %26 : vector<64x256xf32> to vector<64x256xbf16>
    %cst_13 = arith.constant dense<0.000000e+00> : vector<64x128xf32>
    %30 = tpu.matmul %29, %28, %cst_13 {dimension_numbers = #tpu.dot_dimension_numbers<[1], [0], [0], [1], [0, 0, 1, 1], [], []>} : vector<64x256xbf16>, vector<256x128xbf16>, vector<64x128xf32> -> vector<64x128xf32>
    %c0_14 = arith.constant 0 : index
    %c0_15 = arith.constant 0 : index
    %c0_16 = arith.constant 0 : index
    %31 = vector.load %arg4[%c0_14, %c0_15, %c0_16] : memref<6x1x128xf32, #tpu.memory_space<vmem>>, vector<1x1x128xf32>
    %32 = vector.shape_cast %31 : vector<1x1x128xf32> to vector<1x128xf32>
    %33 = vector.broadcast %32 : vector<1x128xf32> to vector<64x128xf32>
    %34 = arith.addf %30, %33 : vector<64x128xf32>
    %cst_17 = arith.constant -2.000000e+01 : f32
    %cst_18 = arith.constant 2.000000e+01 : f32
    %35 = vector.broadcast %cst_17 : f32 to vector<64x128xf32>
    %36 = arith.maximumf %35, %34 : vector<64x128xf32>
    %37 = vector.broadcast %cst_18 : f32 to vector<64x128xf32>
    %38 = arith.minimumf %37, %36 : vector<64x128xf32>
    %39 = math.exp %38 : vector<64x128xf32>
    %cst_19 = arith.constant 1.000000e+00 : f32
    %40 = vector.broadcast %cst_19 : f32 to vector<64x128xf32>
    %41 = arith.subf %39, %40 : vector<64x128xf32>
    %42 = arith.mulf %39, %41 : vector<64x128xf32>
    %43 = arith.mulf %39, %39 : vector<64x128xf32>
    %cst_20 = arith.constant 1.000000e+00 : f32
    %44 = vector.broadcast %cst_20 : f32 to vector<64x128xf32>
    %45 = arith.addf %43, %44 : vector<64x128xf32>
    %46 = tpu.reciprocal %45 : vector<64x128xf32> -> vector<64x128xf32>
    %47 = arith.mulf %42, %46 : vector<64x128xf32>
    %c0_21 = arith.constant 0 : index
    %c0_22 = arith.constant 0 : index
    %c0_23 = arith.constant 0 : index
    %48 = vector.load %arg5[%c0_21, %c0_22, %c0_23] : memref<6x128x128xbf16, #tpu.memory_space<vmem>>, vector<1x128x128xbf16>
    %49 = vector.shape_cast %48 : vector<1x128x128xbf16> to vector<128x128xbf16>
    %50 = arith.truncf %47 : vector<64x128xf32> to vector<64x128xbf16>
    %cst_24 = arith.constant dense<0.000000e+00> : vector<64x128xf32>
    %51 = tpu.matmul %50, %49, %cst_24 {dimension_numbers = #tpu.dot_dimension_numbers<[1], [0], [0], [1], [0, 0, 1, 1], [], []>} : vector<64x128xbf16>, vector<128x128xbf16>, vector<64x128xf32> -> vector<64x128xf32>
    %52 = arith.addf %2, %51 : vector<64x128xf32>
    %53 = arith.addf %3, %51 : vector<64x128xf32>
    %c2_i32 = arith.constant 2 : i32
    %54 = tpu.dynamic_rotate %52 by %c2_i32 dim 0 : vector<64x128xf32>, i32 -> vector<64x128xf32>
    %c2_i32_25 = arith.constant 2 : i32
    %55 = vector.broadcast %c2_i32_25 : i32 to vector<64x128xi32>
    %56 = arith.cmpi sge, %20, %55 : vector<64x128xi32>
    %cst_26 = arith.constant 0.000000e+00 : f32
    %57 = vector.broadcast %cst_26 : f32 to vector<64x128xf32>
    %58 = arith.select %56, %54, %57 : vector<64x128xi1>, vector<64x128xf32>
    %59 = tpu.concatenate %58, %52 in 1 : vector<64x128xf32>, vector<64x128xf32> -> vector<64x256xf32>
    %c1 = arith.constant 1 : index
    %c0_27 = arith.constant 0 : index
    %c0_28 = arith.constant 0 : index
    %60 = vector.load %arg3[%c1, %c0_27, %c0_28] : memref<6x256x128xbf16, #tpu.memory_space<vmem>>, vector<1x256x128xbf16>
    %61 = vector.shape_cast %60 : vector<1x256x128xbf16> to vector<256x128xbf16>
    %62 = arith.truncf %59 : vector<64x256xf32> to vector<64x256xbf16>
    %cst_29 = arith.constant dense<0.000000e+00> : vector<64x128xf32>
    %63 = tpu.matmul %62, %61, %cst_29 {dimension_numbers = #tpu.dot_dimension_numbers<[1], [0], [0], [1], [0, 0, 1, 1], [], []>} : vector<64x256xbf16>, vector<256x128xbf16>, vector<64x128xf32> -> vector<64x128xf32>
    %c1_30 = arith.constant 1 : index
    %c0_31 = arith.constant 0 : index
    %c0_32 = arith.constant 0 : index
    %64 = vector.load %arg4[%c1_30, %c0_31, %c0_32] : memref<6x1x128xf32, #tpu.memory_space<vmem>>, vector<1x1x128xf32>
    %65 = vector.shape_cast %64 : vector<1x1x128xf32> to vector<1x128xf32>
    %66 = vector.broadcast %65 : vector<1x128xf32> to vector<64x128xf32>
    %67 = arith.addf %63, %66 : vector<64x128xf32>
    %cst_33 = arith.constant -2.000000e+01 : f32
    %cst_34 = arith.constant 2.000000e+01 : f32
    %68 = vector.broadcast %cst_33 : f32 to vector<64x128xf32>
    %69 = arith.maximumf %68, %67 : vector<64x128xf32>
    %70 = vector.broadcast %cst_34 : f32 to vector<64x128xf32>
    %71 = arith.minimumf %70, %69 : vector<64x128xf32>
    %72 = math.exp %71 : vector<64x128xf32>
    %cst_35 = arith.constant 1.000000e+00 : f32
    %73 = vector.broadcast %cst_35 : f32 to vector<64x128xf32>
    %74 = arith.subf %72, %73 : vector<64x128xf32>
    %75 = arith.mulf %72, %74 : vector<64x128xf32>
    %76 = arith.mulf %72, %72 : vector<64x128xf32>
    %cst_36 = arith.constant 1.000000e+00 : f32
    %77 = vector.broadcast %cst_36 : f32 to vector<64x128xf32>
    %78 = arith.addf %76, %77 : vector<64x128xf32>
    %79 = tpu.reciprocal %78 : vector<64x128xf32> -> vector<64x128xf32>
    %80 = arith.mulf %75, %79 : vector<64x128xf32>
    %c1_37 = arith.constant 1 : index
    %c0_38 = arith.constant 0 : index
    %c0_39 = arith.constant 0 : index
    %81 = vector.load %arg5[%c1_37, %c0_38, %c0_39] : memref<6x128x128xbf16, #tpu.memory_space<vmem>>, vector<1x128x128xbf16>
    %82 = vector.shape_cast %81 : vector<1x128x128xbf16> to vector<128x128xbf16>
    %83 = arith.truncf %80 : vector<64x128xf32> to vector<64x128xbf16>
    %cst_40 = arith.constant dense<0.000000e+00> : vector<64x128xf32>
    %84 = tpu.matmul %83, %82, %cst_40 {dimension_numbers = #tpu.dot_dimension_numbers<[1], [0], [0], [1], [0, 0, 1, 1], [], []>} : vector<64x128xbf16>, vector<128x128xbf16>, vector<64x128xf32> -> vector<64x128xf32>
    %85 = arith.addf %52, %84 : vector<64x128xf32>
    %86 = arith.addf %53, %84 : vector<64x128xf32>
    %c4_i32 = arith.constant 4 : i32
    %87 = tpu.dynamic_rotate %85 by %c4_i32 dim 0 : vector<64x128xf32>, i32 -> vector<64x128xf32>
    %c4_i32_41 = arith.constant 4 : i32
    %88 = vector.broadcast %c4_i32_41 : i32 to vector<64x128xi32>
    %89 = arith.cmpi sge, %20, %88 : vector<64x128xi32>
    %cst_42 = arith.constant 0.000000e+00 : f32
    %90 = vector.broadcast %cst_42 : f32 to vector<64x128xf32>
    %91 = arith.select %89, %87, %90 : vector<64x128xi1>, vector<64x128xf32>
    %92 = tpu.concatenate %91, %85 in 1 : vector<64x128xf32>, vector<64x128xf32> -> vector<64x256xf32>
    %c2 = arith.constant 2 : index
    %c0_43 = arith.constant 0 : index
    %c0_44 = arith.constant 0 : index
    %93 = vector.load %arg3[%c2, %c0_43, %c0_44] : memref<6x256x128xbf16, #tpu.memory_space<vmem>>, vector<1x256x128xbf16>
    %94 = vector.shape_cast %93 : vector<1x256x128xbf16> to vector<256x128xbf16>
    %95 = arith.truncf %92 : vector<64x256xf32> to vector<64x256xbf16>
    %cst_45 = arith.constant dense<0.000000e+00> : vector<64x128xf32>
    %96 = tpu.matmul %95, %94, %cst_45 {dimension_numbers = #tpu.dot_dimension_numbers<[1], [0], [0], [1], [0, 0, 1, 1], [], []>} : vector<64x256xbf16>, vector<256x128xbf16>, vector<64x128xf32> -> vector<64x128xf32>
    %c2_46 = arith.constant 2 : index
    %c0_47 = arith.constant 0 : index
    %c0_48 = arith.constant 0 : index
    %97 = vector.load %arg4[%c2_46, %c0_47, %c0_48] : memref<6x1x128xf32, #tpu.memory_space<vmem>>, vector<1x1x128xf32>
    %98 = vector.shape_cast %97 : vector<1x1x128xf32> to vector<1x128xf32>
    %99 = vector.broadcast %98 : vector<1x128xf32> to vector<64x128xf32>
    %100 = arith.addf %96, %99 : vector<64x128xf32>
    %cst_49 = arith.constant -2.000000e+01 : f32
    %cst_50 = arith.constant 2.000000e+01 : f32
    %101 = vector.broadcast %cst_49 : f32 to vector<64x128xf32>
    %102 = arith.maximumf %101, %100 : vector<64x128xf32>
    %103 = vector.broadcast %cst_50 : f32 to vector<64x128xf32>
    %104 = arith.minimumf %103, %102 : vector<64x128xf32>
    %105 = math.exp %104 : vector<64x128xf32>
    %cst_51 = arith.constant 1.000000e+00 : f32
    %106 = vector.broadcast %cst_51 : f32 to vector<64x128xf32>
    %107 = arith.subf %105, %106 : vector<64x128xf32>
    %108 = arith.mulf %105, %107 : vector<64x128xf32>
    %109 = arith.mulf %105, %105 : vector<64x128xf32>
    %cst_52 = arith.constant 1.000000e+00 : f32
    %110 = vector.broadcast %cst_52 : f32 to vector<64x128xf32>
    %111 = arith.addf %109, %110 : vector<64x128xf32>
    %112 = tpu.reciprocal %111 : vector<64x128xf32> -> vector<64x128xf32>
    %113 = arith.mulf %108, %112 : vector<64x128xf32>
    %c2_53 = arith.constant 2 : index
    %c0_54 = arith.constant 0 : index
    %c0_55 = arith.constant 0 : index
    %114 = vector.load %arg5[%c2_53, %c0_54, %c0_55] : memref<6x128x128xbf16, #tpu.memory_space<vmem>>, vector<1x128x128xbf16>
    %115 = vector.shape_cast %114 : vector<1x128x128xbf16> to vector<128x128xbf16>
    %116 = arith.truncf %113 : vector<64x128xf32> to vector<64x128xbf16>
    %cst_56 = arith.constant dense<0.000000e+00> : vector<64x128xf32>
    %117 = tpu.matmul %116, %115, %cst_56 {dimension_numbers = #tpu.dot_dimension_numbers<[1], [0], [0], [1], [0, 0, 1, 1], [], []>} : vector<64x128xbf16>, vector<128x128xbf16>, vector<64x128xf32> -> vector<64x128xf32>
    %118 = arith.addf %85, %117 : vector<64x128xf32>
    %119 = arith.addf %86, %117 : vector<64x128xf32>
    %c1_i32_57 = arith.constant 1 : i32
    %120 = tpu.dynamic_rotate %118 by %c1_i32_57 dim 0 : vector<64x128xf32>, i32 -> vector<64x128xf32>
    %c1_i32_58 = arith.constant 1 : i32
    %121 = vector.broadcast %c1_i32_58 : i32 to vector<64x128xi32>
    %122 = arith.cmpi sge, %20, %121 : vector<64x128xi32>
    %cst_59 = arith.constant 0.000000e+00 : f32
    %123 = vector.broadcast %cst_59 : f32 to vector<64x128xf32>
    %124 = arith.select %122, %120, %123 : vector<64x128xi1>, vector<64x128xf32>
    %125 = tpu.concatenate %124, %118 in 1 : vector<64x128xf32>, vector<64x128xf32> -> vector<64x256xf32>
    %c3 = arith.constant 3 : index
    %c0_60 = arith.constant 0 : index
    %c0_61 = arith.constant 0 : index
    %126 = vector.load %arg3[%c3, %c0_60, %c0_61] : memref<6x256x128xbf16, #tpu.memory_space<vmem>>, vector<1x256x128xbf16>
    %127 = vector.shape_cast %126 : vector<1x256x128xbf16> to vector<256x128xbf16>
    %128 = arith.truncf %125 : vector<64x256xf32> to vector<64x256xbf16>
    %cst_62 = arith.constant dense<0.000000e+00> : vector<64x128xf32>
    %129 = tpu.matmul %128, %127, %cst_62 {dimension_numbers = #tpu.dot_dimension_numbers<[1], [0], [0], [1], [0, 0, 1, 1], [], []>} : vector<64x256xbf16>, vector<256x128xbf16>, vector<64x128xf32> -> vector<64x128xf32>
    %c3_63 = arith.constant 3 : index
    %c0_64 = arith.constant 0 : index
    %c0_65 = arith.constant 0 : index
    %130 = vector.load %arg4[%c3_63, %c0_64, %c0_65] : memref<6x1x128xf32, #tpu.memory_space<vmem>>, vector<1x1x128xf32>
    %131 = vector.shape_cast %130 : vector<1x1x128xf32> to vector<1x128xf32>
    %132 = vector.broadcast %131 : vector<1x128xf32> to vector<64x128xf32>
    %133 = arith.addf %129, %132 : vector<64x128xf32>
    %cst_66 = arith.constant -2.000000e+01 : f32
    %cst_67 = arith.constant 2.000000e+01 : f32
    %134 = vector.broadcast %cst_66 : f32 to vector<64x128xf32>
    %135 = arith.maximumf %134, %133 : vector<64x128xf32>
    %136 = vector.broadcast %cst_67 : f32 to vector<64x128xf32>
    %137 = arith.minimumf %136, %135 : vector<64x128xf32>
    %138 = math.exp %137 : vector<64x128xf32>
    %cst_68 = arith.constant 1.000000e+00 : f32
    %139 = vector.broadcast %cst_68 : f32 to vector<64x128xf32>
    %140 = arith.subf %138, %139 : vector<64x128xf32>
    %141 = arith.mulf %138, %140 : vector<64x128xf32>
    %142 = arith.mulf %138, %138 : vector<64x128xf32>
    %cst_69 = arith.constant 1.000000e+00 : f32
    %143 = vector.broadcast %cst_69 : f32 to vector<64x128xf32>
    %144 = arith.addf %142, %143 : vector<64x128xf32>
    %145 = tpu.reciprocal %144 : vector<64x128xf32> -> vector<64x128xf32>
    %146 = arith.mulf %141, %145 : vector<64x128xf32>
    %c3_70 = arith.constant 3 : index
    %c0_71 = arith.constant 0 : index
    %c0_72 = arith.constant 0 : index
    %147 = vector.load %arg5[%c3_70, %c0_71, %c0_72] : memref<6x128x128xbf16, #tpu.memory_space<vmem>>, vector<1x128x128xbf16>
    %148 = vector.shape_cast %147 : vector<1x128x128xbf16> to vector<128x128xbf16>
    %149 = arith.truncf %146 : vector<64x128xf32> to vector<64x128xbf16>
    %cst_73 = arith.constant dense<0.000000e+00> : vector<64x128xf32>
    %150 = tpu.matmul %149, %148, %cst_73 {dimension_numbers = #tpu.dot_dimension_numbers<[1], [0], [0], [1], [0, 0, 1, 1], [], []>} : vector<64x128xbf16>, vector<128x128xbf16>, vector<64x128xf32> -> vector<64x128xf32>
    %151 = arith.addf %118, %150 : vector<64x128xf32>
    %152 = arith.addf %119, %150 : vector<64x128xf32>
    %c2_i32_74 = arith.constant 2 : i32
    %153 = tpu.dynamic_rotate %151 by %c2_i32_74 dim 0 : vector<64x128xf32>, i32 -> vector<64x128xf32>
    %c2_i32_75 = arith.constant 2 : i32
    %154 = vector.broadcast %c2_i32_75 : i32 to vector<64x128xi32>
    %155 = arith.cmpi sge, %20, %154 : vector<64x128xi32>
    %cst_76 = arith.constant 0.000000e+00 : f32
    %156 = vector.broadcast %cst_76 : f32 to vector<64x128xf32>
    %157 = arith.select %155, %153, %156 : vector<64x128xi1>, vector<64x128xf32>
    %158 = tpu.concatenate %157, %151 in 1 : vector<64x128xf32>, vector<64x128xf32> -> vector<64x256xf32>
    %c4 = arith.constant 4 : index
    %c0_77 = arith.constant 0 : index
    %c0_78 = arith.constant 0 : index
    %159 = vector.load %arg3[%c4, %c0_77, %c0_78] : memref<6x256x128xbf16, #tpu.memory_space<vmem>>, vector<1x256x128xbf16>
    %160 = vector.shape_cast %159 : vector<1x256x128xbf16> to vector<256x128xbf16>
    %161 = arith.truncf %158 : vector<64x256xf32> to vector<64x256xbf16>
    %cst_79 = arith.constant dense<0.000000e+00> : vector<64x128xf32>
    %162 = tpu.matmul %161, %160, %cst_79 {dimension_numbers = #tpu.dot_dimension_numbers<[1], [0], [0], [1], [0, 0, 1, 1], [], []>} : vector<64x256xbf16>, vector<256x128xbf16>, vector<64x128xf32> -> vector<64x128xf32>
    %c4_80 = arith.constant 4 : index
    %c0_81 = arith.constant 0 : index
    %c0_82 = arith.constant 0 : index
    %163 = vector.load %arg4[%c4_80, %c0_81, %c0_82] : memref<6x1x128xf32, #tpu.memory_space<vmem>>, vector<1x1x128xf32>
    %164 = vector.shape_cast %163 : vector<1x1x128xf32> to vector<1x128xf32>
    %165 = vector.broadcast %164 : vector<1x128xf32> to vector<64x128xf32>
    %166 = arith.addf %162, %165 : vector<64x128xf32>
    %cst_83 = arith.constant -2.000000e+01 : f32
    %cst_84 = arith.constant 2.000000e+01 : f32
    %167 = vector.broadcast %cst_83 : f32 to vector<64x128xf32>
    %168 = arith.maximumf %167, %166 : vector<64x128xf32>
    %169 = vector.broadcast %cst_84 : f32 to vector<64x128xf32>
    %170 = arith.minimumf %169, %168 : vector<64x128xf32>
    %171 = math.exp %170 : vector<64x128xf32>
    %cst_85 = arith.constant 1.000000e+00 : f32
    %172 = vector.broadcast %cst_85 : f32 to vector<64x128xf32>
    %173 = arith.subf %171, %172 : vector<64x128xf32>
    %174 = arith.mulf %171, %173 : vector<64x128xf32>
    %175 = arith.mulf %171, %171 : vector<64x128xf32>
    %cst_86 = arith.constant 1.000000e+00 : f32
    %176 = vector.broadcast %cst_86 : f32 to vector<64x128xf32>
    %177 = arith.addf %175, %176 : vector<64x128xf32>
    %178 = tpu.reciprocal %177 : vector<64x128xf32> -> vector<64x128xf32>
    %179 = arith.mulf %174, %178 : vector<64x128xf32>
    %c4_87 = arith.constant 4 : index
    %c0_88 = arith.constant 0 : index
    %c0_89 = arith.constant 0 : index
    %180 = vector.load %arg5[%c4_87, %c0_88, %c0_89] : memref<6x128x128xbf16, #tpu.memory_space<vmem>>, vector<1x128x128xbf16>
    %181 = vector.shape_cast %180 : vector<1x128x128xbf16> to vector<128x128xbf16>
    %182 = arith.truncf %179 : vector<64x128xf32> to vector<64x128xbf16>
    %cst_90 = arith.constant dense<0.000000e+00> : vector<64x128xf32>
    %183 = tpu.matmul %182, %181, %cst_90 {dimension_numbers = #tpu.dot_dimension_numbers<[1], [0], [0], [1], [0, 0, 1, 1], [], []>} : vector<64x128xbf16>, vector<128x128xbf16>, vector<64x128xf32> -> vector<64x128xf32>
    %184 = arith.addf %151, %183 : vector<64x128xf32>
    %185 = arith.addf %152, %183 : vector<64x128xf32>
    %c4_i32_91 = arith.constant 4 : i32
    %186 = tpu.dynamic_rotate %184 by %c4_i32_91 dim 0 : vector<64x128xf32>, i32 -> vector<64x128xf32>
    %c4_i32_92 = arith.constant 4 : i32
    %187 = vector.broadcast %c4_i32_92 : i32 to vector<64x128xi32>
    %188 = arith.cmpi sge, %20, %187 : vector<64x128xi32>
    %cst_93 = arith.constant 0.000000e+00 : f32
    %189 = vector.broadcast %cst_93 : f32 to vector<64x128xf32>
    %190 = arith.select %188, %186, %189 : vector<64x128xi1>, vector<64x128xf32>
    %191 = tpu.concatenate %190, %184 in 1 : vector<64x128xf32>, vector<64x128xf32> -> vector<64x256xf32>
    %c5 = arith.constant 5 : index
    %c0_94 = arith.constant 0 : index
    %c0_95 = arith.constant 0 : index
    %192 = vector.load %arg3[%c5, %c0_94, %c0_95] : memref<6x256x128xbf16, #tpu.memory_space<vmem>>, vector<1x256x128xbf16>
    %193 = vector.shape_cast %192 : vector<1x256x128xbf16> to vector<256x128xbf16>
    %194 = arith.truncf %191 : vector<64x256xf32> to vector<64x256xbf16>
    %cst_96 = arith.constant dense<0.000000e+00> : vector<64x128xf32>
    %195 = tpu.matmul %194, %193, %cst_96 {dimension_numbers = #tpu.dot_dimension_numbers<[1], [0], [0], [1], [0, 0, 1, 1], [], []>} : vector<64x256xbf16>, vector<256x128xbf16>, vector<64x128xf32> -> vector<64x128xf32>
    %c5_97 = arith.constant 5 : index
    %c0_98 = arith.constant 0 : index
    %c0_99 = arith.constant 0 : index
    %196 = vector.load %arg4[%c5_97, %c0_98, %c0_99] : memref<6x1x128xf32, #tpu.memory_space<vmem>>, vector<1x1x128xf32>
    %197 = vector.shape_cast %196 : vector<1x1x128xf32> to vector<1x128xf32>
    %198 = vector.broadcast %197 : vector<1x128xf32> to vector<64x128xf32>
    %199 = arith.addf %195, %198 : vector<64x128xf32>
    %cst_100 = arith.constant -2.000000e+01 : f32
    %cst_101 = arith.constant 2.000000e+01 : f32
    %200 = vector.broadcast %cst_100 : f32 to vector<64x128xf32>
    %201 = arith.maximumf %200, %199 : vector<64x128xf32>
    %202 = vector.broadcast %cst_101 : f32 to vector<64x128xf32>
    %203 = arith.minimumf %202, %201 : vector<64x128xf32>
    %204 = math.exp %203 : vector<64x128xf32>
    %cst_102 = arith.constant 1.000000e+00 : f32
    %205 = vector.broadcast %cst_102 : f32 to vector<64x128xf32>
    %206 = arith.subf %204, %205 : vector<64x128xf32>
    %207 = arith.mulf %204, %206 : vector<64x128xf32>
    %208 = arith.mulf %204, %204 : vector<64x128xf32>
    %cst_103 = arith.constant 1.000000e+00 : f32
    %209 = vector.broadcast %cst_103 : f32 to vector<64x128xf32>
    %210 = arith.addf %208, %209 : vector<64x128xf32>
    %211 = tpu.reciprocal %210 : vector<64x128xf32> -> vector<64x128xf32>
    %212 = arith.mulf %207, %211 : vector<64x128xf32>
    %c5_104 = arith.constant 5 : index
    %c0_105 = arith.constant 0 : index
    %c0_106 = arith.constant 0 : index
    %213 = vector.load %arg5[%c5_104, %c0_105, %c0_106] : memref<6x128x128xbf16, #tpu.memory_space<vmem>>, vector<1x128x128xbf16>
    %214 = vector.shape_cast %213 : vector<1x128x128xbf16> to vector<128x128xbf16>
    %215 = arith.truncf %212 : vector<64x128xf32> to vector<64x128xbf16>
    %cst_107 = arith.constant dense<0.000000e+00> : vector<64x128xf32>
    %216 = tpu.matmul %215, %214, %cst_107 {dimension_numbers = #tpu.dot_dimension_numbers<[1], [0], [0], [1], [0, 0, 1, 1], [], []>} : vector<64x128xbf16>, vector<128x128xbf16>, vector<64x128xf32> -> vector<64x128xf32>
    %217 = arith.addf %185, %216 : vector<64x128xf32>
    %cst_108 = arith.constant 0.000000e+00 : f32
    %218 = vector.broadcast %cst_108 : f32 to vector<64x128xf32>
    %219 = arith.maximumf %217, %218 : vector<64x128xf32>
    %c0_109 = arith.constant 0 : index
    %c0_110 = arith.constant 0 : index
    %220 = vector.load %arg6[%c0_109, %c0_110] : memref<128x1024xbf16, #tpu.memory_space<vmem>>, vector<128x1024xbf16>
    %221 = arith.truncf %219 : vector<64x128xf32> to vector<64x128xbf16>
    %cst_111 = arith.constant dense<0.000000e+00> : vector<64x1024xf32>
    %222 = tpu.matmul %221, %220, %cst_111 {dimension_numbers = #tpu.dot_dimension_numbers<[1], [0], [0], [1], [0, 0, 1, 1], [], []>} : vector<64x128xbf16>, vector<128x1024xbf16>, vector<64x1024xf32> -> vector<64x1024xf32>
    %cst_112 = arith.constant 0.000000e+00 : f32
    %223 = vector.broadcast %cst_112 : f32 to vector<64x1024xf32>
    %224 = arith.maximumf %222, %223 : vector<64x1024xf32>
    %225 = vector.extract_strided_slice %224 {offsets = [0, 0], sizes = [64, 256], strides = [1, 1]} : vector<64x1024xf32> to vector<64x256xf32>
    %c0_113 = arith.constant 0 : index
    %c0_114 = arith.constant 0 : index
    %226 = vector.load %arg7[%c0_113, %c0_114] : memref<256x256xbf16, #tpu.memory_space<vmem>>, vector<256x256xbf16>
    %227 = arith.truncf %225 : vector<64x256xf32> to vector<64x256xbf16>
    %cst_115 = arith.constant dense<0.000000e+00> : vector<64x256xf32>
    %228 = tpu.matmul %227, %226, %cst_115 {dimension_numbers = #tpu.dot_dimension_numbers<[1], [0], [0], [1], [0, 0, 1, 1], [], []>} : vector<64x256xbf16>, vector<256x256xbf16>, vector<64x256xf32> -> vector<64x256xf32>
    %c0_116 = arith.constant 0 : index
    %c0_117 = arith.constant 0 : index
    %229 = vector.load %arg8[%c0_116, %c0_117] : memref<64x1024xf32, #tpu.memory_space<vmem>>, vector<64x256xf32>
    tpu.vector_store %arg8[%c0_116, %c0_117], %228 {strides = array<i32>} : memref<64x1024xf32, #tpu.memory_space<vmem>>, vector<64x256xf32>,
    %230 = vector.extract_strided_slice %224 {offsets = [0, 256], sizes = [64, 256], strides = [1, 1]} : vector<64x1024xf32> to vector<64x256xf32>
    %c0_118 = arith.constant 0 : index
    %c0_119 = arith.constant 0 : index
    %231 = vector.load %arg7[%c0_118, %c0_119] : memref<256x256xbf16, #tpu.memory_space<vmem>>, vector<256x256xbf16>
    %232 = arith.truncf %230 : vector<64x256xf32> to vector<64x256xbf16>
    %cst_120 = arith.constant dense<0.000000e+00> : vector<64x256xf32>
    %233 = tpu.matmul %232, %231, %cst_120 {dimension_numbers = #tpu.dot_dimension_numbers<[1], [0], [0], [1], [0, 0, 1, 1], [], []>} : vector<64x256xbf16>, vector<256x256xbf16>, vector<64x256xf32> -> vector<64x256xf32>
    %c0_121 = arith.constant 0 : index
    %c256 = arith.constant 256 : index
    %234 = vector.load %arg8[%c0_121, %c256] : memref<64x1024xf32, #tpu.memory_space<vmem>>, vector<64x256xf32>
    tpu.vector_store %arg8[%c0_121, %c256], %233 {strides = array<i32>} : memref<64x1024xf32, #tpu.memory_space<vmem>>, vector<64x256xf32>,
    %235 = vector.extract_strided_slice %224 {offsets = [0, 512], sizes = [64, 256], strides = [1, 1]} : vector<64x1024xf32> to vector<64x256xf32>
    %c0_122 = arith.constant 0 : index
    %c0_123 = arith.constant 0 : index
    %236 = vector.load %arg7[%c0_122, %c0_123] : memref<256x256xbf16, #tpu.memory_space<vmem>>, vector<256x256xbf16>
    %237 = arith.truncf %235 : vector<64x256xf32> to vector<64x256xbf16>
    %cst_124 = arith.constant dense<0.000000e+00> : vector<64x256xf32>
    %238 = tpu.matmul %237, %236, %cst_124 {dimension_numbers = #tpu.dot_dimension_numbers<[1], [0], [0], [1], [0, 0, 1, 1], [], []>} : vector<64x256xbf16>, vector<256x256xbf16>, vector<64x256xf32> -> vector<64x256xf32>
    %c0_125 = arith.constant 0 : index
    %c512 = arith.constant 512 : index
    %239 = vector.load %arg8[%c0_125, %c512] : memref<64x1024xf32, #tpu.memory_space<vmem>>, vector<64x256xf32>
    tpu.vector_store %arg8[%c0_125, %c512], %238 {strides = array<i32>} : memref<64x1024xf32, #tpu.memory_space<vmem>>, vector<64x256xf32>,
    %240 = vector.extract_strided_slice %224 {offsets = [0, 768], sizes = [64, 256], strides = [1, 1]} : vector<64x1024xf32> to vector<64x256xf32>
    %c0_126 = arith.constant 0 : index
    %c0_127 = arith.constant 0 : index
    %241 = vector.load %arg7[%c0_126, %c0_127] : memref<256x256xbf16, #tpu.memory_space<vmem>>, vector<256x256xbf16>
    %242 = arith.truncf %240 : vector<64x256xf32> to vector<64x256xbf16>
    %cst_128 = arith.constant dense<0.000000e+00> : vector<64x256xf32>
    %243 = tpu.matmul %242, %241, %cst_128 {dimension_numbers = #tpu.dot_dimension_numbers<[1], [0], [0], [1], [0, 0, 1, 1], [], []>} : vector<64x256xbf16>, vector<256x256xbf16>, vector<64x256xf32> -> vector<64x256xf32>
    %c0_129 = arith.constant 0 : index
    %c768 = arith.constant 768 : index
    %244 = vector.load %arg8[%c0_129, %c768] : memref<64x1024xf32, #tpu.memory_space<vmem>>, vector<64x256xf32>
    tpu.vector_store %arg8[%c0_129, %c768], %243 {strides = array<i32>} : memref<64x1024xf32, #tpu.memory_space<vmem>>, vector<64x256xf32>,
    return
  }
  func.func @transform_0(%arg0: i32) -> (i32, i32) {
    %c0_i32 = arith.constant 0 : i32
    %c0_i32_0 = arith.constant 0 : i32
    return %arg0, %c0_i32 : i32, i32
  }
  func.func @transform_1(%arg0: i32) -> (i32, i32) {
    %c0_i32 = arith.constant 0 : i32
    %c0_i32_0 = arith.constant 0 : i32
    %c0_i32_1 = arith.constant 0 : i32
    return %c0_i32, %c0_i32_0 : i32, i32
  }
  func.func @transform_2(%arg0: i32) -> (i32, i32, i32) {
    %c0_i32 = arith.constant 0 : i32
    %c0_i32_0 = arith.constant 0 : i32
    %c0_i32_1 = arith.constant 0 : i32
    %c0_i32_2 = arith.constant 0 : i32
    return %c0_i32, %c0_i32_0, %c0_i32_1 : i32, i32, i32
  }
  func.func @transform_3(%arg0: i32) -> (i32, i32, i32) {
    %c0_i32 = arith.constant 0 : i32
    %c0_i32_0 = arith.constant 0 : i32
    %c0_i32_1 = arith.constant 0 : i32
    %c0_i32_2 = arith.constant 0 : i32
    return %c0_i32, %c0_i32_0, %c0_i32_1 : i32, i32, i32
  }
  func.func @transform_4(%arg0: i32) -> (i32, i32, i32) {
    %c0_i32 = arith.constant 0 : i32
    %c0_i32_0 = arith.constant 0 : i32
    %c0_i32_1 = arith.constant 0 : i32
    %c0_i32_2 = arith.constant 0 : i32
    return %c0_i32, %c0_i32_0, %c0_i32_1 : i32, i32, i32
  }
  func.func @transform_5(%arg0: i32) -> (i32, i32) {
    %c0_i32 = arith.constant 0 : i32
    %c0_i32_0 = arith.constant 0 : i32
    %c0_i32_1 = arith.constant 0 : i32
    return %c0_i32, %c0_i32_0 : i32, i32
  }
  func.func @transform_6(%arg0: i32) -> (i32, i32) {
    %c0_i32 = arith.constant 0 : i32
    %c0_i32_0 = arith.constant 0 : i32
    %c0_i32_1 = arith.constant 0 : i32
    return %c0_i32, %c0_i32_0 : i32, i32
  }
  func.func @transform_7(%arg0: i32) -> (i32, i32) {
    %c0_i32 = arith.constant 0 : i32
    %c0_i32_0 = arith.constant 0 : i32
    return %arg0, %c0_i32 : i32, i32
  }
}

</mosaic_0001>

<llo_original>
// kernel: tpu_custom_call.1
$region0: #{tpu_custom_call.1}
  #allocation0 [shape = 'u32[]', space=smem, size = 0x4, offset = 0x4, fixed_abs, tag = 'smem constant byte address 0x4 - core index']
  #allocation1 [shape = 'u32[144,128]{1,0:T(1,128)}', space=vmem, size = 0x12000, scoped, tag = 'internal scratch']
  %s0 = inlined_call_operand.hbm [shape: bf16[128,1024], index: 0, kind: input, shape index: {}]
  %s1 = inlined_call_operand.hbm [shape: bf16[1024,128], index: 1, kind: input, shape index: {}]
  %s2 = inlined_call_operand.hbm [shape: bf16[6,256,128], index: 2, kind: input, shape index: {}]
  %s3 = inlined_call_operand.hbm [shape: f32[6,1,128], index: 3, kind: input, shape index: {}]
  %s4 = inlined_call_operand.hbm [shape: bf16[6,128,128], index: 4, kind: input, shape index: {}]
  %s5 = inlined_call_operand.hbm [shape: bf16[128,1024], index: 5, kind: input, shape index: {}]
  %s6 = inlined_call_operand.hbm [shape: bf16[256,256], index: 6, kind: input, shape index: {}]
  %s7 = inlined_call_operand.hbm [shape: f32[128,1024], index: 7, kind: output, shape index: {}]
  %s8 = sld [smem:[#allocation0]]
  $region89: #{tpu_custom_call.1} parent=0
    _
  %s10 = ssub.s32 1, %s8
  %s11 = scalar_select 0, %s10, %s8
  $region1: #{tpu_custom_call.1} parent=0
    #allocation2 [shape = 'u8[262144]{0}', space=vmem, size = 0x40000, scoped, tag = 'input window, operand 0']
    #allocation3 [shape = 's32[2]{0}', space=sflag, size = 0x8, scoped, tag = 'scoped memory for tpu_custom_call.1']
    #allocation4 [shape = 's32[2]{0}', space=sflag, size = 0x8, scoped, tag = 'scoped memory for tpu_custom_call.1']
    #allocation5 [shape = 'u8[262144]{0}', space=vmem, size = 0x40000, scoped, tag = 'input window, operand 1, single buffered']
    #allocation6 [shape = 's32[1]{0}', space=sflag, size = 0x4, scoped, tag = 'scoped memory for tpu_custom_call.1']
    #allocation7 [shape = 'u8[393216]{0}', space=vmem, size = 0x60000, scoped, tag = 'input window, operand 2, single buffered']
    #allocation8 [shape = 'u8[3072]{0}', space=vmem, size = 0xc00, scoped, tag = 'input window, operand 3, single buffered']
    #allocation9 [shape = 's32[1]{0}', space=sflag, size = 0x4, scoped, tag = 'scoped memory for tpu_custom_call.1']
    #allocation10 [shape = 'u8[196608]{0}', space=vmem, size = 0x30000, scoped, tag = 'input window, operand 4, single buffered']
    #allocation11 [shape = 'u8[262144]{0}', space=vmem, size = 0x40000, scoped, tag = 'input window, operand 5, single buffered']
    #allocation12 [shape = 's32[1]{0}', space=sflag, size = 0x4, scoped, tag = 'scoped memory for tpu_custom_call.1']
    #allocation13 [shape = 'u8[131072]{0}', space=vmem, size = 0x20000, scoped, tag = 'input window, operand 6, single buffered']
    #allocation14 [shape = 'u8[524288]{0}', space=vmem, size = 0x80000, scoped, tag = 'output window, operand 0']
    %12 = vsyncpa [#allocation3], 0
    %s13 = scalar_lea.sflag [#allocation3], 1
    %14 = vsyncpa %s13, 0
    %15 = vsyncpa [#allocation6], 0
    %16 = vsyncpa [#allocation9], 0
    %17 = vsyncpa [#allocation12], 0
    %18 = vsyncpa [#allocation4], 0
    %s19 = scalar_lea.sflag [#allocation4], 1
    %20 = vsyncpa %s19, 0
    loop: start=0, step=1, limit=4
    $region2: #{tpu_custom_call.1} parent=1 // loop_pre_header
      _
    $region3: #{tpu_custom_call.1} parent=1 // loop_header
      %s22 = sphi 0, %s26
      %p23 = scmp.ge.s32.totalorder %s22, 4
      %s32 = sphi 0, %s34
      %s35 = sphi 0, %s32
      %s36 = sphi 0, %s35
      %s52 = sphi 0, %s36
      %s56 = sphi 0, %s56
      %s58 = sphi 0, %s56
      %s59 = sphi 0, %s58
      %s73 = sphi 0, %s59
      %s77 = sphi 0, %s77
      %s79 = sphi 0, %s77
      %s80 = sphi 0, %s79
      %s94 = sphi 0, %s80
      %s98 = sphi 0, %s98
      %s100 = sphi 0, %s98
      %s101 = sphi 0, %s100
      %s115 = sphi 0, %s101
      %s119 = sphi 0, %s119
      %s121 = sphi 0, %s119
      %s122 = sphi 0, %s121
      %s136 = sphi 0, %s122
      %s140 = sphi 0, %s140
      %s142 = sphi 0, %s140
      %s143 = sphi 0, %s142
      %s157 = sphi 0, %s143
      %s161 = sphi 0, %s161
      %s163 = sphi 0, %s161
      %s164 = sphi 0, %s163
      %s178 = sphi 0, %s164
      %s184 = sphi 0, %s186
      %s187 = sphi 0, %s184
      %s188 = sphi 0, %s187
      %s204 = sphi 0, %s188
    $region4: #{tpu_custom_call.1} parent=1 // loop_header_branch
      %25 = sbr.rel (%p23) target = $region8
    $region5: #{tpu_custom_call.1} parent=1 // loop_body
      %s27 = ssub.s32 %s22, 1
      %s28 = ssub.s32 %s22, 2
      %s29 = sadd.s32 %s22, 1
      %s30 = ssub.s32 %s22, %s29
      %p31 = scmp.eq.s32.totalorder %s30, 0
      %s33 = sadd.s32 %s32, 1
      %s34 = scalar_select %p31, %s32, %s33
      %p37 = pneg %p31
      %p38 = scmp.eq.s32.totalorder %s22, 1
      %p39 = por %p37, %p38
      %p40 = scmp.ne.s32.totalorder %s32, %s35
      %p41 = scmp.eq.s32.totalorder %s22, 0
      %p42 = por %p40, %p41
      %p43 = scmp.ne.s32.totalorder %s32, %s35
      %p44 = scmp.eq.s32.totalorder %s27, 1
      %p45 = por %p43, %p44
      %p46 = scmp.ne.s32.totalorder %s35, %s36
      %p47 = scmp.eq.s32.totalorder %s27, 0
      %p48 = por %p46, %p47
      %p49 = scmp.ne.s32.totalorder %s35, %s36
      %p50 = scmp.eq.s32.totalorder %s28, 1
      %p51 = por %p49, %p50
      %p53 = scmp.ne.s32.totalorder %s36, %s52
      %p54 = scmp.eq.s32.totalorder %s28, 0
      %p55 = por %p53, %p54
      %s57 = sadd.s32 %s56, 1
      %p60 = scmp.eq.s32.totalorder %s22, 1
      %p61 = scmp.ne.s32.totalorder %s56, %s58
      %p62 = scmp.eq.s32.totalorder %s22, 0
      %p63 = por %p61, %p62
      %p64 = scmp.ne.s32.totalorder %s56, %s58
      %p65 = scmp.eq.s32.totalorder %s27, 1
      %p66 = por %p64, %p65
      %p67 = scmp.ne.s32.totalorder %s58, %s59
      %p68 = scmp.eq.s32.totalorder %s27, 0
      %p69 = por %p67, %p68
      %p70 = scmp.ne.s32.totalorder %s58, %s59
      %p71 = scmp.eq.s32.totalorder %s28, 1
      %p72 = por %p70, %p71
      %p74 = scmp.ne.s32.totalorder %s59, %s73
      %p75 = scmp.eq.s32.totalorder %s28, 0
      %p76 = por %p74, %p75
      %s78 = sadd.s32 %s77, 1
      %p81 = scmp.eq.s32.totalorder %s22, 1
      %p82 = scmp.ne.s32.totalorder %s77, %s79
      %p83 = scmp.eq.s32.totalorder %s22, 0
      %p84 = por %p82, %p83
      %p85 = scmp.ne.s32.totalorder %s77, %s79
      %p86 = scmp.eq.s32.totalorder %s27, 1
      %p87 = por %p85, %p86
      %p88 = scmp.ne.s32.totalorder %s79, %s80
      %p89 = scmp.eq.s32.totalorder %s27, 0
      %p90 = por %p88, %p89
      %p91 = scmp.ne.s32.totalorder %s79, %s80
      %p92 = scmp.eq.s32.totalorder %s28, 1
      %p93 = por %p91, %p92
      %p95 = scmp.ne.s32.totalorder %s80, %s94
      %p96 = scmp.eq.s32.totalorder %s28, 0
      %p97 = por %p95, %p96
      %s99 = sadd.s32 %s98, 1
      %p102 = scmp.eq.s32.totalorder %s22, 1
      %p103 = scmp.ne.s32.totalorder %s98, %s100
      %p104 = scmp.eq.s32.totalorder %s22, 0
      %p105 = por %p103, %p104
      %p106 = scmp.ne.s32.totalorder %s98, %s100
      %p107 = scmp.eq.s32.totalorder %s27, 1
      %p108 = por %p106, %p107
      %p109 = scmp.ne.s32.totalorder %s100, %s101
      %p110 = scmp.eq.s32.totalorder %s27, 0
      %p111 = por %p109, %p110
      %p112 = scmp.ne.s32.totalorder %s100, %s101
      %p113 = scmp.eq.s32.totalorder %s28, 1
      %p114 = por %p112, %p113
      %p116 = scmp.ne.s32.totalorder %s101, %s115
      %p117 = scmp.eq.s32.totalorder %s28, 0
      %p118 = por %p116, %p117
      %s120 = sadd.s32 %s119, 1
      %p123 = scmp.eq.s32.totalorder %s22, 1
      %p124 = scmp.ne.s32.totalorder %s119, %s121
      %p125 = scmp.eq.s32.totalorder %s22, 0
      %p126 = por %p124, %p125
      %p127 = scmp.ne.s32.totalorder %s119, %s121
      %p128 = scmp.eq.s32.totalorder %s27, 1
      %p129 = por %p127, %p128
      %p130 = scmp.ne.s32.totalorder %s121, %s122
      %p131 = scmp.eq.s32.totalorder %s27, 0
      %p132 = por %p130, %p131
      %p133 = scmp.ne.s32.totalorder %s121, %s122
      %p134 = scmp.eq.s32.totalorder %s28, 1
      %p135 = por %p133, %p134
      %p137 = scmp.ne.s32.totalorder %s122, %s136
      %p138 = scmp.eq.s32.totalorder %s28, 0
      %p139 = por %p137, %p138
      %s141 = sadd.s32 %s140, 1
      %p144 = scmp.eq.s32.totalorder %s22, 1
      %p145 = scmp.ne.s32.totalorder %s140, %s142
      %p146 = scmp.eq.s32.totalorder %s22, 0
      %p147 = por %p145, %p146
      %p148 = scmp.ne.s32.totalorder %s140, %s142
      %p149 = scmp.eq.s32.totalorder %s27, 1
      %p150 = por %p148, %p149
      %p151 = scmp.ne.s32.totalorder %s142, %s143
      %p152 = scmp.eq.s32.totalorder %s27, 0
      %p153 = por %p151, %p152
      %p154 = scmp.ne.s32.totalorder %s142, %s143
      %p155 = scmp.eq.s32.totalorder %s28, 1
      %p156 = por %p154, %p155
      %p158 = scmp.ne.s32.totalorder %s143, %s157
      %p159 = scmp.eq.s32.totalorder %s28, 0
      %p160 = por %p158, %p159
      %s162 = sadd.s32 %s161, 1
      %p165 = scmp.eq.s32.totalorder %s22, 1
      %p166 = scmp.ne.s32.totalorder %s161, %s163
      %p167 = scmp.eq.s32.totalorder %s22, 0
      %p168 = por %p166, %p167
      %p169 = scmp.ne.s32.totalorder %s161, %s163
      %p170 = scmp.eq.s32.totalorder %s27, 1
      %p171 = por %p169, %p170
      %p172 = scmp.ne.s32.totalorder %s163, %s164
      %p173 = scmp.eq.s32.totalorder %s27, 0
      %p174 = por %p172, %p173
      %p175 = scmp.ne.s32.totalorder %s163, %s164
      %p176 = scmp.eq.s32.totalorder %s28, 1
      %p177 = por %p175, %p176
      %p179 = scmp.ne.s32.totalorder %s164, %s178
      %p180 = scmp.eq.s32.totalorder %s28, 0
      %p181 = por %p179, %p180
      %s182 = ssub.s32 %s22, %s29
      %p183 = scmp.eq.s32.totalorder %s182, 0
      %s185 = sadd.s32 %s184, 1
      %s186 = scalar_select %p183, %s184, %s185
      %p189 = pneg %p183
      %p190 = scmp.eq.s32.totalorder %s22, 1
      %p191 = por %p189, %p190
      %p192 = scmp.ne.s32.totalorder %s184, %s187
      %p193 = scmp.eq.s32.totalorder %s22, 0
      %p194 = por %p192, %p193
      %p195 = scmp.ne.s32.totalorder %s184, %s187
      %p196 = scmp.eq.s32.totalorder %s27, 1
      %p197 = por %p195, %p196
      %p198 = scmp.ne.s32.totalorder %s187, %s188
      %p199 = scmp.eq.s32.totalorder %s27, 0
      %p200 = por %p198, %p199
      %p201 = scmp.ne.s32.totalorder %s187, %s188
      %p202 = scmp.eq.s32.totalorder %s28, 1
      %p203 = por %p201, %p202
      %p205 = scmp.ne.s32.totalorder %s188, %s204
      %p206 = scmp.eq.s32.totalorder %s28, 0
      %p207 = por %p205, %p206
      %p208 = scmp.le.s32.totalorder 1, %s22
      %p209 = scmp.lt.s32.totalorder %s22, 3
      %p210 = pnand %p208, %p209
      %p211 = pneg %p210
      // Predicated region
      $region9: #{tpu_custom_call.1} parent=5 // pred_check
        _
      $region10: #{tpu_custom_call.1} parent=5 // pred_check_branch
        %213 = sbr.rel (%p210) target = $region12
      $region11: #{tpu_custom_call.1} parent=5 // pred_region
        %s214 = ssub.s32 %s22, 1
        // Predicated region
        $region13: #{tpu_custom_call.1} parent=11 // pred_check
          %p215 = pneg %p69
        $region14: #{tpu_custom_call.1} parent=11 // pred_check_branch
          %217 = sbr.rel (%p215) target = $region16
        $region15: #{tpu_custom_call.1} parent=11 // pred_region
          %s219 = ssub.s32 8192, 8192
          %220 = vsyncadd [#allocation6], %s219
          %s221 = sshll.u32 [#allocation5], 4
          %s222 = int_to_ptr.vmem [resolvable:$true] %s221
          %227 = dma.hbm_to_vmem [thread:$0]  %s1, 8192, %s222, [#allocation6], 64, 64, 4
        $region16: #{tpu_custom_call.1} parent=11 // pred_fallthru
          _
        // Predicated region
        $region17: #{tpu_custom_call.1} parent=11 // pred_check
          %p228 = pneg %p90
        $region18: #{tpu_custom_call.1} parent=11 // pred_check_branch
          %230 = sbr.rel (%p228) target = $region20
        $region19: #{tpu_custom_call.1} parent=11 // pred_region
          %s232 = ssub.s32 12288, 12288
          %233 = vsyncadd [#allocation6], %s232
          %s234 = sshll.u32 [#allocation7], 4
          %s235 = int_to_ptr.vmem [resolvable:$true] %s234
          %240 = dma.hbm_to_vmem [thread:$0]  %s2, 12288, %s235, [#allocation6], 64, 64, 4
        $region20: #{tpu_custom_call.1} parent=11 // pred_fallthru
          _
        // Predicated region
        $region21: #{tpu_custom_call.1} parent=11 // pred_check
          %p241 = pneg %p111
        $region22: #{tpu_custom_call.1} parent=11 // pred_check_branch
          %243 = sbr.rel (%p241) target = $region24
        $region23: #{tpu_custom_call.1} parent=11 // pred_region
          %s245 = ssub.s32 96, 96
          %246 = vsyncadd [#allocation9], %s245
          %s247 = sshll.u32 [#allocation8], 4
          %s248 = int_to_ptr.vmem [resolvable:$true] %s247
          %253 = dma.hbm_to_vmem [thread:$0]  %s3, 96, %s248, [#allocation9], 16, 16, 1
        $region24: #{tpu_custom_call.1} parent=11 // pred_fallthru
          _
        // Predicated region
        $region25: #{tpu_custom_call.1} parent=11 // pred_check
          %p254 = pneg %p132
        $region26: #{tpu_custom_call.1} parent=11 // pred_check_branch
          %256 = sbr.rel (%p254) target = $region28
        $region27: #{tpu_custom_call.1} parent=11 // pred_region
          %s258 = ssub.s32 6144, 6144
          %259 = vsyncadd [#allocation9], %s258
          %s260 = sshll.u32 [#allocation10], 4
          %s261 = int_to_ptr.vmem [resolvable:$true] %s260
          %266 = dma.hbm_to_vmem [thread:$0]  %s4, 6144, %s261, [#allocation9], 64, 64, 4
        $region28: #{tpu_custom_call.1} parent=11 // pred_fallthru
          _
        // Predicated region
        $region29: #{tpu_custom_call.1} parent=11 // pred_check
          %p267 = pneg %p153
        $region30: #{tpu_custom_call.1} parent=11 // pred_check_branch
          %269 = sbr.rel (%p267) target = $region32
        $region31: #{tpu_custom_call.1} parent=11 // pred_region
          %s271 = ssub.s32 8192, 8192
          %272 = vsyncadd [#allocation12], %s271
          %s273 = sshll.u32 [#allocation11], 4
          %s274 = int_to_ptr.vmem [resolvable:$true] %s273
          %279 = dma.hbm_to_vmem [thread:$0]  %s5, 8192, %s274, [#allocation12], 512, 512, 32
        $region32: #{tpu_custom_call.1} parent=11 // pred_fallthru
          _
        // Predicated region
        $region33: #{tpu_custom_call.1} parent=11 // pred_check
          %p280 = pneg %p174
        $region34: #{tpu_custom_call.1} parent=11 // pred_check_branch
          %282 = sbr.rel (%p280) target = $region36
        $region35: #{tpu_custom_call.1} parent=11 // pred_region
          %s284 = ssub.s32 4096, 4096
          %285 = vsyncadd [#allocation12], %s284
          %s286 = sshll.u32 [#allocation13], 4
          %s287 = int_to_ptr.vmem [resolvable:$true] %s286
          %292 = dma.hbm_to_vmem [thread:$0]  %s6, 4096, %s287, [#allocation12], 128, 128, 8
        $region36: #{tpu_custom_call.1} parent=11 // pred_fallthru
          _
      $region12: #{tpu_custom_call.1} parent=5 // pred_fallthru
        _
      %p293 = scmp.lt.s32.totalorder %s22, 2
      // Predicated region
      $region37: #{tpu_custom_call.1} parent=5 // pred_check
        %p294 = pneg %p293
      $region38: #{tpu_custom_call.1} parent=5 // pred_check_branch
        %296 = sbr.rel (%p294) target = $region40
      $region39: #{tpu_custom_call.1} parent=5 // pred_region
        // Predicated region
        $region41: #{tpu_custom_call.1} parent=39 // pred_check
          %p297 = pneg %p42
        $region42: #{tpu_custom_call.1} parent=39 // pred_check_branch
          %299 = sbr.rel (%p297) target = $region44
        $region43: #{tpu_custom_call.1} parent=39 // pred_region
          %s300 = sand.u32 %s32, 1
          %s301 = scalar_lea.sflag [#allocation3], %s300
          %s302 = sand.u32 %s32, 1
          %s303 = smul.addr %s302, 256
          %s304 = scalar_lea.vmem [#allocation2], %s303
          %s305 = smul.u32 8, %s22
          %s307 = ssub.s32 4096, 4096
          %308 = vsyncadd %s301, %s307
          %s309 = smul.addr %s305, 8
          %s310 = smul.addr %s309, 64
          %s311 = scalar_lea.hbm %s0, %s310
          %s312 = sshll.u32 %s304, 4
          %s313 = int_to_ptr.vmem [resolvable:$true] %s312
          %318 = dma.hbm_to_vmem [thread:$0]  %s311, 4096, %s313, %s301, 512, 512, 32
        $region44: #{tpu_custom_call.1} parent=39 // pred_fallthru
          _
      $region40: #{tpu_custom_call.1} parent=5 // pred_fallthru
        _
      %p319 = scmp.le.s32.totalorder 1, %s22
      %p320 = scmp.lt.s32.totalorder %s22, 3
      %p321 = pnand %p319, %p320
      %p322 = pneg %p321
      // Predicated region
      $region45: #{tpu_custom_call.1} parent=5 // pred_check
        _
      $region46: #{tpu_custom_call.1} parent=5 // pred_check_branch
        %324 = sbr.rel (%p321) target = $region48
      $region47: #{tpu_custom_call.1} parent=5 // pred_region
        %s325 = ssub.s32 %s22, 1
        %s326 = sand.u32 %s35, 1
        %s327 = scalar_lea.sflag [#allocation3], %s326
        %s328 = sand.u32 %s35, 1
        %s329 = smul.addr %s328, 256
        %s330 = scalar_lea.vmem [#allocation2], %s329
        // Predicated region
        $region49: #{tpu_custom_call.1} parent=47 // pred_check
          %p331 = pneg %p48
        $region50: #{tpu_custom_call.1} parent=47 // pred_check_branch
          %333 = sbr.rel (%p331) target = $region52
        $region51: #{tpu_custom_call.1} parent=47 // pred_region
          %334 = dma.done %s327, 4096
        $region52: #{tpu_custom_call.1} parent=47 // pred_fallthru
          _
        // Predicated region
        $region53: #{tpu_custom_call.1} parent=47 // pred_check
          %p335 = pneg %p69
        $region54: #{tpu_custom_call.1} parent=47 // pred_check_branch
          %337 = sbr.rel (%p335) target = $region56
        $region55: #{tpu_custom_call.1} parent=47 // pred_region
          %338 = dma.done [#allocation6], 8192
        $region56: #{tpu_custom_call.1} parent=47 // pred_fallthru
          _
        // Predicated region
        $region57: #{tpu_custom_call.1} parent=47 // pred_check
          %p339 = pneg %p90
        $region58: #{tpu_custom_call.1} parent=47 // pred_check_branch
          %341 = sbr.rel (%p339) target = $region60
        $region59: #{tpu_custom_call.1} parent=47 // pred_region
          %342 = dma.done [#allocation6], 12288
        $region60: #{tpu_custom_call.1} parent=47 // pred_fallthru
          _
        // Predicated region
        $region61: #{tpu_custom_call.1} parent=47 // pred_check
          %p343 = pneg %p111
        $region62: #{tpu_custom_call.1} parent=47 // pred_check_branch
          %345 = sbr.rel (%p343) target = $region64
        $region63: #{tpu_custom_call.1} parent=47 // pred_region
          %346 = dma.done [#allocation9], 96
        $region64: #{tpu_custom_call.1} parent=47 // pred_fallthru
          _
        // Predicated region
        $region65: #{tpu_custom_call.1} parent=47 // pred_check
          %p347 = pneg %p132
        $region66: #{tpu_custom_call.1} parent=47 // pred_check_branch
          %349 = sbr.rel (%p347) target = $region68
        $region67: #{tpu_custom_call.1} parent=47 // pred_region
          %350 = dma.done [#allocation9], 6144
        $region68: #{tpu_custom_call.1} parent=47 // pred_fallthru
          _
        // Predicated region
        $region69: #{tpu_custom_call.1} parent=47 // pred_check
          %p351 = pneg %p153
        $region70: #{tpu_custom_call.1} parent=47 // pred_check_branch
          %353 = sbr.rel (%p351) target = $region72
        $region71: #{tpu_custom_call.1} parent=47 // pred_region
          %354 = dma.done [#allocation12], 8192
        $region72: #{tpu_custom_call.1} parent=47 // pred_fallthru
          _
        // Predicated region
        $region73: #{tpu_custom_call.1} parent=47 // pred_check
          %p355 = pneg %p174
        $region74: #{tpu_custom_call.1} parent=47 // pred_check_branch
          %357 = sbr.rel (%p355) target = $region76
        $region75: #{tpu_custom_call.1} parent=47 // pred_region
          %358 = dma.done [#allocation12], 4096
        $region76: #{tpu_custom_call.1} parent=47 // pred_fallthru
          _
        %s359 = sand.u32 %s35, 1
        %s360 = scalar_lea.sflag [#allocation3], %s359
        %s361 = sand.u32 %s35, 1
        %s362 = smul.addr %s361, 256
        %s363 = scalar_lea.vmem [#allocation2], %s362
        %p364 = pneg %p48
        %p365 = pneg %p45
        %p366 = pneg %p69
        %p367 = pneg %p66
        %p368 = pneg %p90
        %p369 = pneg %p87
        %p370 = pneg %p111
        %p371 = pneg %p108
        %p372 = pneg %p132
        %p373 = pneg %p129
        %p374 = pneg %p153
        %p375 = pneg %p150
        %p376 = pneg %p174
        %p377 = pneg %p171
        %p378 = pneg %p200
        %p379 = pneg %p197
        %s380 = sand.u32 %s187, 1
        %s381 = scalar_lea.sflag [#allocation4], %s380
        %s382 = sand.u32 %s187, 1
        %s383 = smul.addr %s382, 512
        %s384 = scalar_lea.vmem [#allocation14], %s383
        %s385 = smul.u32 8, %s27
        %s386 = smul.u32 8, %s27
        %v388 = vld [vmem:[%s330] sm:$0xff]
        %v389 = vld [vmem:[%s330 + $0x8] sm:$0xff]
        %v390 = vld [vmem:[%s330 + $0x10] sm:$0xff]
        %v391 = vld [vmem:[%s330 + $0x18] sm:$0xff]
        %v392 = vld [vmem:[%s330 + $0x20] sm:$0xff]
        %v393 = vld [vmem:[%s330 + $0x28] sm:$0xff]
        %v394 = vld [vmem:[%s330 + $0x30] sm:$0xff]
        %v395 = vld [vmem:[%s330 + $0x38] sm:$0xff]
        %v396 = vld [vmem:[%s330 + $0x40] sm:$0xff]
        %v397 = vld [vmem:[%s330 + $0x48] sm:$0xff]
        %v398 = vld [vmem:[%s330 + $0x50] sm:$0xff]
        %v399 = vld [vmem:[%s330 + $0x58] sm:$0xff]
        %v400 = vld [vmem:[%s330 + $0x60] sm:$0xff]
        %v401 = vld [vmem:[%s330 + $0x68] sm:$0xff]
        %v402 = vld [vmem:[%s330 + $0x70] sm:$0xff]
        %v403 = vld [vmem:[%s330 + $0x78] sm:$0xff]
        %v404 = vld [vmem:[%s330 + $0x80] sm:$0xff]
        %v405 = vld [vmem:[%s330 + $0x88] sm:$0xff]
        %v406 = vld [vmem:[%s330 + $0x90] sm:$0xff]
        %v407 = vld [vmem:[%s330 + $0x98] sm:$0xff]
        %v408 = vld [vmem:[%s330 + $0xa0] sm:$0xff]
        %v409 = vld [vmem:[%s330 + $0xa8] sm:$0xff]
        %v410 = vld [vmem:[%s330 + $0xb0] sm:$0xff]
        %v411 = vld [vmem:[%s330 + $0xb8] sm:$0xff]
        %v412 = vld [vmem:[%s330 + $0xc0] sm:$0xff]
        %v413 = vld [vmem:[%s330 + $0xc8] sm:$0xff]
        %v414 = vld [vmem:[%s330 + $0xd0] sm:$0xff]
        %v415 = vld [vmem:[%s330 + $0xd8] sm:$0xff]
        %v416 = vld [vmem:[%s330 + $0xe0] sm:$0xff]
        %v417 = vld [vmem:[%s330 + $0xe8] sm:$0xff]
        %v418 = vld [vmem:[%s330 + $0xf0] sm:$0xff]
        %v419 = vld [vmem:[%s330 + $0xf8] sm:$0xff]
        %v420 = vld [vmem:[#allocation5] sm:$0xf]
        %v421 = vld [vmem:[#allocation5 + $0x4] sm:$0xf]
        %v422 = vld [vmem:[#allocation5 + $0x8] sm:$0xf]
        %v423 = vld [vmem:[#allocation5 + $0xc] sm:$0xf]
        %v424 = vld [vmem:[#allocation5 + $0x10] sm:$0xf]
        %v425 = vld [vmem:[#allocation5 + $0x14] sm:$0xf]
        %v426 = vld [vmem:[#allocation5 + $0x18] sm:$0xf]
        %v427 = vld [vmem:[#allocation5 + $0x1c] sm:$0xf]
        %v428 = vld [vmem:[#allocation5 + $0x20] sm:$0xf]
        %v429 = vld [vmem:[#allocation5 + $0x24] sm:$0xf]
        %v430 = vld [vmem:[#allocation5 + $0x28] sm:$0xf]
        %v431 = vld [vmem:[#allocation5 + $0x2c] sm:$0xf]
        %v432 = vld [vmem:[#allocation5 + $0x30] sm:$0xf]
        %v433 = vld [vmem:[#allocation5 + $0x34] sm:$0xf]
        %v434 = vld [vmem:[#allocation5 + $0x38] sm:$0xf]
        %v435 = vld [vmem:[#allocation5 + $0x3c] sm:$0xf]
        %v436 = vld [vmem:[#allocation5 + $0x40] sm:$0xf]
        %v437 = vld [vmem:[#allocation5 + $0x44] sm:$0xf]
        %v438 = vld [vmem:[#allocation5 + $0x48] sm:$0xf]
        %v439 = vld [vmem:[#allocation5 + $0x4c] sm:$0xf]
        %v440 = vld [vmem:[#allocation5 + $0x50] sm:$0xf]
        %v441 = vld [vmem:[#allocation5 + $0x54] sm:$0xf]
        %v442 = vld [vmem:[#allocation5 + $0x58] sm:$0xf]
        %v443 = vld [vmem:[#allocation5 + $0x5c] sm:$0xf]
        %v444 = vld [vmem:[#allocation5 + $0x60] sm:$0xf]
        %v445 = vld [vmem:[#allocation5 + $0x64] sm:$0xf]
        %v446 = vld [vmem:[#allocation5 + $0x68] sm:$0xf]
        %v447 = vld [vmem:[#allocation5 + $0x6c] sm:$0xf]
        %v448 = vld [vmem:[#allocation5 + $0x70] sm:$0xf]
        %v449 = vld [vmem:[#allocation5 + $0x74] sm:$0xf]
        %v450 = vld [vmem:[#allocation5 + $0x78] sm:$0xf]
        %v451 = vld [vmem:[#allocation5 + $0x7c] sm:$0xf]
        %v452 = vld [vmem:[#allocation5 + $0x80] sm:$0xf]
        %v453 = vld [vmem:[#allocation5 + $0x84] sm:$0xf]
        %v454 = vld [vmem:[#allocation5 + $0x88] sm:$0xf]
        %v455 = vld [vmem:[#allocation5 + $0x8c] sm:$0xf]
        %v456 = vld [vmem:[#allocation5 + $0x90] sm:$0xf]
        %v457 = vld [vmem:[#allocation5 + $0x94] sm:$0xf]
        %v458 = vld [vmem:[#allocation5 + $0x98] sm:$0xf]
        %v459 = vld [vmem:[#allocation5 + $0x9c] sm:$0xf]
        %v460 = vld [vmem:[#allocation5 + $0xa0] sm:$0xf]
        %v461 = vld [vmem:[#allocation5 + $0xa4] sm:$0xf]
        %v462 = vld [vmem:[#allocation5 + $0xa8] sm:$0xf]
        %v463 = vld [vmem:[#allocation5 + $0xac] sm:$0xf]
        %v464 = vld [vmem:[#allocation5 + $0xb0] sm:$0xf]
        %v465 = vld [vmem:[#allocation5 + $0xb4] sm:$0xf]
        %v466 = vld [vmem:[#allocation5 + $0xb8] sm:$0xf]
        %v467 = vld [vmem:[#allocation5 + $0xbc] sm:$0xf]
        %v468 = vld [vmem:[#allocation5 + $0xc0] sm:$0xf]
        %v469 = vld [vmem:[#allocation5 + $0xc4] sm:$0xf]
        %v470 = vld [vmem:[#allocation5 + $0xc8] sm:$0xf]
        %v471 = vld [vmem:[#allocation5 + $0xcc] sm:$0xf]
        %v472 = vld [vmem:[#allocation5 + $0xd0] sm:$0xf]
        %v473 = vld [vmem:[#allocation5 + $0xd4] sm:$0xf]
        %v474 = vld [vmem:[#allocation5 + $0xd8] sm:$0xf]
        %v475 = vld [vmem:[#allocation5 + $0xdc] sm:$0xf]
        %v476 = vld [vmem:[#allocation5 + $0xe0] sm:$0xf]
        %v477 = vld [vmem:[#allocation5 + $0xe4] sm:$0xf]
        %v478 = vld [vmem:[#allocation5 + $0xe8] sm:$0xf]
        %v479 = vld [vmem:[#allocation5 + $0xec] sm:$0xf]
        %v480 = vld [vmem:[#allocation5 + $0xf0] sm:$0xf]
        %v481 = vld [vmem:[#allocation5 + $0xf4] sm:$0xf]
        %v482 = vld [vmem:[#allocation5 + $0xf8] sm:$0xf]
        %v483 = vld [vmem:[#allocation5 + $0xfc] sm:$0xf]
        %v484 = vld [vmem:[#allocation5 + $0x100] sm:$0xf]
        %v485 = vld [vmem:[#allocation5 + $0x104] sm:$0xf]
        %v486 = vld [vmem:[#allocation5 + $0x108] sm:$0xf]
        %v487 = vld [vmem:[#allocation5 + $0x10c] sm:$0xf]
        %v488 = vld [vmem:[#allocation5 + $0x110] sm:$0xf]
        %v489 = vld [vmem:[#allocation5 + $0x114] sm:$0xf]
        %v490 = vld [vmem:[#allocation5 + $0x118] sm:$0xf]
        %v491 = vld [vmem:[#allocation5 + $0x11c] sm:$0xf]
        %v492 = vld [vmem:[#allocation5 + $0x120] sm:$0xf]
        %v493 = vld [vmem:[#allocation5 + $0x124] sm:$0xf]
        %v494 = vld [vmem:[#allocation5 + $0x128] sm:$0xf]
        %v495 = vld [vmem:[#allocation5 + $0x12c] sm:$0xf]
        %v496 = vld [vmem:[#allocation5 + $0x130] sm:$0xf]
        %v497 = vld [vmem:[#allocation5 + $0x134] sm:$0xf]
        %v498 = vld [vmem:[#allocation5 + $0x138] sm:$0xf]
        %v499 = vld [vmem:[#allocation5 + $0x13c] sm:$0xf]
        %v500 = vld [vmem:[#allocation5 + $0x140] sm:$0xf]
        %v501 = vld [vmem:[#allocation5 + $0x144] sm:$0xf]
        %v502 = vld [vmem:[#allocation5 + $0x148] sm:$0xf]
        %v503 = vld [vmem:[#allocation5 + $0x14c] sm:$0xf]
        %v504 = vld [vmem:[#allocation5 + $0x150] sm:$0xf]
        %v505 = vld [vmem:[#allocation5 + $0x154] sm:$0xf]
        %v506 = vld [vmem:[#allocation5 + $0x158] sm:$0xf]
        %v507 = vld [vmem:[#allocation5 + $0x15c] sm:$0xf]
        %v508 = vld [vmem:[#allocation5 + $0x160] sm:$0xf]
        %v509 = vld [vmem:[#allocation5 + $0x164] sm:$0xf]
        %v510 = vld [vmem:[#allocation5 + $0x168] sm:$0xf]
        %v511 = vld [vmem:[#allocation5 + $0x16c] sm:$0xf]
        %v512 = vld [vmem:[#allocation5 + $0x170] sm:$0xf]
        %v513 = vld [vmem:[#allocation5 + $0x174] sm:$0xf]
        %v514 = vld [vmem:[#allocation5 + $0x178] sm:$0xf]
        %v515 = vld [vmem:[#allocation5 + $0x17c] sm:$0xf]
        %v516 = vld [vmem:[#allocation5 + $0x180] sm:$0xf]
        %v517 = vld [vmem:[#allocation5 + $0x184] sm:$0xf]
        %v518 = vld [vmem:[#allocation5 + $0x188] sm:$0xf]
        %v519 = vld [vmem:[#allocation5 + $0x18c] sm:$0xf]
        %v520 = vld [vmem:[#allocation5 + $0x190] sm:$0xf]
        %v521 = vld [vmem:[#allocation5 + $0x194] sm:$0xf]
        %v522 = vld [vmem:[#allocation5 + $0x198] sm:$0xf]
        %v523 = vld [vmem:[#allocation5 + $0x19c] sm:$0xf]
        %v524 = vld [vmem:[#allocation5 + $0x1a0] sm:$0xf]
        %v525 = vld [vmem:[#allocation5 + $0x1a4] sm:$0xf]
        %v526 = vld [vmem:[#allocation5 + $0x1a8] sm:$0xf]
        %v527 = vld [vmem:[#allocation5 + $0x1ac] sm:$0xf]
        %v528 = vld [vmem:[#allocation5 + $0x1b0] sm:$0xf]
        %v529 = vld [vmem:[#allocation5 + $0x1b4] sm:$0xf]
        %v530 = vld [vmem:[#allocation5 + $0x1b8] sm:$0xf]
        %v531 = vld [vmem:[#allocation5 + $0x1bc] sm:$0xf]
        %v532 = vld [vmem:[#allocation5 + $0x1c0] sm:$0xf]
        %v533 = vld [vmem:[#allocation5 + $0x1c4] sm:$0xf]
        %v534 = vld [vmem:[#allocation5 + $0x1c8] sm:$0xf]
        %v535 = vld [vmem:[#allocation5 + $0x1cc] sm:$0xf]
        %v536 = vld [vmem:[#allocation5 + $0x1d0] sm:$0xf]
        %v537 = vld [vmem:[#allocation5 + $0x1d4] sm:$0xf]
        %v538 = vld [vmem:[#allocation5 + $0x1d8] sm:$0xf]
        %v539 = vld [vmem:[#allocation5 + $0x1dc] sm:$0xf]
        %v540 = vld [vmem:[#allocation5 + $0x1e0] sm:$0xf]
        %v541 = vld [vmem:[#allocation5 + $0x1e4] sm:$0xf]
        %v542 = vld [vmem:[#allocation5 + $0x1e8] sm:$0xf]
        %v543 = vld [vmem:[#allocation5 + $0x1ec] sm:$0xf]
        %v544 = vld [vmem:[#allocation5 + $0x1f0] sm:$0xf]
        %v545 = vld [vmem:[#allocation5 + $0x1f4] sm:$0xf]
        %v546 = vld [vmem:[#allocation5 + $0x1f8] sm:$0xf]
        %v547 = vld [vmem:[#allocation5 + $0x1fc] sm:$0xf]
        %v580 = vunpack.c.l.b16 %v388
        %v581 = vunpack.c.h.b16 %v388
        %v582 = vunpack.c.l.b16 %v389
        %v583 = vunpack.c.h.b16 %v389
        %v584 = vunpack.c.l.b16 %v390
        %v585 = vunpack.c.h.b16 %v390
        %v586 = vunpack.c.l.b16 %v391
        %v587 = vunpack.c.h.b16 %v391
        %v588 = vunpack.c.l.b16 %v392
        %v589 = vunpack.c.h.b16 %v392
        %v590 = vunpack.c.l.b16 %v393
        %v591 = vunpack.c.h.b16 %v393
        %v592 = vunpack.c.l.b16 %v394
        %v593 = vunpack.c.h.b16 %v394
        %v594 = vunpack.c.l.b16 %v395
        %v595 = vunpack.c.h.b16 %v395
        %v596 = vunpack.c.l.b16 %v396
        %v597 = vunpack.c.h.b16 %v396
        %v598 = vunpack.c.l.b16 %v397
        %v599 = vunpack.c.h.b16 %v397
        %v600 = vunpack.c.l.b16 %v398
        %v601 = vunpack.c.h.b16 %v398
        %v602 = vunpack.c.l.b16 %v399
        %v603 = vunpack.c.h.b16 %v399
        %v604 = vunpack.c.l.b16 %v400
        %v605 = vunpack.c.h.b16 %v400
        %v606 = vunpack.c.l.b16 %v401
        %v607 = vunpack.c.h.b16 %v401
        %v608 = vunpack.c.l.b16 %v402
        %v609 = vunpack.c.h.b16 %v402
        %v610 = vunpack.c.l.b16 %v403
        %v611 = vunpack.c.h.b16 %v403
        %v612 = vunpack.c.l.b16 %v404
        %v613 = vunpack.c.h.b16 %v404
        %v614 = vunpack.c.l.b16 %v405
        %v615 = vunpack.c.h.b16 %v405
        %v616 = vunpack.c.l.b16 %v406
        %v617 = vunpack.c.h.b16 %v406
        %v618 = vunpack.c.l.b16 %v407
        %v619 = vunpack.c.h.b16 %v407
        %v620 = vunpack.c.l.b16 %v408
        %v621 = vunpack.c.h.b16 %v408
        %v622 = vunpack.c.l.b16 %v409
        %v623 = vunpack.c.h.b16 %v409
        %v624 = vunpack.c.l.b16 %v410
        %v625 = vunpack.c.h.b16 %v410
        %v626 = vunpack.c.l.b16 %v411
        %v627 = vunpack.c.h.b16 %v411
        %v628 = vunpack.c.l.b16 %v412
        %v629 = vunpack.c.h.b16 %v412
        %v630 = vunpack.c.l.b16 %v413
        %v631 = vunpack.c.h.b16 %v413
        %v632 = vunpack.c.l.b16 %v414
        %v633 = vunpack.c.h.b16 %v414
        %v634 = vunpack.c.l.b16 %v415
        %v635 = vunpack.c.h.b16 %v415
        %v636 = vunpack.c.l.b16 %v416
        %v637 = vunpack.c.h.b16 %v416
        %v638 = vunpack.c.l.b16 %v417
        %v639 = vunpack.c.h.b16 %v417
        %v640 = vunpack.c.l.b16 %v418
        %v641 = vunpack.c.h.b16 %v418
        %v642 = vunpack.c.l.b16 %v419
        %v643 = vunpack.c.h.b16 %v419
        %v644 = vpack.c.b16 %v588, %v580
        %v645 = vpack.c.b16 %v589, %v581
        %v646 = vpack.c.b16 %v590, %v582
        %v647 = vpack.c.b16 %v591, %v583
        %v648 = vpack.c.b16 %v592, %v584
        %v649 = vpack.c.b16 %v593, %v585
        %v650 = vpack.c.b16 %v594, %v586
        %v651 = vpack.c.b16 %v595, %v587
        %v652 = vpack.c.b16 %v604, %v596
        %v653 = vpack.c.b16 %v605, %v597
        %v654 = vpack.c.b16 %v606, %v598
        %v655 = vpack.c.b16 %v607, %v599
        %v656 = vpack.c.b16 %v608, %v600
        %v657 = vpack.c.b16 %v609, %v601
        %v658 = vpack.c.b16 %v610, %v602
        %v659 = vpack.c.b16 %v611, %v603
        %v660 = vpack.c.b16 %v620, %v612
        %v661 = vpack.c.b16 %v621, %v613
        %v662 = vpack.c.b16 %v622, %v614
        %v663 = vpack.c.b16 %v623, %v615
        %v664 = vpack.c.b16 %v624, %v616
        %v665 = vpack.c.b16 %v625, %v617
        %v666 = vpack.c.b16 %v626, %v618
        %v667 = vpack.c.b16 %v627, %v619
        %v668 = vpack.c.b16 %v636, %v628
        %v669 = vpack.c.b16 %v637, %v629
        %v670 = vpack.c.b16 %v638, %v630
        %v671 = vpack.c.b16 %v639, %v631
        %v672 = vpack.c.b16 %v640, %v632
        %v673 = vpack.c.b16 %v641, %v633
        %v674 = vpack.c.b16 %v642, %v634
        %v675 = vpack.c.b16 %v643, %v635
        %v836 = vunpack.c.l.b16 %v420
        %v837 = vunpack.c.l.b16 %v421
        %v838 = vunpack.c.l.b16 %v422
        %v839 = vunpack.c.l.b16 %v423
        %v840 = vunpack.c.l.b16 %v424
        %v841 = vunpack.c.l.b16 %v425
        %v842 = vunpack.c.l.b16 %v426
        %v843 = vunpack.c.l.b16 %v427
        %v844 = vunpack.c.l.b16 %v428
        %v845 = vunpack.c.l.b16 %v429
        %v846 = vunpack.c.l.b16 %v430
        %v847 = vunpack.c.l.b16 %v431
        %v848 = vunpack.c.l.b16 %v432
        %v849 = vunpack.c.l.b16 %v433
        %v850 = vunpack.c.l.b16 %v434
        %v851 = vunpack.c.l.b16 %v435
        %v852 = vunpack.c.l.b16 %v436
        %v853 = vunpack.c.l.b16 %v437
        %v854 = vunpack.c.l.b16 %v438
        %v855 = vunpack.c.l.b16 %v439
        %v856 = vunpack.c.l.b16 %v440
        %v857 = vunpack.c.l.b16 %v441
        %v858 = vunpack.c.l.b16 %v442
        %v859 = vunpack.c.l.b16 %v443
        %v860 = vunpack.c.l.b16 %v444
        %v861 = vunpack.c.l.b16 %v445
        %v862 = vunpack.c.l.b16 %v446
        %v863 = vunpack.c.l.b16 %v447
        %v864 = vunpack.c.l.b16 %v448
        %v865 = vunpack.c.l.b16 %v449
        %v866 = vunpack.c.l.b16 %v450
        %v867 = vunpack.c.l.b16 %v451
        %v868 = vunpack.c.l.b16 %v452
        %v869 = vunpack.c.l.b16 %v453
        %v870 = vunpack.c.l.b16 %v454
        %v871 = vunpack.c.l.b16 %v455
        %v872 = vunpack.c.l.b16 %v456
        %v873 = vunpack.c.l.b16 %v457
        %v874 = vunpack.c.l.b16 %v458
        %v875 = vunpack.c.l.b16 %v459
        %v876 = vunpack.c.l.b16 %v460
        %v877 = vunpack.c.l.b16 %v461
        %v878 = vunpack.c.l.b16 %v462
        %v879 = vunpack.c.l.b16 %v463
        %v880 = vunpack.c.l.b16 %v464
        %v881 = vunpack.c.l.b16 %v465
        %v882 = vunpack.c.l.b16 %v466
        %v883 = vunpack.c.l.b16 %v467
        %v884 = vunpack.c.l.b16 %v468
        %v885 = vunpack.c.l.b16 %v469
        %v886 = vunpack.c.l.b16 %v470
        %v887 = vunpack.c.l.b16 %v471
        %v888 = vunpack.c.l.b16 %v472
        %v889 = vunpack.c.l.b16 %v473
        %v890 = vunpack.c.l.b16 %v474
        %v891 = vunpack.c.l.b16 %v475
        %v892 = vunpack.c.l.b16 %v476
        %v893 = vunpack.c.l.b16 %v477
        %v894 = vunpack.c.l.b16 %v478
        %v895 = vunpack.c.l.b16 %v479
        %v896 = vunpack.c.l.b16 %v480
        %v897 = vunpack.c.l.b16 %v481
        %v898 = vunpack.c.l.b16 %v482
        %v899 = vunpack.c.l.b16 %v483
        %v900 = vunpack.c.l.b16 %v484
        %v901 = vunpack.c.l.b16 %v485
        %v902 = vunpack.c.l.b16 %v486
        %v903 = vunpack.c.l.b16 %v487
        %v904 = vunpack.c.l.b16 %v488
        %v905 = vunpack.c.l.b16 %v489
        %v906 = vunpack.c.l.b16 %v490
        %v907 = vunpack.c.l.b16 %v491
        %v908 = vunpack.c.l.b16 %v492
        %v909 = vunpack.c.l.b16 %v493
        %v910 = vunpack.c.l.b16 %v494
        %v911 = vunpack.c.l.b16 %v495
        %v912 = vunpack.c.l.b16 %v496
        %v913 = vunpack.c.l.b16 %v497
        %v914 = vunpack.c.l.b16 %v498
        %v915 = vunpack.c.l.b16 %v499
        %v916 = vunpack.c.l.b16 %v500
        %v917 = vunpack.c.l.b16 %v501
        %v918 = vunpack.c.l.b16 %v502
        %v919 = vunpack.c.l.b16 %v503
        %v920 = vunpack.c.l.b16 %v504
        %v921 = vunpack.c.l.b16 %v505
        %v922 = vunpack.c.l.b16 %v506
        %v923 = vunpack.c.l.b16 %v507
        %v924 = vunpack.c.l.b16 %v508
        %v925 = vunpack.c.l.b16 %v509
        %v926 = vunpack.c.l.b16 %v510
        %v927 = vunpack.c.l.b16 %v511
        %v928 = vunpack.c.l.b16 %v512
        %v929 = vunpack.c.l.b16 %v513
        %v930 = vunpack.c.l.b16 %v514
        %v931 = vunpack.c.l.b16 %v515
        %v932 = vunpack.c.l.b16 %v516
        %v933 = vunpack.c.l.b16 %v517
        %v934 = vunpack.c.l.b16 %v518
        %v935 = vunpack.c.l.b16 %v519
        %v936 = vunpack.c.l.b16 %v520
        %v937 = vunpack.c.l.b16 %v521
        %v938 = vunpack.c.l.b16 %v522
        %v939 = vunpack.c.l.b16 %v523
        %v940 = vunpack.c.l.b16 %v524
        %v941 = vunpack.c.l.b16 %v525
        %v942 = vunpack.c.l.b16 %v526
        %v943 = vunpack.c.l.b16 %v527
        %v944 = vunpack.c.l.b16 %v528
        %v945 = vunpack.c.l.b16 %v529
        %v946 = vunpack.c.l.b16 %v530
        %v947 = vunpack.c.l.b16 %v531
        %v948 = vunpack.c.l.b16 %v532
        %v949 = vunpack.c.l.b16 %v533
        %v950 = vunpack.c.l.b16 %v534
        %v951 = vunpack.c.l.b16 %v535
        %v952 = vunpack.c.l.b16 %v536
        %v953 = vunpack.c.l.b16 %v537
        %v954 = vunpack.c.l.b16 %v538
        %v955 = vunpack.c.l.b16 %v539
        %v956 = vunpack.c.l.b16 %v540
        %v957 = vunpack.c.l.b16 %v541
        %v958 = vunpack.c.l.b16 %v542
        %v959 = vunpack.c.l.b16 %v543
        %v960 = vunpack.c.l.b16 %v544
        %v961 = vunpack.c.l.b16 %v545
        %v962 = vunpack.c.l.b16 %v546
        %v963 = vunpack.c.l.b16 %v547
        %v964 = vpack.c.b16 %v837, %v836
        %v965 = vpack.c.b16 %v839, %v838
        %v966 = vpack.c.b16 %v841, %v840
        %v967 = vpack.c.b16 %v843, %v842
        %v968 = vpack.c.b16 %v845, %v844
        %v969 = vpack.c.b16 %v847, %v846
        %v970 = vpack.c.b16 %v849, %v848
        %v971 = vpack.c.b16 %v851, %v850
        %v972 = vpack.c.b16 %v853, %v852
        %v973 = vpack.c.b16 %v855, %v854
        %v974 = vpack.c.b16 %v857, %v856
        %v975 = vpack.c.b16 %v859, %v858
        %v976 = vpack.c.b16 %v861, %v860
        %v977 = vpack.c.b16 %v863, %v862
        %v978 = vpack.c.b16 %v865, %v864
        %v979 = vpack.c.b16 %v867, %v866
        %v980 = vpack.c.b16 %v869, %v868
        %v981 = vpack.c.b16 %v871, %v870
        %v982 = vpack.c.b16 %v873, %v872
        %v983 = vpack.c.b16 %v875, %v874
        %v984 = vpack.c.b16 %v877, %v876
        %v985 = vpack.c.b16 %v879, %v878
        %v986 = vpack.c.b16 %v881, %v880
        %v987 = vpack.c.b16 %v883, %v882
        %v988 = vpack.c.b16 %v885, %v884
        %v989 = vpack.c.b16 %v887, %v886
        %v990 = vpack.c.b16 %v889, %v888
        %v991 = vpack.c.b16 %v891, %v890
        %v992 = vpack.c.b16 %v893, %v892
        %v993 = vpack.c.b16 %v895, %v894
        %v994 = vpack.c.b16 %v897, %v896
        %v995 = vpack.c.b16 %v899, %v898
        %v996 = vpack.c.b16 %v901, %v900
        %v997 = vpack.c.b16 %v903, %v902
        %v998 = vpack.c.b16 %v905, %v904
        %v999 = vpack.c.b16 %v907, %v906
        %v1000 = vpack.c.b16 %v909, %v908
        %v1001 = vpack.c.b16 %v911, %v910
        %v1002 = vpack.c.b16 %v913, %v912
        %v1003 = vpack.c.b16 %v915, %v914
        %v1004 = vpack.c.b16 %v917, %v916
        %v1005 = vpack.c.b16 %v919, %v918
        %v1006 = vpack.c.b16 %v921, %v920
        %v1007 = vpack.c.b16 %v923, %v922
        %v1008 = vpack.c.b16 %v925, %v924
        %v1009 = vpack.c.b16 %v927, %v926
        %v1010 = vpack.c.b16 %v929, %v928
        %v1011 = vpack.c.b16 %v931, %v930
        %v1012 = vpack.c.b16 %v933, %v932
        %v1013 = vpack.c.b16 %v935, %v934
        %v1014 = vpack.c.b16 %v937, %v936
        %v1015 = vpack.c.b16 %v939, %v938
        %v1016 = vpack.c.b16 %v941, %v940
        %v1017 = vpack.c.b16 %v943, %v942
        %v1018 = vpack.c.b16 %v945, %v944
        %v1019 = vpack.c.b16 %v947, %v946
        %v1020 = vpack.c.b16 %v949, %v948
        %v1021 = vpack.c.b16 %v951, %v950
        %v1022 = vpack.c.b16 %v953, %v952
        %v1023 = vpack.c.b16 %v955, %v954
        %v1024 = vpack.c.b16 %v957, %v956
        %v1025 = vpack.c.b16 %v959, %v958
        %v1026 = vpack.c.b16 %v961, %v960
        %v1027 = vpack.c.b16 %v963, %v962
        %1092 = vmatprep.subr.bf16.mxu0 0
        %1093 = vmatpush1.bf16.msra.mxu0 %v971
        %1094 = vmatprep.subr.bf16.mxu0 0
        %1095 = vmatpush1.bf16.msra.mxu0 %v970
        %1096 = vmatprep.subr.bf16.mxu0 0
        %1097 = vmatpush1.bf16.msra.mxu0 %v969
        %1098 = vmatprep.subr.bf16.mxu0 0
        %1099 = vmatpush1.bf16.msra.mxu0 %v968
        %1100 = vmatprep.subr.bf16.mxu0 0
        %1101 = vmatpush1.bf16.msra.mxu0 %v967
        %1102 = vmatprep.subr.bf16.mxu0 0
        %1103 = vmatpush1.bf16.msra.mxu0 %v966
        %1104 = vmatprep.subr.bf16.mxu0 0
        %1105 = vmatpush1.bf16.msra.mxu0 %v965
        %1106 = vmatprep.subr.bf16.mxu0 0
        %1107 = vmatpush1.bf16.msra.mxu0 %v964
        %1108 = vmatprep.subr.bf16.mxu0 0
        %1109 = vmatpush2.bf16.msra.mxu0 %v979
        %1110 = vmatprep.subr.bf16.mxu0 0
        %1111 = vmatpush2.bf16.msra.mxu0 %v978
        %1112 = vmatprep.subr.bf16.mxu0 0
        %1113 = vmatpush2.bf16.msra.mxu0 %v977
        %1114 = vmatprep.subr.bf16.mxu0 0
        %1115 = vmatpush2.bf16.msra.mxu0 %v976
        %1116 = vmatprep.subr.bf16.mxu0 0
        %1117 = vmatpush2.bf16.msra.mxu0 %v975
        %1118 = vmatprep.subr.bf16.mxu0 0
        %1119 = vmatpush2.bf16.msra.mxu0 %v974
        %1120 = vmatprep.subr.bf16.mxu0 0
        %1121 = vmatpush2.bf16.msra.mxu0 %v973
        %1122 = vmatprep.subr.bf16.mxu0 0
        %1123 = vmatpush2.bf16.msra.mxu0 %v972
        %1124 = vmatprep.mubr.bf16.mxu0 %v645
        %1125 = vmatmul.mubr.bf16.gmra.mxu0 %v644
        %v1126 = vpop.f32.mrf.mxu0
        %v1127 = vadd.f32 0.0, %v1126
        %v1128 = vpop.f32.mrf.mxu0
        %v1129 = vpop.f32.mrf.mxu0
        %v1130 = vadd.f32 0.0, %v1129
        %v1131 = vpop.f32.mrf.mxu0
        %1132 = vmatprep.mubr.bf16.mxu0 %v653
        %1133 = vmatmul.mubr.bf16.gmra.mxu0 %v652
        %v1134 = vpop.f32.mrf.mxu0
        %v1135 = vadd.f32 0.0, %v1134
        %v1136 = vpop.f32.mrf.mxu0
        %v1137 = vpop.f32.mrf.mxu0
        %v1138 = vadd.f32 0.0, %v1137
        %v1139 = vpop.f32.mrf.mxu0
        %1140 = vmatprep.mubr.bf16.mxu0 %v661
        %1141 = vmatmul.mubr.bf16.gmra.mxu0 %v660
        %v1142 = vpop.f32.mrf.mxu0
        %v1143 = vadd.f32 0.0, %v1142
        %v1144 = vpop.f32.mrf.mxu0
        %v1145 = vpop.f32.mrf.mxu0
        %v1146 = vadd.f32 0.0, %v1145
        %v1147 = vpop.f32.mrf.mxu0
        %1148 = vmatprep.mubr.bf16.mxu0 %v669
        %1149 = vmatmul.mubr.bf16.gmra.mxu0 %v668
        %v1150 = vpop.f32.mrf.mxu0
        %v1151 = vadd.f32 0.0, %v1150
        %v1152 = vpop.f32.mrf.mxu0
        %v1153 = vpop.f32.mrf.mxu0
        %v1154 = vadd.f32 0.0, %v1153
        %v1155 = vpop.f32.mrf.mxu0
        %1156 = vdwg.mxu0
        %1157 = vmatprep.subr.bf16.mxu0 0
        %1158 = vmatpush1.bf16.msra.mxu0 %v987
        %1159 = vmatprep.subr.bf16.mxu0 0
        %1160 = vmatpush1.bf16.msra.mxu0 %v986
        %1161 = vmatprep.subr.bf16.mxu0 0
        %1162 = vmatpush1.bf16.msra.mxu0 %v985
        %1163 = vmatprep.subr.bf16.mxu0 0
        %1164 = vmatpush1.bf16.msra.mxu0 %v984
        %1165 = vmatprep.subr.bf16.mxu0 0
        %1166 = vmatpush1.bf16.msra.mxu0 %v983
        %1167 = vmatprep.subr.bf16.mxu0 0
        %1168 = vmatpush1.bf16.msra.mxu0 %v982
        %1169 = vmatprep.subr.bf16.mxu0 0
        %1170 = vmatpush1.bf16.msra.mxu0 %v981
        %1171 = vmatprep.subr.bf16.mxu0 0
        %1172 = vmatpush1.bf16.msra.mxu0 %v980
        %1173 = vmatprep.subr.bf16.mxu0 0
        %1174 = vmatpush2.bf16.msra.mxu0 %v995
        %1175 = vmatprep.subr.bf16.mxu0 0
        %1176 = vmatpush2.bf16.msra.mxu0 %v994
        %1177 = vmatprep.subr.bf16.mxu0 0
        %1178 = vmatpush2.bf16.msra.mxu0 %v993
        %1179 = vmatprep.subr.bf16.mxu0 0
        %1180 = vmatpush2.bf16.msra.mxu0 %v992
        %1181 = vmatprep.subr.bf16.mxu0 0
        %1182 = vmatpush2.bf16.msra.mxu0 %v991
        %1183 = vmatprep.subr.bf16.mxu0 0
        %1184 = vmatpush2.bf16.msra.mxu0 %v990
        %1185 = vmatprep.subr.bf16.mxu0 0
        %1186 = vmatpush2.bf16.msra.mxu0 %v989
        %1187 = vmatprep.subr.bf16.mxu0 0
        %1188 = vmatpush2.bf16.msra.mxu0 %v988
        %1189 = vmatprep.mubr.bf16.mxu0 %v647
        %1190 = vmatmul.mubr.bf16.gmra.mxu0 %v646
        %v1191 = vpop.f32.mrf.mxu0
        %v1192 = vadd.f32 %v1127, %v1191
        %v1193 = vpop.f32.mrf.mxu0
        %v1194 = vpop.f32.mrf.mxu0
        %v1195 = vadd.f32 %v1130, %v1194
        %v1196 = vpop.f32.mrf.mxu0
        %1197 = vmatprep.mubr.bf16.mxu0 %v655
        %1198 = vmatmul.mubr.bf16.gmra.mxu0 %v654
        %v1199 = vpop.f32.mrf.mxu0
        %v1200 = vadd.f32 %v1135, %v1199
        %v1201 = vpop.f32.mrf.mxu0
        %v1202 = vpop.f32.mrf.mxu0
        %v1203 = vadd.f32 %v1138, %v1202
        %v1204 = vpop.f32.mrf.mxu0
        %1205 = vmatprep.mubr.bf16.mxu0 %v663
        %1206 = vmatmul.mubr.bf16.gmra.mxu0 %v662
        %v1207 = vpop.f32.mrf.mxu0
        %v1208 = vadd.f32 %v1143, %v1207
        %v1209 = vpop.f32.mrf.mxu0
        %v1210 = vpop.f32.mrf.mxu0
        %v1211 = vadd.f32 %v1146, %v1210
        %v1212 = vpop.f32.mrf.mxu0
        %1213 = vmatprep.mubr.bf16.mxu0 %v671
        %1214 = vmatmul.mubr.bf16.gmra.mxu0 %v670
        %v1215 = vpop.f32.mrf.mxu0
        %v1216 = vadd.f32 %v1151, %v1215
        %v1217 = vpop.f32.mrf.mxu0
        %v1218 = vpop.f32.mrf.mxu0
        %v1219 = vadd.f32 %v1154, %v1218
        %v1220 = vpop.f32.mrf.mxu0
        %1221 = vdwg.mxu0
        %1222 = vmatprep.subr.bf16.mxu0 0
        %1223 = vmatpush1.bf16.msra.mxu0 %v1003
        %1224 = vmatprep.subr.bf16.mxu0 0
        %1225 = vmatpush1.bf16.msra.mxu0 %v1002
        %1226 = vmatprep.subr.bf16.mxu0 0
        %1227 = vmatpush1.bf16.msra.mxu0 %v1001
        %1228 = vmatprep.subr.bf16.mxu0 0
        %1229 = vmatpush1.bf16.msra.mxu0 %v1000
        %1230 = vmatprep.subr.bf16.mxu0 0
        %1231 = vmatpush1.bf16.msra.mxu0 %v999
        %1232 = vmatprep.subr.bf16.mxu0 0
        %1233 = vmatpush1.bf16.msra.mxu0 %v998
        %1234 = vmatprep.subr.bf16.mxu0 0
        %1235 = vmatpush1.bf16.msra.mxu0 %v997
        %1236 = vmatprep.subr.bf16.mxu0 0
        %1237 = vmatpush1.bf16.msra.mxu0 %v996
        %1238 = vmatprep.subr.bf16.mxu0 0
        %1239 = vmatpush2.bf16.msra.mxu0 %v1011
        %1240 = vmatprep.subr.bf16.mxu0 0
        %1241 = vmatpush2.bf16.msra.mxu0 %v1010
        %1242 = vmatprep.subr.bf16.mxu0 0
        %1243 = vmatpush2.bf16.msra.mxu0 %v1009
        %1244 = vmatprep.subr.bf16.mxu0 0
        %1245 = vmatpush2.bf16.msra.mxu0 %v1008
        %1246 = vmatprep.subr.bf16.mxu0 0
        %1247 = vmatpush2.bf16.msra.mxu0 %v1007
        %1248 = vmatprep.subr.bf16.mxu0 0
        %1249 = vmatpush2.bf16.msra.mxu0 %v1006
        %1250 = vmatprep.subr.bf16.mxu0 0
        %1251 = vmatpush2.bf16.msra.mxu0 %v1005
        %1252 = vmatprep.subr.bf16.mxu0 0
        %1253 = vmatpush2.bf16.msra.mxu0 %v1004
        %1254 = vmatprep.mubr.bf16.mxu0 %v649
        %1255 = vmatmul.mubr.bf16.gmra.mxu0 %v648
        %v1256 = vpop.f32.mrf.mxu0
        %v1257 = vadd.f32 %v1192, %v1256
        %v1258 = vpop.f32.mrf.mxu0
        %v1259 = vpop.f32.mrf.mxu0
        %v1260 = vadd.f32 %v1195, %v1259
        %v1261 = vpop.f32.mrf.mxu0
        %1262 = vmatprep.mubr.bf16.mxu0 %v657
        %1263 = vmatmul.mubr.bf16.gmra.mxu0 %v656
        %v1264 = vpop.f32.mrf.mxu0
        %v1265 = vadd.f32 %v1200, %v1264
        %v1266 = vpop.f32.mrf.mxu0
        %v1267 = vpop.f32.mrf.mxu0
        %v1268 = vadd.f32 %v1203, %v1267
        %v1269 = vpop.f32.mrf.mxu0
        %1270 = vmatprep.mubr.bf16.mxu0 %v665
        %1271 = vmatmul.mubr.bf16.gmra.mxu0 %v664
        %v1272 = vpop.f32.mrf.mxu0
        %v1273 = vadd.f32 %v1208, %v1272
        %v1274 = vpop.f32.mrf.mxu0
        %v1275 = vpop.f32.mrf.mxu0
        %v1276 = vadd.f32 %v1211, %v1275
        %v1277 = vpop.f32.mrf.mxu0
        %1278 = vmatprep.mubr.bf16.mxu0 %v673
        %1279 = vmatmul.mubr.bf16.gmra.mxu0 %v672
        %v1280 = vpop.f32.mrf.mxu0
        %v1281 = vadd.f32 %v1216, %v1280
        %v1282 = vpop.f32.mrf.mxu0
        %v1283 = vpop.f32.mrf.mxu0
        %v1284 = vadd.f32 %v1219, %v1283
        %v1285 = vpop.f32.mrf.mxu0
        %1286 = vdwg.mxu0
        %1287 = vmatprep.subr.bf16.mxu0 0
        %1288 = vmatpush1.bf16.msra.mxu0 %v1019
        %1289 = vmatprep.subr.bf16.mxu0 0
        %1290 = vmatpush1.bf16.msra.mxu0 %v1018
        %1291 = vmatprep.subr.bf16.mxu0 0
        %1292 = vmatpush1.bf16.msra.mxu0 %v1017
        %1293 = vmatprep.subr.bf16.mxu0 0
        %1294 = vmatpush1.bf16.msra.mxu0 %v1016
        %1295 = vmatprep.subr.bf16.mxu0 0
        %1296 = vmatpush1.bf16.msra.mxu0 %v1015
        %1297 = vmatprep.subr.bf16.mxu0 0
        %1298 = vmatpush1.bf16.msra.mxu0 %v1014
        %1299 = vmatprep.subr.bf16.mxu0 0
        %1300 = vmatpush1.bf16.msra.mxu0 %v1013
        %1301 = vmatprep.subr.bf16.mxu0 0
        %1302 = vmatpush1.bf16.msra.mxu0 %v1012
        %1303 = vmatprep.subr.bf16.mxu0 0
        %1304 = vmatpush2.bf16.msra.mxu0 %v1027
        %1305 = vmatprep.subr.bf16.mxu0 0
        %1306 = vmatpush2.bf16.msra.mxu0 %v1026
        %1307 = vmatprep.subr.bf16.mxu0 0
        %1308 = vmatpush2.bf16.msra.mxu0 %v1025
        %1309 = vmatprep.subr.bf16.mxu0 0
        %1310 = vmatpush2.bf16.msra.mxu0 %v1024
        %1311 = vmatprep.subr.bf16.mxu0 0
        %1312 = vmatpush2.bf16.msra.mxu0 %v1023
        %1313 = vmatprep.subr.bf16.mxu0 0
        %1314 = vmatpush2.bf16.msra.mxu0 %v1022
        %1315 = vmatprep.subr.bf16.mxu0 0
        %1316 = vmatpush2.bf16.msra.mxu0 %v1021
        %1317 = vmatprep.subr.bf16.mxu0 0
        %1318 = vmatpush2.bf16.msra.mxu0 %v1020
        %1319 = vmatprep.mubr.bf16.mxu0 %v651
        %1320 = vmatmul.mubr.bf16.gmra.mxu0 %v650
        %v1321 = vpop.f32.mrf.mxu0
        %v1322 = vadd.f32 %v1257, %v1321
        %v1323 = vpop.f32.mrf.mxu0
        %v1324 = vpop.f32.mrf.mxu0
        %v1325 = vadd.f32 %v1260, %v1324
        %v1326 = vpop.f32.mrf.mxu0
        %1327 = vmatprep.mubr.bf16.mxu0 %v659
        %1328 = vmatmul.mubr.bf16.gmra.mxu0 %v658
        %v1329 = vpop.f32.mrf.mxu0
        %v1330 = vadd.f32 %v1265, %v1329
        %v1331 = vpop.f32.mrf.mxu0
        %v1332 = vpop.f32.mrf.mxu0
        %v1333 = vadd.f32 %v1268, %v1332
        %v1334 = vpop.f32.mrf.mxu0
        %1335 = vmatprep.mubr.bf16.mxu0 %v667
        %1336 = vmatmul.mubr.bf16.gmra.mxu0 %v666
        %v1337 = vpop.f32.mrf.mxu0
        %v1338 = vadd.f32 %v1273, %v1337
        %v1339 = vpop.f32.mrf.mxu0
        %v1340 = vpop.f32.mrf.mxu0
        %v1341 = vadd.f32 %v1276, %v1340
        %v1342 = vpop.f32.mrf.mxu0
        %1343 = vmatprep.mubr.bf16.mxu0 %v675
        %1344 = vmatmul.mubr.bf16.gmra.mxu0 %v674
        %v1345 = vpop.f32.mrf.mxu0
        %v1346 = vadd.f32 %v1281, %v1345
        %v1347 = vpop.f32.mrf.mxu0
        %v1348 = vpop.f32.mrf.mxu0
        %v1349 = vadd.f32 %v1284, %v1348
        %v1350 = vpop.f32.mrf.mxu0
        %1351 = vdwg.mxu0
        %v1352 = vlaneseq
        %v1353 = vshrl.u32 %v1352, 7
        %v1354 = vadd.s32 %v1353, 8
        %v1355 = vadd.s32 %v1353, 16
        %v1356 = vadd.s32 %v1353, 24
        %v1357 = vadd.s32 %v1353, 32
        %v1358 = vadd.s32 %v1353, 40
        %v1359 = vadd.s32 %v1353, 48
        %v1360 = vadd.s32 %v1353, 56
        %vm1361 = vcmp.lt.s32.totalorder %v1353, 0
        %v1362 = vsub.s32 0, %v1353
        %v1363 = vsel %vm1361, %v1362, %v1353
        %v1364 = vshrl.u32 %v1363, 6
        %v1365 = vand.u32 %v1363, 63
        %v1366 = vsub.s32 0, %v1365
        %v1367 = vsel %vm1361, %v1366, %v1365
        %vm1368 = vcmp.lt.s32.totalorder %v1354, 0
        %v1369 = vsub.s32 0, %v1354
        %v1370 = vsel %vm1368, %v1369, %v1354
        %v1371 = vshrl.u32 %v1370, 6
        %v1372 = vand.u32 %v1370, 63
        %v1373 = vsub.s32 0, %v1372
        %v1374 = vsel %vm1368, %v1373, %v1372
        %vm1375 = vcmp.lt.s32.totalorder %v1355, 0
        %v1376 = vsub.s32 0, %v1355
        %v1377 = vsel %vm1375, %v1376, %v1355
        %v1378 = vshrl.u32 %v1377, 6
        %v1379 = vand.u32 %v1377, 63
        %v1380 = vsub.s32 0, %v1379
        %v1381 = vsel %vm1375, %v1380, %v1379
        %vm1382 = vcmp.lt.s32.totalorder %v1356, 0
        %v1383 = vsub.s32 0, %v1356
        %v1384 = vsel %vm1382, %v1383, %v1356
        %v1385 = vshrl.u32 %v1384, 6
        %v1386 = vand.u32 %v1384, 63
        %v1387 = vsub.s32 0, %v1386
        %v1388 = vsel %vm1382, %v1387, %v1386
        %vm1389 = vcmp.lt.s32.totalorder %v1357, 0
        %v1390 = vsub.s32 0, %v1357
        %v1391 = vsel %vm1389, %v1390, %v1357
        %v1392 = vshrl.u32 %v1391, 6
        %v1393 = vand.u32 %v1391, 63
        %v1394 = vsub.s32 0, %v1393
        %v1395 = vsel %vm1389, %v1394, %v1393
        %vm1396 = vcmp.lt.s32.totalorder %v1358, 0
        %v1397 = vsub.s32 0, %v1358
        %v1398 = vsel %vm1396, %v1397, %v1358
        %v1399 = vshrl.u32 %v1398, 6
        %v1400 = vand.u32 %v1398, 63
        %v1401 = vsub.s32 0, %v1400
        %v1402 = vsel %vm1396, %v1401, %v1400
        %vm1403 = vcmp.lt.s32.totalorder %v1359, 0
        %v1404 = vsub.s32 0, %v1359
        %v1405 = vsel %vm1403, %v1404, %v1359
        %v1406 = vshrl.u32 %v1405, 6
        %v1407 = vand.u32 %v1405, 63
        %v1408 = vsub.s32 0, %v1407
        %v1409 = vsel %vm1403, %v1408, %v1407
        %vm1410 = vcmp.lt.s32.totalorder %v1360, 0
        %v1411 = vsub.s32 0, %v1360
        %v1412 = vsel %vm1410, %v1411, %v1360
        %v1413 = vshrl.u32 %v1412, 6
        %v1414 = vand.u32 %v1412, 63
        %v1415 = vsub.s32 0, %v1414
        %v1416 = vsel %vm1410, %v1415, %v1414
        %vm1417 = vcmp.ne.s32.totalorder %v1367, 0
        %vm1418 = vcmp.ne.s32.totalorder %v1374, 0
        %vm1419 = vcmp.ne.s32.totalorder %v1381, 0
        %vm1420 = vcmp.ne.s32.totalorder %v1388, 0
        %vm1421 = vcmp.ne.s32.totalorder %v1395, 0
        %vm1422 = vcmp.ne.s32.totalorder %v1402, 0
        %vm1423 = vcmp.ne.s32.totalorder %v1409, 0
        %vm1424 = vcmp.ne.s32.totalorder %v1416, 0
        %vm1425 = vcmp.lt.s32.totalorder %v1367, 0
        %vm1426 = vcmp.lt.s32.totalorder %v1374, 0
        %vm1427 = vcmp.lt.s32.totalorder %v1381, 0
        %vm1428 = vcmp.lt.s32.totalorder %v1388, 0
        %vm1429 = vcmp.lt.s32.totalorder %v1395, 0
        %vm1430 = vcmp.lt.s32.totalorder %v1402, 0
        %vm1431 = vcmp.lt.s32.totalorder %v1409, 0
        %vm1432 = vcmp.lt.s32.totalorder %v1416, 0
        %vm1433 = vmand %vm1425, %vm1417
        %vm1434 = vmand %vm1426, %vm1418
        %vm1435 = vmand %vm1427, %vm1419
        %vm1436 = vmand %vm1428, %vm1420
        %vm1437 = vmand %vm1429, %vm1421
        %vm1438 = vmand %vm1430, %vm1422
        %vm1439 = vmand %vm1431, %vm1423
        %vm1440 = vmand %vm1432, %vm1424
        %v1441 = vadd.s32 %v1367, 64
        %v1442 = vadd.s32 %v1374, 64
        %v1443 = vadd.s32 %v1381, 64
        %v1444 = vadd.s32 %v1388, 64
        %v1445 = vadd.s32 %v1395, 64
        %v1446 = vadd.s32 %v1402, 64
        %v1447 = vadd.s32 %v1409, 64
        %v1448 = vadd.s32 %v1416, 64
        %v1449 = vsel %vm1433, %v1441, %v1367
        %v1450 = vsel %vm1434, %v1442, %v1374
        %v1451 = vsel %vm1435, %v1443, %v1381
        %v1452 = vsel %vm1436, %v1444, %v1388
        %v1453 = vsel %vm1437, %v1445, %v1395
        %v1454 = vsel %vm1438, %v1446, %v1402
        %v1455 = vsel %vm1439, %v1447, %v1409
        %v1456 = vsel %vm1440, %v1448, %v1416
        %v1457 = vrot.slane %v1322, 7
        %v1458 = vrot.slane %v1325, 7
        %v1459 = vrot.slane %v1330, 7
        %v1460 = vrot.slane %v1333, 7
        %v1461 = vrot.slane %v1338, 7
        %v1462 = vrot.slane %v1341, 7
        %v1463 = vrot.slane %v1346, 7
        %v1464 = vrot.slane %v1349, 7
        %vm1465 = vcmp.lt.s32.totalorder %v1353, 1
        %v1466 = vsel %vm1465, %v1463, %v1464
        %v1467 = vsel %vm1465, %v1462, %v1463
        %v1468 = vsel %vm1465, %v1461, %v1462
        %v1469 = vsel %vm1465, %v1460, %v1461
        %v1470 = vsel %vm1465, %v1459, %v1460
        %v1471 = vsel %vm1465, %v1458, %v1459
        %v1472 = vsel %vm1465, %v1457, %v1458
        %v1473 = vsel %vm1465, %v1464, %v1457
        %vm1474 = vcmp.ge.s32.totalorder %v1449, 1
        %vm1475 = vcmp.ge.s32.totalorder %v1450, 1
        %vm1476 = vcmp.ge.s32.totalorder %v1451, 1
        %vm1477 = vcmp.ge.s32.totalorder %v1452, 1
        %vm1478 = vcmp.ge.s32.totalorder %v1453, 1
        %vm1479 = vcmp.ge.s32.totalorder %v1454, 1
        %vm1480 = vcmp.ge.s32.totalorder %v1455, 1
        %vm1481 = vcmp.ge.s32.totalorder %v1456, 1
        %v1482 = vsel %vm1474, %v1473, 0.0
        %v1483 = vsel %vm1475, %v1472, 0.0
        %v1484 = vsel %vm1476, %v1471, 0.0
        %v1485 = vsel %vm1477, %v1470, 0.0
        %v1486 = vsel %vm1478, %v1469, 0.0
        %v1487 = vsel %vm1479, %v1468, 0.0
        %v1488 = vsel %vm1480, %v1467, 0.0
        %v1489 = vsel %vm1481, %v1466, 0.0
        %v1490 = vld [vmem:[#allocation7] sm:$0xf]
        %v1491 = vld [vmem:[#allocation7 + $0x4] sm:$0xf]
        %v1492 = vld [vmem:[#allocation7 + $0x8] sm:$0xf]
        %v1493 = vld [vmem:[#allocation7 + $0xc] sm:$0xf]
        %v1494 = vld [vmem:[#allocation7 + $0x10] sm:$0xf]
        %v1495 = vld [vmem:[#allocation7 + $0x14] sm:$0xf]
        %v1496 = vld [vmem:[#allocation7 + $0x18] sm:$0xf]
        %v1497 = vld [vmem:[#allocation7 + $0x1c] sm:$0xf]
        %v1498 = vld [vmem:[#allocation7 + $0x20] sm:$0xf]
        %v1499 = vld [vmem:[#allocation7 + $0x24] sm:$0xf]
        %v1500 = vld [vmem:[#allocation7 + $0x28] sm:$0xf]
        %v1501 = vld [vmem:[#allocation7 + $0x2c] sm:$0xf]
        %v1502 = vld [vmem:[#allocation7 + $0x30] sm:$0xf]
        %v1503 = vld [vmem:[#allocation7 + $0x34] sm:$0xf]
        %v1504 = vld [vmem:[#allocation7 + $0x38] sm:$0xf]
        %v1505 = vld [vmem:[#allocation7 + $0x3c] sm:$0xf]
        %v1506 = vld [vmem:[#allocation7 + $0x40] sm:$0xf]
        %v1507 = vld [vmem:[#allocation7 + $0x44] sm:$0xf]
        %v1508 = vld [vmem:[#allocation7 + $0x48] sm:$0xf]
        %v1509 = vld [vmem:[#allocation7 + $0x4c] sm:$0xf]
        %v1510 = vld [vmem:[#allocation7 + $0x50] sm:$0xf]
        %v1511 = vld [vmem:[#allocation7 + $0x54] sm:$0xf]
        %v1512 = vld [vmem:[#allocation7 + $0x58] sm:$0xf]
        %v1513 = vld [vmem:[#allocation7 + $0x5c] sm:$0xf]
        %v1514 = vld [vmem:[#allocation7 + $0x60] sm:$0xf]
        %v1515 = vld [vmem:[#allocation7 + $0x64] sm:$0xf]
        %v1516 = vld [vmem:[#allocation7 + $0x68] sm:$0xf]
        %v1517 = vld [vmem:[#allocation7 + $0x6c] sm:$0xf]
        %v1518 = vld [vmem:[#allocation7 + $0x70] sm:$0xf]
        %v1519 = vld [vmem:[#allocation7 + $0x74] sm:$0xf]
        %v1520 = vld [vmem:[#allocation7 + $0x78] sm:$0xf]
        %v1521 = vld [vmem:[#allocation7 + $0x7c] sm:$0xf]
        %v1522 = vpack.c.bf16 %v1483, %v1482
        %v1523 = vpack.c.bf16 %v1325, %v1322
        %v1524 = vpack.c.bf16 %v1485, %v1484
        %v1525 = vpack.c.bf16 %v1333, %v1330
        %v1526 = vpack.c.bf16 %v1487, %v1486
        %v1527 = vpack.c.bf16 %v1341, %v1338
        %v1528 = vpack.c.bf16 %v1489, %v1488
        %v1529 = vpack.c.bf16 %v1349, %v1346
        %v1530 = vld [vmem:[#allocation8] sm:$0x1]
        %v1532 = vlaneseq
        %v1533 = vshrl.u32 %v1532, 7
        %v1534 = vsub.s32 0, %v1533
        %v1535 = vrot.slane %v1530, %v1534
        %v1569 = vunpack.c.l.b16 %v1490
        %v1570 = vunpack.c.l.b16 %v1491
        %v1571 = vunpack.c.l.b16 %v1492
        %v1572 = vunpack.c.l.b16 %v1493
        %v1573 = vunpack.c.l.b16 %v1494
        %v1574 = vunpack.c.l.b16 %v1495
        %v1575 = vunpack.c.l.b16 %v1496
        %v1576 = vunpack.c.l.b16 %v1497
        %v1577 = vunpack.c.l.b16 %v1498
        %v1578 = vunpack.c.l.b16 %v1499
        %v1579 = vunpack.c.l.b16 %v1500
        %v1580 = vunpack.c.l.b16 %v1501
        %v1581 = vunpack.c.l.b16 %v1502
        %v1582 = vunpack.c.l.b16 %v1503
        %v1583 = vunpack.c.l.b16 %v1504
        %v1584 = vunpack.c.l.b16 %v1505
        %v1585 = vunpack.c.l.b16 %v1506
        %v1586 = vunpack.c.l.b16 %v1507
        %v1587 = vunpack.c.l.b16 %v1508
        %v1588 = vunpack.c.l.b16 %v1509
        %v1589 = vunpack.c.l.b16 %v1510
        %v1590 = vunpack.c.l.b16 %v1511
        %v1591 = vunpack.c.l.b16 %v1512
        %v1592 = vunpack.c.l.b16 %v1513
        %v1593 = vunpack.c.l.b16 %v1514
        %v1594 = vunpack.c.l.b16 %v1515
        %v1595 = vunpack.c.l.b16 %v1516
        %v1596 = vunpack.c.l.b16 %v1517
        %v1597 = vunpack.c.l.b16 %v1518
        %v1598 = vunpack.c.l.b16 %v1519
        %v1599 = vunpack.c.l.b16 %v1520
        %v1600 = vunpack.c.l.b16 %v1521
        %v1601 = vpack.c.b16 %v1570, %v1569
        %v1602 = vpack.c.b16 %v1572, %v1571
        %v1603 = vpack.c.b16 %v1574, %v1573
        %v1604 = vpack.c.b16 %v1576, %v1575
        %v1605 = vpack.c.b16 %v1578, %v1577
        %v1606 = vpack.c.b16 %v1580, %v1579
        %v1607 = vpack.c.b16 %v1582, %v1581
        %v1608 = vpack.c.b16 %v1584, %v1583
        %v1609 = vpack.c.b16 %v1586, %v1585
        %v1610 = vpack.c.b16 %v1588, %v1587
        %v1611 = vpack.c.b16 %v1590, %v1589
        %v1612 = vpack.c.b16 %v1592, %v1591
        %v1613 = vpack.c.b16 %v1594, %v1593
        %v1614 = vpack.c.b16 %v1596, %v1595
        %v1615 = vpack.c.b16 %v1598, %v1597
        %v1616 = vpack.c.b16 %v1600, %v1599
        %1633 = vmatprep.subr.bf16.mxu0 0
        %1634 = vmatpush1.bf16.msra.mxu0 %v1608
        %1635 = vmatprep.subr.bf16.mxu0 0
        %1636 = vmatpush1.bf16.msra.mxu0 %v1607
        %1637 = vmatprep.subr.bf16.mxu0 0
        %1638 = vmatpush1.bf16.msra.mxu0 %v1606
        %1639 = vmatprep.subr.bf16.mxu0 0
        %1640 = vmatpush1.bf16.msra.mxu0 %v1605
        %1641 = vmatprep.subr.bf16.mxu0 0
        %1642 = vmatpush1.bf16.msra.mxu0 %v1604
        %1643 = vmatprep.subr.bf16.mxu0 0
        %1644 = vmatpush1.bf16.msra.mxu0 %v1603
        %1645 = vmatprep.subr.bf16.mxu0 0
        %1646 = vmatpush1.bf16.msra.mxu0 %v1602
        %1647 = vmatprep.subr.bf16.mxu0 0
        %1648 = vmatpush1.bf16.msra.mxu0 %v1601
        %1649 = vmatprep.subr.bf16.mxu0 0
        %1650 = vmatpush2.bf16.msra.mxu0 %v1616
        %1651 = vmatprep.subr.bf16.mxu0 0
        %1652 = vmatpush2.bf16.msra.mxu0 %v1615
        %1653 = vmatprep.subr.bf16.mxu0 0
        %1654 = vmatpush2.bf16.msra.mxu0 %v1614
        %1655 = vmatprep.subr.bf16.mxu0 0
        %1656 = vmatpush2.bf16.msra.mxu0 %v1613
        %1657 = vmatprep.subr.bf16.mxu0 0
        %1658 = vmatpush2.bf16.msra.mxu0 %v1612
        %1659 = vmatprep.subr.bf16.mxu0 0
        %1660 = vmatpush2.bf16.msra.mxu0 %v1611
        %1661 = vmatprep.subr.bf16.mxu0 0
        %1662 = vmatpush2.bf16.msra.mxu0 %v1610
        %1663 = vmatprep.subr.bf16.mxu0 0
        %1664 = vmatpush2.bf16.msra.mxu0 %v1609
        %1665 = vmatprep.mubr.bf16.mxu0 %v1523
        %1666 = vmatmul.mubr.bf16.gmra.mxu0 %v1522
        %v1667 = vpop.f32.mrf.mxu0
        %v1668 = vadd.f32 %v1535, %v1667
        %v1669 = vpop.f32.mrf.mxu0
        %v1670 = vpop.f32.mrf.mxu0
        %v1671 = vadd.f32 %v1535, %v1670
        %v1672 = vpop.f32.mrf.mxu0
        %1673 = vmatprep.mubr.bf16.mxu0 %v1525
        %1674 = vmatmul.mubr.bf16.gmra.mxu0 %v1524
        %v1675 = vpop.f32.mrf.mxu0
        %v1676 = vadd.f32 %v1535, %v1675
        %v1677 = vpop.f32.mrf.mxu0
        %v1678 = vpop.f32.mrf.mxu0
        %v1679 = vadd.f32 %v1535, %v1678
        %v1680 = vpop.f32.mrf.mxu0
        %1681 = vmatprep.mubr.bf16.mxu0 %v1527
        %1682 = vmatmul.mubr.bf16.gmra.mxu0 %v1526
        %v1683 = vpop.f32.mrf.mxu0
        %v1684 = vadd.f32 %v1535, %v1683
        %v1685 = vpop.f32.mrf.mxu0
        %v1686 = vpop.f32.mrf.mxu0
        %v1687 = vadd.f32 %v1535, %v1686
        %v1688 = vpop.f32.mrf.mxu0
        %1689 = vmatprep.mubr.bf16.mxu0 %v1529
        %1690 = vmatmul.mubr.bf16.gmra.mxu0 %v1528
        %v1691 = vpop.f32.mrf.mxu0
        %v1692 = vadd.f32 %v1535, %v1691
        %v1693 = vpop.f32.mrf.mxu0
        %v1694 = vpop.f32.mrf.mxu0
        %v1695 = vadd.f32 %v1535, %v1694
        %v1696 = vpop.f32.mrf.mxu0
        %1697 = vdwg.mxu0
        %v1698 = vmax.f32 %v1668, -20.0
        %v1699 = vmax.f32 %v1671, -20.0
        %v1700 = vmax.f32 %v1676, -20.0
        %v1701 = vmax.f32 %v1679, -20.0
        %v1702 = vmax.f32 %v1684, -20.0
        %v1703 = vmax.f32 %v1687, -20.0
        %v1704 = vmax.f32 %v1692, -20.0
        %v1705 = vmax.f32 %v1695, -20.0
        %v1706 = vmin.f32 %v1698, 20.0
        %v1707 = vmin.f32 %v1699, 20.0
        %v1708 = vmin.f32 %v1700, 20.0
        %v1709 = vmin.f32 %v1701, 20.0
        %v1710 = vmin.f32 %v1702, 20.0
        %v1711 = vmin.f32 %v1703, 20.0
        %v1712 = vmin.f32 %v1704, 20.0
        %v1713 = vmin.f32 %v1705, 20.0
        %v1714 = vmul.f32 %v1706, 1.442695
        %v1715 = vpow.pop %v1714
        %v1716 = vmul.f32 %v1707, 1.442695
        %v1717 = vpow.pop %v1716
        %v1718 = vmul.f32 %v1708, 1.442695
        %v1719 = vpow.pop %v1718
        %v1720 = vmul.f32 %v1709, 1.442695
        %v1721 = vpow.pop %v1720
        %v1722 = vmul.f32 %v1710, 1.442695
        %v1723 = vpow.pop %v1722
        %v1724 = vmul.f32 %v1711, 1.442695
        %v1725 = vpow.pop %v1724
        %v1726 = vmul.f32 %v1712, 1.442695
        %v1727 = vpow.pop %v1726
        %v1728 = vmul.f32 %v1713, 1.442695
        %v1729 = vpow.pop %v1728
        %v1730 = vsub.f32 %v1715, 1.0
        %v1731 = vsub.f32 %v1717, 1.0
        %v1732 = vsub.f32 %v1719, 1.0
        %v1733 = vsub.f32 %v1721, 1.0
        %v1734 = vsub.f32 %v1723, 1.0
        %v1735 = vsub.f32 %v1725, 1.0
        %v1736 = vsub.f32 %v1727, 1.0
        %v1737 = vsub.f32 %v1729, 1.0
        %v1738 = vmul.f32 %v1715, %v1730
        %v1739 = vmul.f32 %v1717, %v1731
        %v1740 = vmul.f32 %v1719, %v1732
        %v1741 = vmul.f32 %v1721, %v1733
        %v1742 = vmul.f32 %v1723, %v1734
        %v1743 = vmul.f32 %v1725, %v1735
        %v1744 = vmul.f32 %v1727, %v1736
        %v1745 = vmul.f32 %v1729, %v1737
        %v1746 = vmul.f32 %v1715, %v1715
        %v1747 = vmul.f32 %v1717, %v1717
        %v1748 = vmul.f32 %v1719, %v1719
        %v1749 = vmul.f32 %v1721, %v1721
        %v1750 = vmul.f32 %v1723, %v1723
        %v1751 = vmul.f32 %v1725, %v1725
        %v1752 = vmul.f32 %v1727, %v1727
        %v1753 = vmul.f32 %v1729, %v1729
        %v1754 = vadd.f32 %v1746, 1.0
        %v1755 = vadd.f32 %v1747, 1.0
        %v1756 = vadd.f32 %v1748, 1.0
        %v1757 = vadd.f32 %v1749, 1.0
        %v1758 = vadd.f32 %v1750, 1.0
        %v1759 = vadd.f32 %v1751, 1.0
        %v1760 = vadd.f32 %v1752, 1.0
        %v1761 = vadd.f32 %v1753, 1.0
        %v1762 = vrcp.pop %v1754
        %v1763 = vrcp.pop %v1755
        %v1764 = vrcp.pop %v1756
        %v1765 = vrcp.pop %v1757
        %v1766 = vrcp.pop %v1758
        %v1767 = vrcp.pop %v1759
        %v1768 = vrcp.pop %v1760
        %v1769 = vrcp.pop %v1761
        %v1770 = vmul.f32 %v1738, %v1762
        %v1771 = vmul.f32 %v1739, %v1763
        %v1772 = vmul.f32 %v1740, %v1764
        %v1773 = vmul.f32 %v1741, %v1765
        %v1774 = vmul.f32 %v1742, %v1766
        %v1775 = vmul.f32 %v1743, %v1767
        %v1776 = vmul.f32 %v1744, %v1768
        %v1777 = vmul.f32 %v1745, %v1769
        %v1778 = vld [vmem:[#allocation10] sm:$0xf]
        %v1779 = vld [vmem:[#allocation10 + $0x4] sm:$0xf]
        %v1780 = vld [vmem:[#allocation10 + $0x8] sm:$0xf]
        %v1781 = vld [vmem:[#allocation10 + $0xc] sm:$0xf]
        %v1782 = vld [vmem:[#allocation10 + $0x10] sm:$0xf]
        %v1783 = vld [vmem:[#allocation10 + $0x14] sm:$0xf]
        %v1784 = vld [vmem:[#allocation10 + $0x18] sm:$0xf]
        %v1785 = vld [vmem:[#allocation10 + $0x1c] sm:$0xf]
        %v1786 = vld [vmem:[#allocation10 + $0x20] sm:$0xf]
        %v1787 = vld [vmem:[#allocation10 + $0x24] sm:$0xf]
        %v1788 = vld [vmem:[#allocation10 + $0x28] sm:$0xf]
        %v1789 = vld [vmem:[#allocation10 + $0x2c] sm:$0xf]
        %v1790 = vld [vmem:[#allocation10 + $0x30] sm:$0xf]
        %v1791 = vld [vmem:[#allocation10 + $0x34] sm:$0xf]
        %v1792 = vld [vmem:[#allocation10 + $0x38] sm:$0xf]
        %v1793 = vld [vmem:[#allocation10 + $0x3c] sm:$0xf]
        %v1794 = vpack.c.bf16 %v1771, %v1770
        %v1795 = vpack.c.bf16 %v1773, %v1772
        %v1796 = vpack.c.bf16 %v1775, %v1774
        %v1797 = vpack.c.bf16 %v1777, %v1776
        %v1814 = vunpack.c.l.b16 %v1778
        %v1815 = vunpack.c.l.b16 %v1779
        %v1816 = vunpack.c.l.b16 %v1780
        %v1817 = vunpack.c.l.b16 %v1781
        %v1818 = vunpack.c.l.b16 %v1782
        %v1819 = vunpack.c.l.b16 %v1783
        %v1820 = vunpack.c.l.b16 %v1784
        %v1821 = vunpack.c.l.b16 %v1785
        %v1822 = vunpack.c.l.b16 %v1786
        %v1823 = vunpack.c.l.b16 %v1787
        %v1824 = vunpack.c.l.b16 %v1788
        %v1825 = vunpack.c.l.b16 %v1789
        %v1826 = vunpack.c.l.b16 %v1790
        %v1827 = vunpack.c.l.b16 %v1791
        %v1828 = vunpack.c.l.b16 %v1792
        %v1829 = vunpack.c.l.b16 %v1793
        %v1830 = vpack.c.b16 %v1815, %v1814
        %v1831 = vpack.c.b16 %v1817, %v1816
        %v1832 = vpack.c.b16 %v1819, %v1818
        %v1833 = vpack.c.b16 %v1821, %v1820
        %v1834 = vpack.c.b16 %v1823, %v1822
        %v1835 = vpack.c.b16 %v1825, %v1824
        %v1836 = vpack.c.b16 %v1827, %v1826
        %v1837 = vpack.c.b16 %v1829, %v1828
        %1846 = vmatprep.subr.bf16.mxu0 0
        %1847 = vmatpush1.bf16.msra.mxu0 %v1837
        %1848 = vmatprep.subr.bf16.mxu0 0
        %1849 = vmatpush1.bf16.msra.mxu0 %v1836
        %1850 = vmatprep.subr.bf16.mxu0 0
        %1851 = vmatpush1.bf16.msra.mxu0 %v1835
        %1852 = vmatprep.subr.bf16.mxu0 0
        %1853 = vmatpush1.bf16.msra.mxu0 %v1834
        %1854 = vmatprep.subr.bf16.mxu0 0
        %1855 = vmatpush1.bf16.msra.mxu0 %v1833
        %1856 = vmatprep.subr.bf16.mxu0 0
        %1857 = vmatpush1.bf16.msra.mxu0 %v1832
        %1858 = vmatprep.subr.bf16.mxu0 0
        %1859 = vmatpush1.bf16.msra.mxu0 %v1831
        %1860 = vmatprep.subr.bf16.mxu0 0
        %1861 = vmatpush1.bf16.msra.mxu0 %v1830
        %1862 = vmatprep.subr.bf16.mxu0 0
        %1863 = vmatpush2.bf16.msra.mxu0 0
        %1864 = vmatprep.subr.bf16.mxu0 0
        %1865 = vmatpush2.bf16.msra.mxu0 0
        %1866 = vmatprep.subr.bf16.mxu0 0
        %1867 = vmatpush2.bf16.msra.mxu0 0
        %1868 = vmatprep.subr.bf16.mxu0 0
        %1869 = vmatpush2.bf16.msra.mxu0 0
        %1870 = vmatprep.subr.bf16.mxu0 0
        %1871 = vmatpush2.bf16.msra.mxu0 0
        %1872 = vmatprep.subr.bf16.mxu0 0
        %1873 = vmatpush2.bf16.msra.mxu0 0
        %1874 = vmatprep.subr.bf16.mxu0 0
        %1875 = vmatpush2.bf16.msra.mxu0 0
        %1876 = vmatprep.subr.bf16.mxu0 0
        %1877 = vmatpush2.bf16.msra.mxu0 0
        %1878 = vmatprep.mubr.bf16.mxu0 0
        %1879 = vmatmul.mubr.bf16.gmra.mxu0 %v1794
        %v1880 = vpop.f32.mrf.mxu0
        %v1881 = vadd.f32 0.0, %v1880
        %v1882 = vpop.f32.mrf.mxu0
        %v1883 = vpop.f32.mrf.mxu0
        %v1884 = vadd.f32 0.0, %v1883
        %v1885 = vpop.f32.mrf.mxu0
        %1886 = vmatprep.mubr.bf16.mxu0 0
        %1887 = vmatmul.mubr.bf16.gmra.mxu0 %v1795
        %v1888 = vpop.f32.mrf.mxu0
        %v1889 = vadd.f32 0.0, %v1888
        %v1890 = vpop.f32.mrf.mxu0
        %v1891 = vpop.f32.mrf.mxu0
        %v1892 = vadd.f32 0.0, %v1891
        %v1893 = vpop.f32.mrf.mxu0
        %1894 = vmatprep.mubr.bf16.mxu0 0
        %1895 = vmatmul.mubr.bf16.gmra.mxu0 %v1796
        %v1896 = vpop.f32.mrf.mxu0
        %v1897 = vadd.f32 0.0, %v1896
        %v1898 = vpop.f32.mrf.mxu0
        %v1899 = vpop.f32.mrf.mxu0
        %v1900 = vadd.f32 0.0, %v1899
        %v1901 = vpop.f32.mrf.mxu0
        %1902 = vmatprep.mubr.bf16.mxu0 0
        %1903 = vmatmul.mubr.bf16.gmra.mxu0 %v1797
        %v1904 = vpop.f32.mrf.mxu0
        %v1905 = vadd.f32 0.0, %v1904
        %v1906 = vpop.f32.mrf.mxu0
        %v1907 = vpop.f32.mrf.mxu0
        %v1908 = vadd.f32 0.0, %v1907
        %v1909 = vpop.f32.mrf.mxu0
        %1910 = vdwg.mxu0
        %v1911 = vadd.f32 %v1322, %v1881
        %v1912 = vadd.f32 %v1325, %v1884
        %v1913 = vadd.f32 %v1330, %v1889
        %v1914 = vadd.f32 %v1333, %v1892
        %v1915 = vadd.f32 %v1338, %v1897
        %v1916 = vadd.f32 %v1341, %v1900
        %v1917 = vadd.f32 %v1346, %v1905
        %v1918 = vadd.f32 %v1349, %v1908
        %v1919 = vadd.f32 %v1881, 0.0
        %v1920 = vadd.f32 %v1884, 0.0
        %v1921 = vadd.f32 %v1889, 0.0
        %v1922 = vadd.f32 %v1892, 0.0
        %v1923 = vadd.f32 %v1897, 0.0
        %v1924 = vadd.f32 %v1900, 0.0
        %v1925 = vadd.f32 %v1905, 0.0
        %v1926 = vadd.f32 %v1908, 0.0
        %v1927 = vrot.slane %v1911, 6
        %v1928 = vrot.slane %v1912, 6
        %v1929 = vrot.slane %v1913, 6
        %v1930 = vrot.slane %v1914, 6
        %v1931 = vrot.slane %v1915, 6
        %v1932 = vrot.slane %v1916, 6
        %v1933 = vrot.slane %v1917, 6
        %v1934 = vrot.slane %v1918, 6
        %vm1935 = vcmp.lt.s32.totalorder %v1353, 2
        %v1936 = vsel %vm1935, %v1933, %v1934
        %v1937 = vsel %vm1935, %v1932, %v1933
        %v1938 = vsel %vm1935, %v1931, %v1932
        %v1939 = vsel %vm1935, %v1930, %v1931
        %v1940 = vsel %vm1935, %v1929, %v1930
        %v1941 = vsel %vm1935, %v1928, %v1929
        %v1942 = vsel %vm1935, %v1927, %v1928
        %v1943 = vsel %vm1935, %v1934, %v1927
        %vm1944 = vcmp.ge.s32.totalorder %v1449, 2
        %vm1945 = vcmp.ge.s32.totalorder %v1450, 2
        %vm1946 = vcmp.ge.s32.totalorder %v1451, 2
        %vm1947 = vcmp.ge.s32.totalorder %v1452, 2
        %vm1948 = vcmp.ge.s32.totalorder %v1453, 2
        %vm1949 = vcmp.ge.s32.totalorder %v1454, 2
        %vm1950 = vcmp.ge.s32.totalorder %v1455, 2
        %vm1951 = vcmp.ge.s32.totalorder %v1456, 2
        %v1952 = vsel %vm1944, %v1943, 0.0
        %v1953 = vsel %vm1945, %v1942, 0.0
        %v1954 = vsel %vm1946, %v1941, 0.0
        %v1955 = vsel %vm1947, %v1940, 0.0
        %v1956 = vsel %vm1948, %v1939, 0.0
        %v1957 = vsel %vm1949, %v1938, 0.0
        %v1958 = vsel %vm1950, %v1937, 0.0
        %v1959 = vsel %vm1951, %v1936, 0.0
        %s1960 = scalar_lea.vmem [#allocation7], 128
        %v1961 = vld [vmem:[%s1960] sm:$0xf]
        %v1962 = vld [vmem:[%s1960 + $0x4] sm:$0xf]
        %v1963 = vld [vmem:[%s1960 + $0x8] sm:$0xf]
        %v1964 = vld [vmem:[%s1960 + $0xc] sm:$0xf]
        %v1965 = vld [vmem:[%s1960 + $0x10] sm:$0xf]
        %v1966 = vld [vmem:[%s1960 + $0x14] sm:$0xf]
        %v1967 = vld [vmem:[%s1960 + $0x18] sm:$0xf]
        %v1968 = vld [vmem:[%s1960 + $0x1c] sm:$0xf]
        %v1969 = vld [vmem:[%s1960 + $0x20] sm:$0xf]
        %v1970 = vld [vmem:[%s1960 + $0x24] sm:$0xf]
        %v1971 = vld [vmem:[%s1960 + $0x28] sm:$0xf]
        %v1972 = vld [vmem:[%s1960 + $0x2c] sm:$0xf]
        %v1973 = vld [vmem:[%s1960 + $0x30] sm:$0xf]
        %v1974 = vld [vmem:[%s1960 + $0x34] sm:$0xf]
        %v1975 = vld [vmem:[%s1960 + $0x38] sm:$0xf]
        %v1976 = vld [vmem:[%s1960 + $0x3c] sm:$0xf]
        %v1977 = vld [vmem:[%s1960 + $0x40] sm:$0xf]
        %v1978 = vld [vmem:[%s1960 + $0x44] sm:$0xf]
        %v1979 = vld [vmem:[%s1960 + $0x48] sm:$0xf]
        %v1980 = vld [vmem:[%s1960 + $0x4c] sm:$0xf]
        %v1981 = vld [vmem:[%s1960 + $0x50] sm:$0xf]
        %v1982 = vld [vmem:[%s1960 + $0x54] sm:$0xf]
        %v1983 = vld [vmem:[%s1960 + $0x58] sm:$0xf]
        %v1984 = vld [vmem:[%s1960 + $0x5c] sm:$0xf]
        %v1985 = vld [vmem:[%s1960 + $0x60] sm:$0xf]
        %v1986 = vld [vmem:[%s1960 + $0x64] sm:$0xf]
        %v1987 = vld [vmem:[%s1960 + $0x68] sm:$0xf]
        %v1988 = vld [vmem:[%s1960 + $0x6c] sm:$0xf]
        %v1989 = vld [vmem:[%s1960 + $0x70] sm:$0xf]
        %v1990 = vld [vmem:[%s1960 + $0x74] sm:$0xf]
        %v1991 = vld [vmem:[%s1960 + $0x78] sm:$0xf]
        %v1992 = vld [vmem:[%s1960 + $0x7c] sm:$0xf]
        %v1993 = vpack.c.bf16 %v1953, %v1952
        %v1994 = vpack.c.bf16 %v1912, %v1911
        %v1995 = vpack.c.bf16 %v1955, %v1954
        %v1996 = vpack.c.bf16 %v1914, %v1913
        %v1997 = vpack.c.bf16 %v1957, %v1956
        %v1998 = vpack.c.bf16 %v1916, %v1915
        %v1999 = vpack.c.bf16 %v1959, %v1958
        %v2000 = vpack.c.bf16 %v1918, %v1917
        %s2001 = scalar_lea.vmem [#allocation8], 1
        %v2002 = vld [vmem:[%s2001] sm:$0x1]
        %v2004 = vlaneseq
        %v2005 = vshrl.u32 %v2004, 7
        %v2006 = vsub.s32 0, %v2005
        %v2007 = vrot.slane %v2002, %v2006
        %v2041 = vunpack.c.l.b16 %v1961
        %v2042 = vunpack.c.l.b16 %v1962
        %v2043 = vunpack.c.l.b16 %v1963
        %v2044 = vunpack.c.l.b16 %v1964
        %v2045 = vunpack.c.l.b16 %v1965
        %v2046 = vunpack.c.l.b16 %v1966
        %v2047 = vunpack.c.l.b16 %v1967
        %v2048 = vunpack.c.l.b16 %v1968
        %v2049 = vunpack.c.l.b16 %v1969
        %v2050 = vunpack.c.l.b16 %v1970
        %v2051 = vunpack.c.l.b16 %v1971
        %v2052 = vunpack.c.l.b16 %v1972
        %v2053 = vunpack.c.l.b16 %v1973
        %v2054 = vunpack.c.l.b16 %v1974
        %v2055 = vunpack.c.l.b16 %v1975
        %v2056 = vunpack.c.l.b16 %v1976
        %v2057 = vunpack.c.l.b16 %v1977
        %v2058 = vunpack.c.l.b16 %v1978
        %v2059 = vunpack.c.l.b16 %v1979
        %v2060 = vunpack.c.l.b16 %v1980
        %v2061 = vunpack.c.l.b16 %v1981
        %v2062 = vunpack.c.l.b16 %v1982
        %v2063 = vunpack.c.l.b16 %v1983
        %v2064 = vunpack.c.l.b16 %v1984
        %v2065 = vunpack.c.l.b16 %v1985
        %v2066 = vunpack.c.l.b16 %v1986
        %v2067 = vunpack.c.l.b16 %v1987
        %v2068 = vunpack.c.l.b16 %v1988
        %v2069 = vunpack.c.l.b16 %v1989
        %v2070 = vunpack.c.l.b16 %v1990
        %v2071 = vunpack.c.l.b16 %v1991
        %v2072 = vunpack.c.l.b16 %v1992
        %v2073 = vpack.c.b16 %v2042, %v2041
        %v2074 = vpack.c.b16 %v2044, %v2043
        %v2075 = vpack.c.b16 %v2046, %v2045
        %v2076 = vpack.c.b16 %v2048, %v2047
        %v2077 = vpack.c.b16 %v2050, %v2049
        %v2078 = vpack.c.b16 %v2052, %v2051
        %v2079 = vpack.c.b16 %v2054, %v2053
        %v2080 = vpack.c.b16 %v2056, %v2055
        %v2081 = vpack.c.b16 %v2058, %v2057
        %v2082 = vpack.c.b16 %v2060, %v2059
        %v2083 = vpack.c.b16 %v2062, %v2061
        %v2084 = vpack.c.b16 %v2064, %v2063
        %v2085 = vpack.c.b16 %v2066, %v2065
        %v2086 = vpack.c.b16 %v2068, %v2067
        %v2087 = vpack.c.b16 %v2070, %v2069
        %v2088 = vpack.c.b16 %v2072, %v2071
        %2105 = vmatprep.subr.bf16.mxu0 0
        %2106 = vmatpush1.bf16.msra.mxu0 %v2080
        %2107 = vmatprep.subr.bf16.mxu0 0
        %2108 = vmatpush1.bf16.msra.mxu0 %v2079
        %2109 = vmatprep.subr.bf16.mxu0 0
        %2110 = vmatpush1.bf16.msra.mxu0 %v2078
        %2111 = vmatprep.subr.bf16.mxu0 0
        %2112 = vmatpush1.bf16.msra.mxu0 %v2077
        %2113 = vmatprep.subr.bf16.mxu0 0
        %2114 = vmatpush1.bf16.msra.mxu0 %v2076
        %2115 = vmatprep.subr.bf16.mxu0 0
        %2116 = vmatpush1.bf16.msra.mxu0 %v2075
        %2117 = vmatprep.subr.bf16.mxu0 0
        %2118 = vmatpush1.bf16.msra.mxu0 %v2074
        %2119 = vmatprep.subr.bf16.mxu0 0
        %2120 = vmatpush1.bf16.msra.mxu0 %v2073
        %2121 = vmatprep.subr.bf16.mxu0 0
        %2122 = vmatpush2.bf16.msra.mxu0 %v2088
        %2123 = vmatprep.subr.bf16.mxu0 0
        %2124 = vmatpush2.bf16.msra.mxu0 %v2087
        %2125 = vmatprep.subr.bf16.mxu0 0
        %2126 = vmatpush2.bf16.msra.mxu0 %v2086
        %2127 = vmatprep.subr.bf16.mxu0 0
        %2128 = vmatpush2.bf16.msra.mxu0 %v2085
        %2129 = vmatprep.subr.bf16.mxu0 0
        %2130 = vmatpush2.bf16.msra.mxu0 %v2084
        %2131 = vmatprep.subr.bf16.mxu0 0
        %2132 = vmatpush2.bf16.msra.mxu0 %v2083
        %2133 = vmatprep.subr.bf16.mxu0 0
        %2134 = vmatpush2.bf16.msra.mxu0 %v2082
        %2135 = vmatprep.subr.bf16.mxu0 0
        %2136 = vmatpush2.bf16.msra.mxu0 %v2081
        %2137 = vmatprep.mubr.bf16.mxu0 %v1994
        %2138 = vmatmul.mubr.bf16.gmra.mxu0 %v1993
        %v2139 = vpop.f32.mrf.mxu0
        %v2140 = vadd.f32 %v2007, %v2139
        %v2141 = vpop.f32.mrf.mxu0
        %v2142 = vpop.f32.mrf.mxu0
        %v2143 = vadd.f32 %v2007, %v2142
        %v2144 = vpop.f32.mrf.mxu0
        %2145 = vmatprep.mubr.bf16.mxu0 %v1996
        %2146 = vmatmul.mubr.bf16.gmra.mxu0 %v1995
        %v2147 = vpop.f32.mrf.mxu0
        %v2148 = vadd.f32 %v2007, %v2147
        %v2149 = vpop.f32.mrf.mxu0
        %v2150 = vpop.f32.mrf.mxu0
        %v2151 = vadd.f32 %v2007, %v2150
        %v2152 = vpop.f32.mrf.mxu0
        %2153 = vmatprep.mubr.bf16.mxu0 %v1998
        %2154 = vmatmul.mubr.bf16.gmra.mxu0 %v1997
        %v2155 = vpop.f32.mrf.mxu0
        %v2156 = vadd.f32 %v2007, %v2155
        %v2157 = vpop.f32.mrf.mxu0
        %v2158 = vpop.f32.mrf.mxu0
        %v2159 = vadd.f32 %v2007, %v2158
        %v2160 = vpop.f32.mrf.mxu0
        %2161 = vmatprep.mubr.bf16.mxu0 %v2000
        %2162 = vmatmul.mubr.bf16.gmra.mxu0 %v1999
        %v2163 = vpop.f32.mrf.mxu0
        %v2164 = vadd.f32 %v2007, %v2163
        %v2165 = vpop.f32.mrf.mxu0
        %v2166 = vpop.f32.mrf.mxu0
        %v2167 = vadd.f32 %v2007, %v2166
        %v2168 = vpop.f32.mrf.mxu0
        %2169 = vdwg.mxu0
        %v2170 = vmax.f32 %v2140, -20.0
        %v2171 = vmax.f32 %v2143, -20.0
        %v2172 = vmax.f32 %v2148, -20.0
        %v2173 = vmax.f32 %v2151, -20.0
        %v2174 = vmax.f32 %v2156, -20.0
        %v2175 = vmax.f32 %v2159, -20.0
        %v2176 = vmax.f32 %v2164, -20.0
        %v2177 = vmax.f32 %v2167, -20.0
        %v2178 = vmin.f32 %v2170, 20.0
        %v2179 = vmin.f32 %v2171, 20.0
        %v2180 = vmin.f32 %v2172, 20.0
        %v2181 = vmin.f32 %v2173, 20.0
        %v2182 = vmin.f32 %v2174, 20.0
        %v2183 = vmin.f32 %v2175, 20.0
        %v2184 = vmin.f32 %v2176, 20.0
        %v2185 = vmin.f32 %v2177, 20.0
        %v2186 = vmul.f32 %v2178, 1.442695
        %v2187 = vpow.pop %v2186
        %v2188 = vmul.f32 %v2179, 1.442695
        %v2189 = vpow.pop %v2188
        %v2190 = vmul.f32 %v2180, 1.442695
        %v2191 = vpow.pop %v2190
        %v2192 = vmul.f32 %v2181, 1.442695
        %v2193 = vpow.pop %v2192
        %v2194 = vmul.f32 %v2182, 1.442695
        %v2195 = vpow.pop %v2194
        %v2196 = vmul.f32 %v2183, 1.442695
        %v2197 = vpow.pop %v2196
        %v2198 = vmul.f32 %v2184, 1.442695
        %v2199 = vpow.pop %v2198
        %v2200 = vmul.f32 %v2185, 1.442695
        %v2201 = vpow.pop %v2200
        %v2202 = vsub.f32 %v2187, 1.0
        %v2203 = vsub.f32 %v2189, 1.0
        %v2204 = vsub.f32 %v2191, 1.0
        %v2205 = vsub.f32 %v2193, 1.0
        %v2206 = vsub.f32 %v2195, 1.0
        %v2207 = vsub.f32 %v2197, 1.0
        %v2208 = vsub.f32 %v2199, 1.0
        %v2209 = vsub.f32 %v2201, 1.0
        %v2210 = vmul.f32 %v2187, %v2202
        %v2211 = vmul.f32 %v2189, %v2203
        %v2212 = vmul.f32 %v2191, %v2204
        %v2213 = vmul.f32 %v2193, %v2205
        %v2214 = vmul.f32 %v2195, %v2206
        %v2215 = vmul.f32 %v2197, %v2207
        %v2216 = vmul.f32 %v2199, %v2208
        %v2217 = vmul.f32 %v2201, %v2209
        %v2218 = vmul.f32 %v2187, %v2187
        %v2219 = vmul.f32 %v2189, %v2189
        %v2220 = vmul.f32 %v2191, %v2191
        %v2221 = vmul.f32 %v2193, %v2193
        %v2222 = vmul.f32 %v2195, %v2195
        %v2223 = vmul.f32 %v2197, %v2197
        %v2224 = vmul.f32 %v2199, %v2199
        %v2225 = vmul.f32 %v2201, %v2201
        %v2226 = vadd.f32 %v2218, 1.0
        %v2227 = vadd.f32 %v2219, 1.0
        %v2228 = vadd.f32 %v2220, 1.0
        %v2229 = vadd.f32 %v2221, 1.0
        %v2230 = vadd.f32 %v2222, 1.0
        %v2231 = vadd.f32 %v2223, 1.0
        %v2232 = vadd.f32 %v2224, 1.0
        %v2233 = vadd.f32 %v2225, 1.0
        %v2234 = vrcp.pop %v2226
        %v2235 = vrcp.pop %v2227
        %v2236 = vrcp.pop %v2228
        %v2237 = vrcp.pop %v2229
        %v2238 = vrcp.pop %v2230
        %v2239 = vrcp.pop %v2231
        %v2240 = vrcp.pop %v2232
        %v2241 = vrcp.pop %v2233
        %v2242 = vmul.f32 %v2210, %v2234
        %v2243 = vmul.f32 %v2211, %v2235
        %v2244 = vmul.f32 %v2212, %v2236
        %v2245 = vmul.f32 %v2213, %v2237
        %v2246 = vmul.f32 %v2214, %v2238
        %v2247 = vmul.f32 %v2215, %v2239
        %v2248 = vmul.f32 %v2216, %v2240
        %v2249 = vmul.f32 %v2217, %v2241
        %s2250 = scalar_lea.vmem [#allocation10], 64
        %v2251 = vld [vmem:[%s2250] sm:$0xf]
        %v2252 = vld [vmem:[%s2250 + $0x4] sm:$0xf]
        %v2253 = vld [vmem:[%s2250 + $0x8] sm:$0xf]
        %v2254 = vld [vmem:[%s2250 + $0xc] sm:$0xf]
        %v2255 = vld [vmem:[%s2250 + $0x10] sm:$0xf]
        %v2256 = vld [vmem:[%s2250 + $0x14] sm:$0xf]
        %v2257 = vld [vmem:[%s2250 + $0x18] sm:$0xf]
        %v2258 = vld [vmem:[%s2250 + $0x1c] sm:$0xf]
        %v2259 = vld [vmem:[%s2250 + $0x20] sm:$0xf]
        %v2260 = vld [vmem:[%s2250 + $0x24] sm:$0xf]
        %v2261 = vld [vmem:[%s2250 + $0x28] sm:$0xf]
        %v2262 = vld [vmem:[%s2250 + $0x2c] sm:$0xf]
        %v2263 = vld [vmem:[%s2250 + $0x30] sm:$0xf]
        %v2264 = vld [vmem:[%s2250 + $0x34] sm:$0xf]
        %v2265 = vld [vmem:[%s2250 + $0x38] sm:$0xf]
        %v2266 = vld [vmem:[%s2250 + $0x3c] sm:$0xf]
        %v2267 = vpack.c.bf16 %v2243, %v2242
        %v2268 = vpack.c.bf16 %v2245, %v2244
        %v2269 = vpack.c.bf16 %v2247, %v2246
        %v2270 = vpack.c.bf16 %v2249, %v2248
        %v2287 = vunpack.c.l.b16 %v2251
        %v2288 = vunpack.c.l.b16 %v2252
        %v2289 = vunpack.c.l.b16 %v2253
        %v2290 = vunpack.c.l.b16 %v2254
        %v2291 = vunpack.c.l.b16 %v2255
        %v2292 = vunpack.c.l.b16 %v2256
        %v2293 = vunpack.c.l.b16 %v2257
        %v2294 = vunpack.c.l.b16 %v2258
        %v2295 = vunpack.c.l.b16 %v2259
        %v2296 = vunpack.c.l.b16 %v2260
        %v2297 = vunpack.c.l.b16 %v2261
        %v2298 = vunpack.c.l.b16 %v2262
        %v2299 = vunpack.c.l.b16 %v2263
        %v2300 = vunpack.c.l.b16 %v2264
        %v2301 = vunpack.c.l.b16 %v2265
        %v2302 = vunpack.c.l.b16 %v2266
        %v2303 = vpack.c.b16 %v2288, %v2287
        %v2304 = vpack.c.b16 %v2290, %v2289
        %v2305 = vpack.c.b16 %v2292, %v2291
        %v2306 = vpack.c.b16 %v2294, %v2293
        %v2307 = vpack.c.b16 %v2296, %v2295
        %v2308 = vpack.c.b16 %v2298, %v2297
        %v2309 = vpack.c.b16 %v2300, %v2299
        %v2310 = vpack.c.b16 %v2302, %v2301
        %2319 = vmatprep.subr.bf16.mxu0 0
        %2320 = vmatpush1.bf16.msra.mxu0 %v2310
        %2321 = vmatprep.subr.bf16.mxu0 0
        %2322 = vmatpush1.bf16.msra.mxu0 %v2309
        %2323 = vmatprep.subr.bf16.mxu0 0
        %2324 = vmatpush1.bf16.msra.mxu0 %v2308
        %2325 = vmatprep.subr.bf16.mxu0 0
        %2326 = vmatpush1.bf16.msra.mxu0 %v2307
        %2327 = vmatprep.subr.bf16.mxu0 0
        %2328 = vmatpush1.bf16.msra.mxu0 %v2306
        %2329 = vmatprep.subr.bf16.mxu0 0
        %2330 = vmatpush1.bf16.msra.mxu0 %v2305
        %2331 = vmatprep.subr.bf16.mxu0 0
        %2332 = vmatpush1.bf16.msra.mxu0 %v2304
        %2333 = vmatprep.subr.bf16.mxu0 0
        %2334 = vmatpush1.bf16.msra.mxu0 %v2303
        %2335 = vmatprep.subr.bf16.mxu0 0
        %2336 = vmatpush2.bf16.msra.mxu0 0
        %2337 = vmatprep.subr.bf16.mxu0 0
        %2338 = vmatpush2.bf16.msra.mxu0 0
        %2339 = vmatprep.subr.bf16.mxu0 0
        %2340 = vmatpush2.bf16.msra.mxu0 0
        %2341 = vmatprep.subr.bf16.mxu0 0
        %2342 = vmatpush2.bf16.msra.mxu0 0
        %2343 = vmatprep.subr.bf16.mxu0 0
        %2344 = vmatpush2.bf16.msra.mxu0 0
        %2345 = vmatprep.subr.bf16.mxu0 0
        %2346 = vmatpush2.bf16.msra.mxu0 0
        %2347 = vmatprep.subr.bf16.mxu0 0
        %2348 = vmatpush2.bf16.msra.mxu0 0
        %2349 = vmatprep.subr.bf16.mxu0 0
        %2350 = vmatpush2.bf16.msra.mxu0 0
        %2351 = vmatprep.mubr.bf16.mxu0 0
        %2352 = vmatmul.mubr.bf16.gmra.mxu0 %v2267
        %v2353 = vpop.f32.mrf.mxu0
        %v2354 = vadd.f32 0.0, %v2353
        %v2355 = vpop.f32.mrf.mxu0
        %v2356 = vpop.f32.mrf.mxu0
        %v2357 = vadd.f32 0.0, %v2356
        %v2358 = vpop.f32.mrf.mxu0
        %2359 = vmatprep.mubr.bf16.mxu0 0
        %2360 = vmatmul.mubr.bf16.gmra.mxu0 %v2268
        %v2361 = vpop.f32.mrf.mxu0
        %v2362 = vadd.f32 0.0, %v2361
        %v2363 = vpop.f32.mrf.mxu0
        %v2364 = vpop.f32.mrf.mxu0
        %v2365 = vadd.f32 0.0, %v2364
        %v2366 = vpop.f32.mrf.mxu0
        %2367 = vmatprep.mubr.bf16.mxu0 0
        %2368 = vmatmul.mubr.bf16.gmra.mxu0 %v2269
        %v2369 = vpop.f32.mrf.mxu0
        %v2370 = vadd.f32 0.0, %v2369
        %v2371 = vpop.f32.mrf.mxu0
        %v2372 = vpop.f32.mrf.mxu0
        %v2373 = vadd.f32 0.0, %v2372
        %v2374 = vpop.f32.mrf.mxu0
        %2375 = vmatprep.mubr.bf16.mxu0 0
        %2376 = vmatmul.mubr.bf16.gmra.mxu0 %v2270
        %v2377 = vpop.f32.mrf.mxu0
        %v2378 = vadd.f32 0.0, %v2377
        %v2379 = vpop.f32.mrf.mxu0
        %v2380 = vpop.f32.mrf.mxu0
        %v2381 = vadd.f32 0.0, %v2380
        %v2382 = vpop.f32.mrf.mxu0
        %2383 = vdwg.mxu0
        %v2384 = vadd.f32 %v1911, %v2354
        %v2385 = vadd.f32 %v1912, %v2357
        %v2386 = vadd.f32 %v1913, %v2362
        %v2387 = vadd.f32 %v1914, %v2365
        %v2388 = vadd.f32 %v1915, %v2370
        %v2389 = vadd.f32 %v1916, %v2373
        %v2390 = vadd.f32 %v1917, %v2378
        %v2391 = vadd.f32 %v1918, %v2381
        %v2392 = vadd.f32 %v1919, %v2354
        %v2393 = vadd.f32 %v1920, %v2357
        %v2394 = vadd.f32 %v1921, %v2362
        %v2395 = vadd.f32 %v1922, %v2365
        %v2396 = vadd.f32 %v1923, %v2370
        %v2397 = vadd.f32 %v1924, %v2373
        %v2398 = vadd.f32 %v1925, %v2378
        %v2399 = vadd.f32 %v1926, %v2381
        %v2400 = vrot.slane %v2384, 4
        %v2401 = vrot.slane %v2385, 4
        %v2402 = vrot.slane %v2386, 4
        %v2403 = vrot.slane %v2387, 4
        %v2404 = vrot.slane %v2388, 4
        %v2405 = vrot.slane %v2389, 4
        %v2406 = vrot.slane %v2390, 4
        %v2407 = vrot.slane %v2391, 4
        %vm2408 = vcmp.lt.s32.totalorder %v1353, 4
        %v2409 = vsel %vm2408, %v2406, %v2407
        %v2410 = vsel %vm2408, %v2405, %v2406
        %v2411 = vsel %vm2408, %v2404, %v2405
        %v2412 = vsel %vm2408, %v2403, %v2404
        %v2413 = vsel %vm2408, %v2402, %v2403
        %v2414 = vsel %vm2408, %v2401, %v2402
        %v2415 = vsel %vm2408, %v2400, %v2401
        %v2416 = vsel %vm2408, %v2407, %v2400
        %vm2417 = vcmp.ge.s32.totalorder %v1449, 4
        %vm2418 = vcmp.ge.s32.totalorder %v1450, 4
        %vm2419 = vcmp.ge.s32.totalorder %v1451, 4
        %vm2420 = vcmp.ge.s32.totalorder %v1452, 4
        %vm2421 = vcmp.ge.s32.totalorder %v1453, 4
        %vm2422 = vcmp.ge.s32.totalorder %v1454, 4
        %vm2423 = vcmp.ge.s32.totalorder %v1455, 4
        %vm2424 = vcmp.ge.s32.totalorder %v1456, 4
        %v2425 = vsel %vm2417, %v2416, 0.0
        %v2426 = vsel %vm2418, %v2415, 0.0
        %v2427 = vsel %vm2419, %v2414, 0.0
        %v2428 = vsel %vm2420, %v2413, 0.0
        %v2429 = vsel %vm2421, %v2412, 0.0
        %v2430 = vsel %vm2422, %v2411, 0.0
        %v2431 = vsel %vm2423, %v2410, 0.0
        %v2432 = vsel %vm2424, %v2409, 0.0
        %s2433 = scalar_lea.vmem [#allocation7], 256
        %v2434 = vld [vmem:[%s2433] sm:$0xf]
        %v2435 = vld [vmem:[%s2433 + $0x4] sm:$0xf]
        %v2436 = vld [vmem:[%s2433 + $0x8] sm:$0xf]
        %v2437 = vld [vmem:[%s2433 + $0xc] sm:$0xf]
        %v2438 = vld [vmem:[%s2433 + $0x10] sm:$0xf]
        %v2439 = vld [vmem:[%s2433 + $0x14] sm:$0xf]
        %v2440 = vld [vmem:[%s2433 + $0x18] sm:$0xf]
        %v2441 = vld [vmem:[%s2433 + $0x1c] sm:$0xf]
        %v2442 = vld [vmem:[%s2433 + $0x20] sm:$0xf]
        %v2443 = vld [vmem:[%s2433 + $0x24] sm:$0xf]
        %v2444 = vld [vmem:[%s2433 + $0x28] sm:$0xf]
        %v2445 = vld [vmem:[%s2433 + $0x2c] sm:$0xf]
        %v2446 = vld [vmem:[%s2433 + $0x30] sm:$0xf]
        %v2447 = vld [vmem:[%s2433 + $0x34] sm:$0xf]
        %v2448 = vld [vmem:[%s2433 + $0x38] sm:$0xf]
        %v2449 = vld [vmem:[%s2433 + $0x3c] sm:$0xf]
        %v2450 = vld [vmem:[%s2433 + $0x40] sm:$0xf]
        %v2451 = vld [vmem:[%s2433 + $0x44] sm:$0xf]
        %v2452 = vld [vmem:[%s2433 + $0x48] sm:$0xf]
        %v2453 = vld [vmem:[%s2433 + $0x4c] sm:$0xf]
        %v2454 = vld [vmem:[%s2433 + $0x50] sm:$0xf]
        %v2455 = vld [vmem:[%s2433 + $0x54] sm:$0xf]
        %v2456 = vld [vmem:[%s2433 + $0x58] sm:$0xf]
        %v2457 = vld [vmem:[%s2433 + $0x5c] sm:$0xf]
        %v2458 = vld [vmem:[%s2433 + $0x60] sm:$0xf]
        %v2459 = vld [vmem:[%s2433 + $0x64] sm:$0xf]
        %v2460 = vld [vmem:[%s2433 + $0x68] sm:$0xf]
        %v2461 = vld [vmem:[%s2433 + $0x6c] sm:$0xf]
        %v2462 = vld [vmem:[%s2433 + $0x70] sm:$0xf]
        %v2463 = vld [vmem:[%s2433 + $0x74] sm:$0xf]
        %v2464 = vld [vmem:[%s2433 + $0x78] sm:$0xf]
        %v2465 = vld [vmem:[%s2433 + $0x7c] sm:$0xf]
        %v2466 = vpack.c.bf16 %v2426, %v2425
        %v2467 = vpack.c.bf16 %v2385, %v2384
        %v2468 = vpack.c.bf16 %v2428, %v2427
        %v2469 = vpack.c.bf16 %v2387, %v2386
        %v2470 = vpack.c.bf16 %v2430, %v2429
        %v2471 = vpack.c.bf16 %v2389, %v2388
        %v2472 = vpack.c.bf16 %v2432, %v2431
        %v2473 = vpack.c.bf16 %v2391, %v2390
        %s2474 = scalar_lea.vmem [#allocation8], 2
        %v2475 = vld [vmem:[%s2474] sm:$0x1]
        %v2477 = vlaneseq
        %v2478 = vshrl.u32 %v2477, 7
        %v2479 = vsub.s32 0, %v2478
        %v2480 = vrot.slane %v2475, %v2479
        %v2514 = vunpack.c.l.b16 %v2434
        %v2515 = vunpack.c.l.b16 %v2435
        %v2516 = vunpack.c.l.b16 %v2436
        %v2517 = vunpack.c.l.b16 %v2437
        %v2518 = vunpack.c.l.b16 %v2438
        %v2519 = vunpack.c.l.b16 %v2439
        %v2520 = vunpack.c.l.b16 %v2440
        %v2521 = vunpack.c.l.b16 %v2441
        %v2522 = vunpack.c.l.b16 %v2442
        %v2523 = vunpack.c.l.b16 %v2443
        %v2524 = vunpack.c.l.b16 %v2444
        %v2525 = vunpack.c.l.b16 %v2445
        %v2526 = vunpack.c.l.b16 %v2446
        %v2527 = vunpack.c.l.b16 %v2447
        %v2528 = vunpack.c.l.b16 %v2448
        %v2529 = vunpack.c.l.b16 %v2449
        %v2530 = vunpack.c.l.b16 %v2450
        %v2531 = vunpack.c.l.b16 %v2451
        %v2532 = vunpack.c.l.b16 %v2452
        %v2533 = vunpack.c.l.b16 %v2453
        %v2534 = vunpack.c.l.b16 %v2454
        %v2535 = vunpack.c.l.b16 %v2455
        %v2536 = vunpack.c.l.b16 %v2456
        %v2537 = vunpack.c.l.b16 %v2457
        %v2538 = vunpack.c.l.b16 %v2458
        %v2539 = vunpack.c.l.b16 %v2459
        %v2540 = vunpack.c.l.b16 %v2460
        %v2541 = vunpack.c.l.b16 %v2461
        %v2542 = vunpack.c.l.b16 %v2462
        %v2543 = vunpack.c.l.b16 %v2463
        %v2544 = vunpack.c.l.b16 %v2464
        %v2545 = vunpack.c.l.b16 %v2465
        %v2546 = vpack.c.b16 %v2515, %v2514
        %v2547 = vpack.c.b16 %v2517, %v2516
        %v2548 = vpack.c.b16 %v2519, %v2518
        %v2549 = vpack.c.b16 %v2521, %v2520
        %v2550 = vpack.c.b16 %v2523, %v2522
        %v2551 = vpack.c.b16 %v2525, %v2524
        %v2552 = vpack.c.b16 %v2527, %v2526
        %v2553 = vpack.c.b16 %v2529, %v2528
        %v2554 = vpack.c.b16 %v2531, %v2530
        %v2555 = vpack.c.b16 %v2533, %v2532
        %v2556 = vpack.c.b16 %v2535, %v2534
        %v2557 = vpack.c.b16 %v2537, %v2536
        %v2558 = vpack.c.b16 %v2539, %v2538
        %v2559 = vpack.c.b16 %v2541, %v2540
        %v2560 = vpack.c.b16 %v2543, %v2542
        %v2561 = vpack.c.b16 %v2545, %v2544
        %2578 = vmatprep.subr.bf16.mxu0 0
        %2579 = vmatpush1.bf16.msra.mxu0 %v2553
        %2580 = vmatprep.subr.bf16.mxu0 0
        %2581 = vmatpush1.bf16.msra.mxu0 %v2552
        %2582 = vmatprep.subr.bf16.mxu0 0
        %2583 = vmatpush1.bf16.msra.mxu0 %v2551
        %2584 = vmatprep.subr.bf16.mxu0 0
        %2585 = vmatpush1.bf16.msra.mxu0 %v2550
        %2586 = vmatprep.subr.bf16.mxu0 0
        %2587 = vmatpush1.bf16.msra.mxu0 %v2549
        %2588 = vmatprep.subr.bf16.mxu0 0
        %2589 = vmatpush1.bf16.msra.mxu0 %v2548
        %2590 = vmatprep.subr.bf16.mxu0 0
        %2591 = vmatpush1.bf16.msra.mxu0 %v2547
        %2592 = vmatprep.subr.bf16.mxu0 0
        %2593 = vmatpush1.bf16.msra.mxu0 %v2546
        %2594 = vmatprep.subr.bf16.mxu0 0
        %2595 = vmatpush2.bf16.msra.mxu0 %v2561
        %2596 = vmatprep.subr.bf16.mxu0 0
        %2597 = vmatpush2.bf16.msra.mxu0 %v2560
        %2598 = vmatprep.subr.bf16.mxu0 0
        %2599 = vmatpush2.bf16.msra.mxu0 %v2559
        %2600 = vmatprep.subr.bf16.mxu0 0
        %2601 = vmatpush2.bf16.msra.mxu0 %v2558
        %2602 = vmatprep.subr.bf16.mxu0 0
        %2603 = vmatpush2.bf16.msra.mxu0 %v2557
        %2604 = vmatprep.subr.bf16.mxu0 0
        %2605 = vmatpush2.bf16.msra.mxu0 %v2556
        %2606 = vmatprep.subr.bf16.mxu0 0
        %2607 = vmatpush2.bf16.msra.mxu0 %v2555
        %2608 = vmatprep.subr.bf16.mxu0 0
        %2609 = vmatpush2.bf16.msra.mxu0 %v2554
        %2610 = vmatprep.mubr.bf16.mxu0 %v2467
        %2611 = vmatmul.mubr.bf16.gmra.mxu0 %v2466
        %v2612 = vpop.f32.mrf.mxu0
        %v2613 = vadd.f32 %v2480, %v2612
        %v2614 = vpop.f32.mrf.mxu0
        %v2615 = vpop.f32.mrf.mxu0
        %v2616 = vadd.f32 %v2480, %v2615
        %v2617 = vpop.f32.mrf.mxu0
        %2618 = vmatprep.mubr.bf16.mxu0 %v2469
        %2619 = vmatmul.mubr.bf16.gmra.mxu0 %v2468
        %v2620 = vpop.f32.mrf.mxu0
        %v2621 = vadd.f32 %v2480, %v2620
        %v2622 = vpop.f32.mrf.mxu0
        %v2623 = vpop.f32.mrf.mxu0
        %v2624 = vadd.f32 %v2480, %v2623
        %v2625 = vpop.f32.mrf.mxu0
        %2626 = vmatprep.mubr.bf16.mxu0 %v2471
        %2627 = vmatmul.mubr.bf16.gmra.mxu0 %v2470
        %v2628 = vpop.f32.mrf.mxu0
        %v2629 = vadd.f32 %v2480, %v2628
        %v2630 = vpop.f32.mrf.mxu0
        %v2631 = vpop.f32.mrf.mxu0
        %v2632 = vadd.f32 %v2480, %v2631
        %v2633 = vpop.f32.mrf.mxu0
        %2634 = vmatprep.mubr.bf16.mxu0 %v2473
        %2635 = vmatmul.mubr.bf16.gmra.mxu0 %v2472
        %v2636 = vpop.f32.mrf.mxu0
        %v2637 = vadd.f32 %v2480, %v2636
        %v2638 = vpop.f32.mrf.mxu0
        %v2639 = vpop.f32.mrf.mxu0
        %v2640 = vadd.f32 %v2480, %v2639
        %v2641 = vpop.f32.mrf.mxu0
        %2642 = vdwg.mxu0
        %v2643 = vmax.f32 %v2613, -20.0
        %v2644 = vmax.f32 %v2616, -20.0
        %v2645 = vmax.f32 %v2621, -20.0
        %v2646 = vmax.f32 %v2624, -20.0
        %v2647 = vmax.f32 %v2629, -20.0
        %v2648 = vmax.f32 %v2632, -20.0
        %v2649 = vmax.f32 %v2637, -20.0
        %v2650 = vmax.f32 %v2640, -20.0
        %v2651 = vmin.f32 %v2643, 20.0
        %v2652 = vmin.f32 %v2644, 20.0
        %v2653 = vmin.f32 %v2645, 20.0
        %v2654 = vmin.f32 %v2646, 20.0
        %v2655 = vmin.f32 %v2647, 20.0
        %v2656 = vmin.f32 %v2648, 20.0
        %v2657 = vmin.f32 %v2649, 20.0
        %v2658 = vmin.f32 %v2650, 20.0
        %v2659 = vmul.f32 %v2651, 1.442695
        %v2660 = vpow.pop %v2659
        %v2661 = vmul.f32 %v2652, 1.442695
        %v2662 = vpow.pop %v2661
        %v2663 = vmul.f32 %v2653, 1.442695
        %v2664 = vpow.pop %v2663
        %v2665 = vmul.f32 %v2654, 1.442695
        %v2666 = vpow.pop %v2665
        %v2667 = vmul.f32 %v2655, 1.442695
        %v2668 = vpow.pop %v2667
        %v2669 = vmul.f32 %v2656, 1.442695
        %v2670 = vpow.pop %v2669
        %v2671 = vmul.f32 %v2657, 1.442695
        %v2672 = vpow.pop %v2671
        %v2673 = vmul.f32 %v2658, 1.442695
        %v2674 = vpow.pop %v2673
        %v2675 = vsub.f32 %v2660, 1.0
        %v2676 = vsub.f32 %v2662, 1.0
        %v2677 = vsub.f32 %v2664, 1.0
        %v2678 = vsub.f32 %v2666, 1.0
        %v2679 = vsub.f32 %v2668, 1.0
        %v2680 = vsub.f32 %v2670, 1.0
        %v2681 = vsub.f32 %v2672, 1.0
        %v2682 = vsub.f32 %v2674, 1.0
        %v2683 = vmul.f32 %v2660, %v2675
        %v2684 = vmul.f32 %v2662, %v2676
        %v2685 = vmul.f32 %v2664, %v2677
        %v2686 = vmul.f32 %v2666, %v2678
        %v2687 = vmul.f32 %v2668, %v2679
        %v2688 = vmul.f32 %v2670, %v2680
        %v2689 = vmul.f32 %v2672, %v2681
        %v2690 = vmul.f32 %v2674, %v2682
        %v2691 = vmul.f32 %v2660, %v2660
        %v2692 = vmul.f32 %v2662, %v2662
        %v2693 = vmul.f32 %v2664, %v2664
        %v2694 = vmul.f32 %v2666, %v2666
        %v2695 = vmul.f32 %v2668, %v2668
        %v2696 = vmul.f32 %v2670, %v2670
        %v2697 = vmul.f32 %v2672, %v2672
        %v2698 = vmul.f32 %v2674, %v2674
        %v2699 = vadd.f32 %v2691, 1.0
        %v2700 = vadd.f32 %v2692, 1.0
        %v2701 = vadd.f32 %v2693, 1.0
        %v2702 = vadd.f32 %v2694, 1.0
        %v2703 = vadd.f32 %v2695, 1.0
        %v2704 = vadd.f32 %v2696, 1.0
        %v2705 = vadd.f32 %v2697, 1.0
        %v2706 = vadd.f32 %v2698, 1.0
        %v2707 = vrcp.pop %v2699
        %v2708 = vrcp.pop %v2700
        %v2709 = vrcp.pop %v2701
        %v2710 = vrcp.pop %v2702
        %v2711 = vrcp.pop %v2703
        %v2712 = vrcp.pop %v2704
        %v2713 = vrcp.pop %v2705
        %v2714 = vrcp.pop %v2706
        %v2715 = vmul.f32 %v2683, %v2707
        %v2716 = vmul.f32 %v2684, %v2708
        %v2717 = vmul.f32 %v2685, %v2709
        %v2718 = vmul.f32 %v2686, %v2710
        %v2719 = vmul.f32 %v2687, %v2711
        %v2720 = vmul.f32 %v2688, %v2712
        %v2721 = vmul.f32 %v2689, %v2713
        %v2722 = vmul.f32 %v2690, %v2714
        %s2723 = scalar_lea.vmem [#allocation10], 128
        %v2724 = vld [vmem:[%s2723] sm:$0xf]
        %v2725 = vld [vmem:[%s2723 + $0x4] sm:$0xf]
        %v2726 = vld [vmem:[%s2723 + $0x8] sm:$0xf]
        %v2727 = vld [vmem:[%s2723 + $0xc] sm:$0xf]
        %v2728 = vld [vmem:[%s2723 + $0x10] sm:$0xf]
        %v2729 = vld [vmem:[%s2723 + $0x14] sm:$0xf]
        %v2730 = vld [vmem:[%s2723 + $0x18] sm:$0xf]
        %v2731 = vld [vmem:[%s2723 + $0x1c] sm:$0xf]
        %v2732 = vld [vmem:[%s2723 + $0x20] sm:$0xf]
        %v2733 = vld [vmem:[%s2723 + $0x24] sm:$0xf]
        %v2734 = vld [vmem:[%s2723 + $0x28] sm:$0xf]
        %v2735 = vld [vmem:[%s2723 + $0x2c] sm:$0xf]
        %v2736 = vld [vmem:[%s2723 + $0x30] sm:$0xf]
        %v2737 = vld [vmem:[%s2723 + $0x34] sm:$0xf]
        %v2738 = vld [vmem:[%s2723 + $0x38] sm:$0xf]
        %v2739 = vld [vmem:[%s2723 + $0x3c] sm:$0xf]
        %v2740 = vpack.c.bf16 %v2716, %v2715
        %v2741 = vpack.c.bf16 %v2718, %v2717
        %v2742 = vpack.c.bf16 %v2720, %v2719
        %v2743 = vpack.c.bf16 %v2722, %v2721
        %v2760 = vunpack.c.l.b16 %v2724
        %v2761 = vunpack.c.l.b16 %v2725
        %v2762 = vunpack.c.l.b16 %v2726
        %v2763 = vunpack.c.l.b16 %v2727
        %v2764 = vunpack.c.l.b16 %v2728
        %v2765 = vunpack.c.l.b16 %v2729
        %v2766 = vunpack.c.l.b16 %v2730
        %v2767 = vunpack.c.l.b16 %v2731
        %v2768 = vunpack.c.l.b16 %v2732
        %v2769 = vunpack.c.l.b16 %v2733
        %v2770 = vunpack.c.l.b16 %v2734
        %v2771 = vunpack.c.l.b16 %v2735
        %v2772 = vunpack.c.l.b16 %v2736
        %v2773 = vunpack.c.l.b16 %v2737
        %v2774 = vunpack.c.l.b16 %v2738
        %v2775 = vunpack.c.l.b16 %v2739
        %v2776 = vpack.c.b16 %v2761, %v2760
        %v2777 = vpack.c.b16 %v2763, %v2762
        %v2778 = vpack.c.b16 %v2765, %v2764
        %v2779 = vpack.c.b16 %v2767, %v2766
        %v2780 = vpack.c.b16 %v2769, %v2768
        %v2781 = vpack.c.b16 %v2771, %v2770
        %v2782 = vpack.c.b16 %v2773, %v2772
        %v2783 = vpack.c.b16 %v2775, %v2774
        %2792 = vmatprep.subr.bf16.mxu0 0
        %2793 = vmatpush1.bf16.msra.mxu0 %v2783
        %2794 = vmatprep.subr.bf16.mxu0 0
        %2795 = vmatpush1.bf16.msra.mxu0 %v2782
        %2796 = vmatprep.subr.bf16.mxu0 0
        %2797 = vmatpush1.bf16.msra.mxu0 %v2781
        %2798 = vmatprep.subr.bf16.mxu0 0
        %2799 = vmatpush1.bf16.msra.mxu0 %v2780
        %2800 = vmatprep.subr.bf16.mxu0 0
        %2801 = vmatpush1.bf16.msra.mxu0 %v2779
        %2802 = vmatprep.subr.bf16.mxu0 0
        %2803 = vmatpush1.bf16.msra.mxu0 %v2778
        %2804 = vmatprep.subr.bf16.mxu0 0
        %2805 = vmatpush1.bf16.msra.mxu0 %v2777
        %2806 = vmatprep.subr.bf16.mxu0 0
        %2807 = vmatpush1.bf16.msra.mxu0 %v2776
        %2808 = vmatprep.subr.bf16.mxu0 0
        %2809 = vmatpush2.bf16.msra.mxu0 0
        %2810 = vmatprep.subr.bf16.mxu0 0
        %2811 = vmatpush2.bf16.msra.mxu0 0
        %2812 = vmatprep.subr.bf16.mxu0 0
        %2813 = vmatpush2.bf16.msra.mxu0 0
        %2814 = vmatprep.subr.bf16.mxu0 0
        %2815 = vmatpush2.bf16.msra.mxu0 0
        %2816 = vmatprep.subr.bf16.mxu0 0
        %2817 = vmatpush2.bf16.msra.mxu0 0
        %2818 = vmatprep.subr.bf16.mxu0 0
        %2819 = vmatpush2.bf16.msra.mxu0 0
        %2820 = vmatprep.subr.bf16.mxu0 0
        %2821 = vmatpush2.bf16.msra.mxu0 0
        %2822 = vmatprep.subr.bf16.mxu0 0
        %2823 = vmatpush2.bf16.msra.mxu0 0
        %2824 = vmatprep.mubr.bf16.mxu0 0
        %2825 = vmatmul.mubr.bf16.gmra.mxu0 %v2740
        %v2826 = vpop.f32.mrf.mxu0
        %v2827 = vadd.f32 0.0, %v2826
        %v2828 = vpop.f32.mrf.mxu0
        %v2829 = vpop.f32.mrf.mxu0
        %v2830 = vadd.f32 0.0, %v2829
        %v2831 = vpop.f32.mrf.mxu0
        %2832 = vmatprep.mubr.bf16.mxu0 0
        %2833 = vmatmul.mubr.bf16.gmra.mxu0 %v2741
        %v2834 = vpop.f32.mrf.mxu0
        %v2835 = vadd.f32 0.0, %v2834
        %v2836 = vpop.f32.mrf.mxu0
        %v2837 = vpop.f32.mrf.mxu0
        %v2838 = vadd.f32 0.0, %v2837
        %v2839 = vpop.f32.mrf.mxu0
        %2840 = vmatprep.mubr.bf16.mxu0 0
        %2841 = vmatmul.mubr.bf16.gmra.mxu0 %v2742
        %v2842 = vpop.f32.mrf.mxu0
        %v2843 = vadd.f32 0.0, %v2842
        %v2844 = vpop.f32.mrf.mxu0
        %v2845 = vpop.f32.mrf.mxu0
        %v2846 = vadd.f32 0.0, %v2845
        %v2847 = vpop.f32.mrf.mxu0
        %2848 = vmatprep.mubr.bf16.mxu0 0
        %2849 = vmatmul.mubr.bf16.gmra.mxu0 %v2743
        %v2850 = vpop.f32.mrf.mxu0
        %v2851 = vadd.f32 0.0, %v2850
        %v2852 = vpop.f32.mrf.mxu0
        %v2853 = vpop.f32.mrf.mxu0
        %v2854 = vadd.f32 0.0, %v2853
        %v2855 = vpop.f32.mrf.mxu0
        %2856 = vdwg.mxu0
        %v2857 = vadd.f32 %v2384, %v2827
        %v2858 = vadd.f32 %v2385, %v2830
        %v2859 = vadd.f32 %v2386, %v2835
        %v2860 = vadd.f32 %v2387, %v2838
        %v2861 = vadd.f32 %v2388, %v2843
        %v2862 = vadd.f32 %v2389, %v2846
        %v2863 = vadd.f32 %v2390, %v2851
        %v2864 = vadd.f32 %v2391, %v2854
        %v2865 = vadd.f32 %v2392, %v2827
        %v2866 = vadd.f32 %v2393, %v2830
        %v2867 = vadd.f32 %v2394, %v2835
        %v2868 = vadd.f32 %v2395, %v2838
        %v2869 = vadd.f32 %v2396, %v2843
        %v2870 = vadd.f32 %v2397, %v2846
        %v2871 = vadd.f32 %v2398, %v2851
        %v2872 = vadd.f32 %v2399, %v2854
        %v2873 = vrot.slane %v2857, 7
        %v2874 = vrot.slane %v2858, 7
        %v2875 = vrot.slane %v2859, 7
        %v2876 = vrot.slane %v2860, 7
        %v2877 = vrot.slane %v2861, 7
        %v2878 = vrot.slane %v2862, 7
        %v2879 = vrot.slane %v2863, 7
        %v2880 = vrot.slane %v2864, 7
        %v2881 = vsel %vm1465, %v2879, %v2880
        %v2882 = vsel %vm1465, %v2878, %v2879
        %v2883 = vsel %vm1465, %v2877, %v2878
        %v2884 = vsel %vm1465, %v2876, %v2877
        %v2885 = vsel %vm1465, %v2875, %v2876
        %v2886 = vsel %vm1465, %v2874, %v2875
        %v2887 = vsel %vm1465, %v2873, %v2874
        %v2888 = vsel %vm1465, %v2880, %v2873
        %v2889 = vsel %vm1474, %v2888, 0.0
        %v2890 = vsel %vm1475, %v2887, 0.0
        %v2891 = vsel %vm1476, %v2886, 0.0
        %v2892 = vsel %vm1477, %v2885, 0.0
        %v2893 = vsel %vm1478, %v2884, 0.0
        %v2894 = vsel %vm1479, %v2883, 0.0
        %v2895 = vsel %vm1480, %v2882, 0.0
        %v2896 = vsel %vm1481, %v2881, 0.0
        %s2897 = scalar_lea.vmem [#allocation7], 384
        %v2898 = vld [vmem:[%s2897] sm:$0xf]
        %v2899 = vld [vmem:[%s2897 + $0x4] sm:$0xf]
        %v2900 = vld [vmem:[%s2897 + $0x8] sm:$0xf]
        %v2901 = vld [vmem:[%s2897 + $0xc] sm:$0xf]
        %v2902 = vld [vmem:[%s2897 + $0x10] sm:$0xf]
        %v2903 = vld [vmem:[%s2897 + $0x14] sm:$0xf]
        %v2904 = vld [vmem:[%s2897 + $0x18] sm:$0xf]
        %v2905 = vld [vmem:[%s2897 + $0x1c] sm:$0xf]
        %v2906 = vld [vmem:[%s2897 + $0x20] sm:$0xf]
        %v2907 = vld [vmem:[%s2897 + $0x24] sm:$0xf]
        %v2908 = vld [vmem:[%s2897 + $0x28] sm:$0xf]
        %v2909 = vld [vmem:[%s2897 + $0x2c] sm:$0xf]
        %v2910 = vld [vmem:[%s2897 + $0x30] sm:$0xf]
        %v2911 = vld [vmem:[%s2897 + $0x34] sm:$0xf]
        %v2912 = vld [vmem:[%s2897 + $0x38] sm:$0xf]
        %v2913 = vld [vmem:[%s2897 + $0x3c] sm:$0xf]
        %v2914 = vld [vmem:[%s2897 + $0x40] sm:$0xf]
        %v2915 = vld [vmem:[%s2897 + $0x44] sm:$0xf]
        %v2916 = vld [vmem:[%s2897 + $0x48] sm:$0xf]
        %v2917 = vld [vmem:[%s2897 + $0x4c] sm:$0xf]
        %v2918 = vld [vmem:[%s2897 + $0x50] sm:$0xf]
        %v2919 = vld [vmem:[%s2897 + $0x54] sm:$0xf]
        %v2920 = vld [vmem:[%s2897 + $0x58] sm:$0xf]
        %v2921 = vld [vmem:[%s2897 + $0x5c] sm:$0xf]
        %v2922 = vld [vmem:[%s2897 + $0x60] sm:$0xf]
        %v2923 = vld [vmem:[%s2897 + $0x64] sm:$0xf]
        %v2924 = vld [vmem:[%s2897 + $0x68] sm:$0xf]
        %v2925 = vld [vmem:[%s2897 + $0x6c] sm:$0xf]
        %v2926 = vld [vmem:[%s2897 + $0x70] sm:$0xf]
        %v2927 = vld [vmem:[%s2897 + $0x74] sm:$0xf]
        %v2928 = vld [vmem:[%s2897 + $0x78] sm:$0xf]
        %v2929 = vld [vmem:[%s2897 + $0x7c] sm:$0xf]
        %v2930 = vpack.c.bf16 %v2890, %v2889
        %v2931 = vpack.c.bf16 %v2858, %v2857
        %v2932 = vpack.c.bf16 %v2892, %v2891
        %v2933 = vpack.c.bf16 %v2860, %v2859
        %v2934 = vpack.c.bf16 %v2894, %v2893
        %v2935 = vpack.c.bf16 %v2862, %v2861
        %v2936 = vpack.c.bf16 %v2896, %v2895
        %v2937 = vpack.c.bf16 %v2864, %v2863
        %s2938 = scalar_lea.vmem [#allocation8], 3
        %v2939 = vld [vmem:[%s2938] sm:$0x1]
        %v2941 = vlaneseq
        %v2942 = vshrl.u32 %v2941, 7
        %v2943 = vsub.s32 0, %v2942
        %v2944 = vrot.slane %v2939, %v2943
        %v2978 = vunpack.c.l.b16 %v2898
        %v2979 = vunpack.c.l.b16 %v2899
        %v2980 = vunpack.c.l.b16 %v2900
        %v2981 = vunpack.c.l.b16 %v2901
        %v2982 = vunpack.c.l.b16 %v2902
        %v2983 = vunpack.c.l.b16 %v2903
        %v2984 = vunpack.c.l.b16 %v2904
        %v2985 = vunpack.c.l.b16 %v2905
        %v2986 = vunpack.c.l.b16 %v2906
        %v2987 = vunpack.c.l.b16 %v2907
        %v2988 = vunpack.c.l.b16 %v2908
        %v2989 = vunpack.c.l.b16 %v2909
        %v2990 = vunpack.c.l.b16 %v2910
        %v2991 = vunpack.c.l.b16 %v2911
        %v2992 = vunpack.c.l.b16 %v2912
        %v2993 = vunpack.c.l.b16 %v2913
        %v2994 = vunpack.c.l.b16 %v2914
        %v2995 = vunpack.c.l.b16 %v2915
        %v2996 = vunpack.c.l.b16 %v2916
        %v2997 = vunpack.c.l.b16 %v2917
        %v2998 = vunpack.c.l.b16 %v2918
        %v2999 = vunpack.c.l.b16 %v2919
        %v3000 = vunpack.c.l.b16 %v2920
        %v3001 = vunpack.c.l.b16 %v2921
        %v3002 = vunpack.c.l.b16 %v2922
        %v3003 = vunpack.c.l.b16 %v2923
        %v3004 = vunpack.c.l.b16 %v2924
        %v3005 = vunpack.c.l.b16 %v2925
        %v3006 = vunpack.c.l.b16 %v2926
        %v3007 = vunpack.c.l.b16 %v2927
        %v3008 = vunpack.c.l.b16 %v2928
        %v3009 = vunpack.c.l.b16 %v2929
        %v3010 = vpack.c.b16 %v2979, %v2978
        %v3011 = vpack.c.b16 %v2981, %v2980
        %v3012 = vpack.c.b16 %v2983, %v2982
        %v3013 = vpack.c.b16 %v2985, %v2984
        %v3014 = vpack.c.b16 %v2987, %v2986
        %v3015 = vpack.c.b16 %v2989, %v2988
        %v3016 = vpack.c.b16 %v2991, %v2990
        %v3017 = vpack.c.b16 %v2993, %v2992
        %v3018 = vpack.c.b16 %v2995, %v2994
        %v3019 = vpack.c.b16 %v2997, %v2996
        %v3020 = vpack.c.b16 %v2999, %v2998
        %v3021 = vpack.c.b16 %v3001, %v3000
        %v3022 = vpack.c.b16 %v3003, %v3002
        %v3023 = vpack.c.b16 %v3005, %v3004
        %v3024 = vpack.c.b16 %v3007, %v3006
        %v3025 = vpack.c.b16 %v3009, %v3008
        %3042 = vmatprep.subr.bf16.mxu0 0
        %3043 = vmatpush1.bf16.msra.mxu0 %v3017
        %3044 = vmatprep.subr.bf16.mxu0 0
        %3045 = vmatpush1.bf16.msra.mxu0 %v3016
        %3046 = vmatprep.subr.bf16.mxu0 0
        %3047 = vmatpush1.bf16.msra.mxu0 %v3015
        %3048 = vmatprep.subr.bf16.mxu0 0
        %3049 = vmatpush1.bf16.msra.mxu0 %v3014
        %3050 = vmatprep.subr.bf16.mxu0 0
        %3051 = vmatpush1.bf16.msra.mxu0 %v3013
        %3052 = vmatprep.subr.bf16.mxu0 0
        %3053 = vmatpush1.bf16.msra.mxu0 %v3012
        %3054 = vmatprep.subr.bf16.mxu0 0
        %3055 = vmatpush1.bf16.msra.mxu0 %v3011
        %3056 = vmatprep.subr.bf16.mxu0 0
        %3057 = vmatpush1.bf16.msra.mxu0 %v3010
        %3058 = vmatprep.subr.bf16.mxu0 0
        %3059 = vmatpush2.bf16.msra.mxu0 %v3025
        %3060 = vmatprep.subr.bf16.mxu0 0
        %3061 = vmatpush2.bf16.msra.mxu0 %v3024
        %3062 = vmatprep.subr.bf16.mxu0 0
        %3063 = vmatpush2.bf16.msra.mxu0 %v3023
        %3064 = vmatprep.subr.bf16.mxu0 0
        %3065 = vmatpush2.bf16.msra.mxu0 %v3022
        %3066 = vmatprep.subr.bf16.mxu0 0
        %3067 = vmatpush2.bf16.msra.mxu0 %v3021
        %3068 = vmatprep.subr.bf16.mxu0 0
        %3069 = vmatpush2.bf16.msra.mxu0 %v3020
        %3070 = vmatprep.subr.bf16.mxu0 0
        %3071 = vmatpush2.bf16.msra.mxu0 %v3019
        %3072 = vmatprep.subr.bf16.mxu0 0
        %3073 = vmatpush2.bf16.msra.mxu0 %v3018
        %3074 = vmatprep.mubr.bf16.mxu0 %v2931
        %3075 = vmatmul.mubr.bf16.gmra.mxu0 %v2930
        %v3076 = vpop.f32.mrf.mxu0
        %v3077 = vadd.f32 %v2944, %v3076
        %v3078 = vpop.f32.mrf.mxu0
        %v3079 = vpop.f32.mrf.mxu0
        %v3080 = vadd.f32 %v2944, %v3079
        %v3081 = vpop.f32.mrf.mxu0
        %3082 = vmatprep.mubr.bf16.mxu0 %v2933
        %3083 = vmatmul.mubr.bf16.gmra.mxu0 %v2932
        %v3084 = vpop.f32.mrf.mxu0
        %v3085 = vadd.f32 %v2944, %v3084
        %v3086 = vpop.f32.mrf.mxu0
        %v3087 = vpop.f32.mrf.mxu0
        %v3088 = vadd.f32 %v2944, %v3087
        %v3089 = vpop.f32.mrf.mxu0
        %3090 = vmatprep.mubr.bf16.mxu0 %v2935
        %3091 = vmatmul.mubr.bf16.gmra.mxu0 %v2934
        %v3092 = vpop.f32.mrf.mxu0
        %v3093 = vadd.f32 %v2944, %v3092
        %v3094 = vpop.f32.mrf.mxu0
        %v3095 = vpop.f32.mrf.mxu0
        %v3096 = vadd.f32 %v2944, %v3095
        %v3097 = vpop.f32.mrf.mxu0
        %3098 = vmatprep.mubr.bf16.mxu0 %v2937
        %3099 = vmatmul.mubr.bf16.gmra.mxu0 %v2936
        %v3100 = vpop.f32.mrf.mxu0
        %v3101 = vadd.f32 %v2944, %v3100
        %v3102 = vpop.f32.mrf.mxu0
        %v3103 = vpop.f32.mrf.mxu0
        %v3104 = vadd.f32 %v2944, %v3103
        %v3105 = vpop.f32.mrf.mxu0
        %3106 = vdwg.mxu0
        %v3107 = vmax.f32 %v3077, -20.0
        %v3108 = vmax.f32 %v3080, -20.0
        %v3109 = vmax.f32 %v3085, -20.0
        %v3110 = vmax.f32 %v3088, -20.0
        %v3111 = vmax.f32 %v3093, -20.0
        %v3112 = vmax.f32 %v3096, -20.0
        %v3113 = vmax.f32 %v3101, -20.0
        %v3114 = vmax.f32 %v3104, -20.0
        %v3115 = vmin.f32 %v3107, 20.0
        %v3116 = vmin.f32 %v3108, 20.0
        %v3117 = vmin.f32 %v3109, 20.0
        %v3118 = vmin.f32 %v3110, 20.0
        %v3119 = vmin.f32 %v3111, 20.0
        %v3120 = vmin.f32 %v3112, 20.0
        %v3121 = vmin.f32 %v3113, 20.0
        %v3122 = vmin.f32 %v3114, 20.0
        %v3123 = vmul.f32 %v3115, 1.442695
        %v3124 = vpow.pop %v3123
        %v3125 = vmul.f32 %v3116, 1.442695
        %v3126 = vpow.pop %v3125
        %v3127 = vmul.f32 %v3117, 1.442695
        %v3128 = vpow.pop %v3127
        %v3129 = vmul.f32 %v3118, 1.442695
        %v3130 = vpow.pop %v3129
        %v3131 = vmul.f32 %v3119, 1.442695
        %v3132 = vpow.pop %v3131
        %v3133 = vmul.f32 %v3120, 1.442695
        %v3134 = vpow.pop %v3133
        %v3135 = vmul.f32 %v3121, 1.442695
        %v3136 = vpow.pop %v3135
        %v3137 = vmul.f32 %v3122, 1.442695
        %v3138 = vpow.pop %v3137
        %v3139 = vsub.f32 %v3124, 1.0
        %v3140 = vsub.f32 %v3126, 1.0
        %v3141 = vsub.f32 %v3128, 1.0
        %v3142 = vsub.f32 %v3130, 1.0
        %v3143 = vsub.f32 %v3132, 1.0
        %v3144 = vsub.f32 %v3134, 1.0
        %v3145 = vsub.f32 %v3136, 1.0
        %v3146 = vsub.f32 %v3138, 1.0
        %v3147 = vmul.f32 %v3124, %v3139
        %v3148 = vmul.f32 %v3126, %v3140
        %v3149 = vmul.f32 %v3128, %v3141
        %v3150 = vmul.f32 %v3130, %v3142
        %v3151 = vmul.f32 %v3132, %v3143
        %v3152 = vmul.f32 %v3134, %v3144
        %v3153 = vmul.f32 %v3136, %v3145
        %v3154 = vmul.f32 %v3138, %v3146
        %v3155 = vmul.f32 %v3124, %v3124
        %v3156 = vmul.f32 %v3126, %v3126
        %v3157 = vmul.f32 %v3128, %v3128
        %v3158 = vmul.f32 %v3130, %v3130
        %v3159 = vmul.f32 %v3132, %v3132
        %v3160 = vmul.f32 %v3134, %v3134
        %v3161 = vmul.f32 %v3136, %v3136
        %v3162 = vmul.f32 %v3138, %v3138
        %v3163 = vadd.f32 %v3155, 1.0
        %v3164 = vadd.f32 %v3156, 1.0
        %v3165 = vadd.f32 %v3157, 1.0
        %v3166 = vadd.f32 %v3158, 1.0
        %v3167 = vadd.f32 %v3159, 1.0
        %v3168 = vadd.f32 %v3160, 1.0
        %v3169 = vadd.f32 %v3161, 1.0
        %v3170 = vadd.f32 %v3162, 1.0
        %v3171 = vrcp.pop %v3163
        %v3172 = vrcp.pop %v3164
        %v3173 = vrcp.pop %v3165
        %v3174 = vrcp.pop %v3166
        %v3175 = vrcp.pop %v3167
        %v3176 = vrcp.pop %v3168
        %v3177 = vrcp.pop %v3169
        %v3178 = vrcp.pop %v3170
        %v3179 = vmul.f32 %v3147, %v3171
        %v3180 = vmul.f32 %v3148, %v3172
        %v3181 = vmul.f32 %v3149, %v3173
        %v3182 = vmul.f32 %v3150, %v3174
        %v3183 = vmul.f32 %v3151, %v3175
        %v3184 = vmul.f32 %v3152, %v3176
        %v3185 = vmul.f32 %v3153, %v3177
        %v3186 = vmul.f32 %v3154, %v3178
        %s3187 = scalar_lea.vmem [#allocation10], 192
        %v3188 = vld [vmem:[%s3187] sm:$0xf]
        %v3189 = vld [vmem:[%s3187 + $0x4] sm:$0xf]
        %v3190 = vld [vmem:[%s3187 + $0x8] sm:$0xf]
        %v3191 = vld [vmem:[%s3187 + $0xc] sm:$0xf]
        %v3192 = vld [vmem:[%s3187 + $0x10] sm:$0xf]
        %v3193 = vld [vmem:[%s3187 + $0x14] sm:$0xf]
        %v3194 = vld [vmem:[%s3187 + $0x18] sm:$0xf]
        %v3195 = vld [vmem:[%s3187 + $0x1c] sm:$0xf]
        %v3196 = vld [vmem:[%s3187 + $0x20] sm:$0xf]
        %v3197 = vld [vmem:[%s3187 + $0x24] sm:$0xf]
        %v3198 = vld [vmem:[%s3187 + $0x28] sm:$0xf]
        %v3199 = vld [vmem:[%s3187 + $0x2c] sm:$0xf]
        %v3200 = vld [vmem:[%s3187 + $0x30] sm:$0xf]
        %v3201 = vld [vmem:[%s3187 + $0x34] sm:$0xf]
        %v3202 = vld [vmem:[%s3187 + $0x38] sm:$0xf]
        %v3203 = vld [vmem:[%s3187 + $0x3c] sm:$0xf]
        %v3204 = vpack.c.bf16 %v3180, %v3179
        %v3205 = vpack.c.bf16 %v3182, %v3181
        %v3206 = vpack.c.bf16 %v3184, %v3183
        %v3207 = vpack.c.bf16 %v3186, %v3185
        %v3224 = vunpack.c.l.b16 %v3188
        %v3225 = vunpack.c.l.b16 %v3189
        %v3226 = vunpack.c.l.b16 %v3190
        %v3227 = vunpack.c.l.b16 %v3191
        %v3228 = vunpack.c.l.b16 %v3192
        %v3229 = vunpack.c.l.b16 %v3193
        %v3230 = vunpack.c.l.b16 %v3194
        %v3231 = vunpack.c.l.b16 %v3195
        %v3232 = vunpack.c.l.b16 %v3196
        %v3233 = vunpack.c.l.b16 %v3197
        %v3234 = vunpack.c.l.b16 %v3198
        %v3235 = vunpack.c.l.b16 %v3199
        %v3236 = vunpack.c.l.b16 %v3200
        %v3237 = vunpack.c.l.b16 %v3201
        %v3238 = vunpack.c.l.b16 %v3202
        %v3239 = vunpack.c.l.b16 %v3203
        %v3240 = vpack.c.b16 %v3225, %v3224
        %v3241 = vpack.c.b16 %v3227, %v3226
        %v3242 = vpack.c.b16 %v3229, %v3228
        %v3243 = vpack.c.b16 %v3231, %v3230
        %v3244 = vpack.c.b16 %v3233, %v3232
        %v3245 = vpack.c.b16 %v3235, %v3234
        %v3246 = vpack.c.b16 %v3237, %v3236
        %v3247 = vpack.c.b16 %v3239, %v3238
        %3256 = vmatprep.subr.bf16.mxu0 0
        %3257 = vmatpush1.bf16.msra.mxu0 %v3247
        %3258 = vmatprep.subr.bf16.mxu0 0
        %3259 = vmatpush1.bf16.msra.mxu0 %v3246
        %3260 = vmatprep.subr.bf16.mxu0 0
        %3261 = vmatpush1.bf16.msra.mxu0 %v3245
        %3262 = vmatprep.subr.bf16.mxu0 0
        %3263 = vmatpush1.bf16.msra.mxu0 %v3244
        %3264 = vmatprep.subr.bf16.mxu0 0
        %3265 = vmatpush1.bf16.msra.mxu0 %v3243
        %3266 = vmatprep.subr.bf16.mxu0 0
        %3267 = vmatpush1.bf16.msra.mxu0 %v3242
        %3268 = vmatprep.subr.bf16.mxu0 0
        %3269 = vmatpush1.bf16.msra.mxu0 %v3241
        %3270 = vmatprep.subr.bf16.mxu0 0
        %3271 = vmatpush1.bf16.msra.mxu0 %v3240
        %3272 = vmatprep.subr.bf16.mxu0 0
        %3273 = vmatpush2.bf16.msra.mxu0 0
        %3274 = vmatprep.subr.bf16.mxu0 0
        %3275 = vmatpush2.bf16.msra.mxu0 0
        %3276 = vmatprep.subr.bf16.mxu0 0
        %3277 = vmatpush2.bf16.msra.mxu0 0
        %3278 = vmatprep.subr.bf16.mxu0 0
        %3279 = vmatpush2.bf16.msra.mxu0 0
        %3280 = vmatprep.subr.bf16.mxu0 0
        %3281 = vmatpush2.bf16.msra.mxu0 0
        %3282 = vmatprep.subr.bf16.mxu0 0
        %3283 = vmatpush2.bf16.msra.mxu0 0
        %3284 = vmatprep.subr.bf16.mxu0 0
        %3285 = vmatpush2.bf16.msra.mxu0 0
        %3286 = vmatprep.subr.bf16.mxu0 0
        %3287 = vmatpush2.bf16.msra.mxu0 0
        %3288 = vmatprep.mubr.bf16.mxu0 0
        %3289 = vmatmul.mubr.bf16.gmra.mxu0 %v3204
        %v3290 = vpop.f32.mrf.mxu0
        %v3291 = vadd.f32 0.0, %v3290
        %v3292 = vpop.f32.mrf.mxu0
        %v3293 = vpop.f32.mrf.mxu0
        %v3294 = vadd.f32 0.0, %v3293
        %v3295 = vpop.f32.mrf.mxu0
        %3296 = vmatprep.mubr.bf16.mxu0 0
        %3297 = vmatmul.mubr.bf16.gmra.mxu0 %v3205
        %v3298 = vpop.f32.mrf.mxu0
        %v3299 = vadd.f32 0.0, %v3298
        %v3300 = vpop.f32.mrf.mxu0
        %v3301 = vpop.f32.mrf.mxu0
        %v3302 = vadd.f32 0.0, %v3301
        %v3303 = vpop.f32.mrf.mxu0
        %3304 = vmatprep.mubr.bf16.mxu0 0
        %3305 = vmatmul.mubr.bf16.gmra.mxu0 %v3206
        %v3306 = vpop.f32.mrf.mxu0
        %v3307 = vadd.f32 0.0, %v3306
        %v3308 = vpop.f32.mrf.mxu0
        %v3309 = vpop.f32.mrf.mxu0
        %v3310 = vadd.f32 0.0, %v3309
        %v3311 = vpop.f32.mrf.mxu0
        %3312 = vmatprep.mubr.bf16.mxu0 0
        %3313 = vmatmul.mubr.bf16.gmra.mxu0 %v3207
        %v3314 = vpop.f32.mrf.mxu0
        %v3315 = vadd.f32 0.0, %v3314
        %v3316 = vpop.f32.mrf.mxu0
        %v3317 = vpop.f32.mrf.mxu0
        %v3318 = vadd.f32 0.0, %v3317
        %v3319 = vpop.f32.mrf.mxu0
        %3320 = vdwg.mxu0
        %v3321 = vadd.f32 %v2857, %v3291
        %v3322 = vadd.f32 %v2858, %v3294
        %v3323 = vadd.f32 %v2859, %v3299
        %v3324 = vadd.f32 %v2860, %v3302
        %v3325 = vadd.f32 %v2861, %v3307
        %v3326 = vadd.f32 %v2862, %v3310
        %v3327 = vadd.f32 %v2863, %v3315
        %v3328 = vadd.f32 %v2864, %v3318
        %v3329 = vadd.f32 %v2865, %v3291
        %v3330 = vadd.f32 %v2866, %v3294
        %v3331 = vadd.f32 %v2867, %v3299
        %v3332 = vadd.f32 %v2868, %v3302
        %v3333 = vadd.f32 %v2869, %v3307
        %v3334 = vadd.f32 %v2870, %v3310
        %v3335 = vadd.f32 %v2871, %v3315
        %v3336 = vadd.f32 %v2872, %v3318
        %v3337 = vrot.slane %v3321, 6
        %v3338 = vrot.slane %v3322, 6
        %v3339 = vrot.slane %v3323, 6
        %v3340 = vrot.slane %v3324, 6
        %v3341 = vrot.slane %v3325, 6
        %v3342 = vrot.slane %v3326, 6
        %v3343 = vrot.slane %v3327, 6
        %v3344 = vrot.slane %v3328, 6
        %v3345 = vsel %vm1935, %v3343, %v3344
        %v3346 = vsel %vm1935, %v3342, %v3343
        %v3347 = vsel %vm1935, %v3341, %v3342
        %v3348 = vsel %vm1935, %v3340, %v3341
        %v3349 = vsel %vm1935, %v3339, %v3340
        %v3350 = vsel %vm1935, %v3338, %v3339
        %v3351 = vsel %vm1935, %v3337, %v3338
        %v3352 = vsel %vm1935, %v3344, %v3337
        %v3353 = vsel %vm1944, %v3352, 0.0
        %v3354 = vsel %vm1945, %v3351, 0.0
        %v3355 = vsel %vm1946, %v3350, 0.0
        %v3356 = vsel %vm1947, %v3349, 0.0
        %v3357 = vsel %vm1948, %v3348, 0.0
        %v3358 = vsel %vm1949, %v3347, 0.0
        %v3359 = vsel %vm1950, %v3346, 0.0
        %v3360 = vsel %vm1951, %v3345, 0.0
        %s3361 = scalar_lea.vmem [#allocation7], 512
        %v3362 = vld [vmem:[%s3361] sm:$0xf]
        %v3363 = vld [vmem:[%s3361 + $0x4] sm:$0xf]
        %v3364 = vld [vmem:[%s3361 + $0x8] sm:$0xf]
        %v3365 = vld [vmem:[%s3361 + $0xc] sm:$0xf]
        %v3366 = vld [vmem:[%s3361 + $0x10] sm:$0xf]
        %v3367 = vld [vmem:[%s3361 + $0x14] sm:$0xf]
        %v3368 = vld [vmem:[%s3361 + $0x18] sm:$0xf]
        %v3369 = vld [vmem:[%s3361 + $0x1c] sm:$0xf]
        %v3370 = vld [vmem:[%s3361 + $0x20] sm:$0xf]
        %v3371 = vld [vmem:[%s3361 + $0x24] sm:$0xf]
        %v3372 = vld [vmem:[%s3361 + $0x28] sm:$0xf]
        %v3373 = vld [vmem:[%s3361 + $0x2c] sm:$0xf]
        %v3374 = vld [vmem:[%s3361 + $0x30] sm:$0xf]
        %v3375 = vld [vmem:[%s3361 + $0x34] sm:$0xf]
        %v3376 = vld [vmem:[%s3361 + $0x38] sm:$0xf]
        %v3377 = vld [vmem:[%s3361 + $0x3c] sm:$0xf]
        %v3378 = vld [vmem:[%s3361 + $0x40] sm:$0xf]
        %v3379 = vld [vmem:[%s3361 + $0x44] sm:$0xf]
        %v3380 = vld [vmem:[%s3361 + $0x48] sm:$0xf]
        %v3381 = vld [vmem:[%s3361 + $0x4c] sm:$0xf]
        %v3382 = vld [vmem:[%s3361 + $0x50] sm:$0xf]
        %v3383 = vld [vmem:[%s3361 + $0x54] sm:$0xf]
        %v3384 = vld [vmem:[%s3361 + $0x58] sm:$0xf]
        %v3385 = vld [vmem:[%s3361 + $0x5c] sm:$0xf]
        %v3386 = vld [vmem:[%s3361 + $0x60] sm:$0xf]
        %v3387 = vld [vmem:[%s3361 + $0x64] sm:$0xf]
        %v3388 = vld [vmem:[%s3361 + $0x68] sm:$0xf]
        %v3389 = vld [vmem:[%s3361 + $0x6c] sm:$0xf]
        %v3390 = vld [vmem:[%s3361 + $0x70] sm:$0xf]
        %v3391 = vld [vmem:[%s3361 + $0x74] sm:$0xf]
        %v3392 = vld [vmem:[%s3361 + $0x78] sm:$0xf]
        %v3393 = vld [vmem:[%s3361 + $0x7c] sm:$0xf]
        %v3394 = vpack.c.bf16 %v3354, %v3353
        %v3395 = vpack.c.bf16 %v3322, %v3321
        %v3396 = vpack.c.bf16 %v3356, %v3355
        %v3397 = vpack.c.bf16 %v3324, %v3323
        %v3398 = vpack.c.bf16 %v3358, %v3357
        %v3399 = vpack.c.bf16 %v3326, %v3325
        %v3400 = vpack.c.bf16 %v3360, %v3359
        %v3401 = vpack.c.bf16 %v3328, %v3327
        %s3402 = scalar_lea.vmem [#allocation8], 4
        %v3403 = vld [vmem:[%s3402] sm:$0x1]
        %v3405 = vlaneseq
        %v3406 = vshrl.u32 %v3405, 7
        %v3407 = vsub.s32 0, %v3406
        %v3408 = vrot.slane %v3403, %v3407
        %v3442 = vunpack.c.l.b16 %v3362
        %v3443 = vunpack.c.l.b16 %v3363
        %v3444 = vunpack.c.l.b16 %v3364
        %v3445 = vunpack.c.l.b16 %v3365
        %v3446 = vunpack.c.l.b16 %v3366
        %v3447 = vunpack.c.l.b16 %v3367
        %v3448 = vunpack.c.l.b16 %v3368
        %v3449 = vunpack.c.l.b16 %v3369
        %v3450 = vunpack.c.l.b16 %v3370
        %v3451 = vunpack.c.l.b16 %v3371
        %v3452 = vunpack.c.l.b16 %v3372
        %v3453 = vunpack.c.l.b16 %v3373
        %v3454 = vunpack.c.l.b16 %v3374
        %v3455 = vunpack.c.l.b16 %v3375
        %v3456 = vunpack.c.l.b16 %v3376
        %v3457 = vunpack.c.l.b16 %v3377
        %v3458 = vunpack.c.l.b16 %v3378
        %v3459 = vunpack.c.l.b16 %v3379
        %v3460 = vunpack.c.l.b16 %v3380
        %v3461 = vunpack.c.l.b16 %v3381
        %v3462 = vunpack.c.l.b16 %v3382
        %v3463 = vunpack.c.l.b16 %v3383
        %v3464 = vunpack.c.l.b16 %v3384
        %v3465 = vunpack.c.l.b16 %v3385
        %v3466 = vunpack.c.l.b16 %v3386
        %v3467 = vunpack.c.l.b16 %v3387
        %v3468 = vunpack.c.l.b16 %v3388
        %v3469 = vunpack.c.l.b16 %v3389
        %v3470 = vunpack.c.l.b16 %v3390
        %v3471 = vunpack.c.l.b16 %v3391
        %v3472 = vunpack.c.l.b16 %v3392
        %v3473 = vunpack.c.l.b16 %v3393
        %v3474 = vpack.c.b16 %v3443, %v3442
        %v3475 = vpack.c.b16 %v3445, %v3444
        %v3476 = vpack.c.b16 %v3447, %v3446
        %v3477 = vpack.c.b16 %v3449, %v3448
        %v3478 = vpack.c.b16 %v3451, %v3450
        %v3479 = vpack.c.b16 %v3453, %v3452
        %v3480 = vpack.c.b16 %v3455, %v3454
        %v3481 = vpack.c.b16 %v3457, %v3456
        %v3482 = vpack.c.b16 %v3459, %v3458
        %v3483 = vpack.c.b16 %v3461, %v3460
        %v3484 = vpack.c.b16 %v3463, %v3462
        %v3485 = vpack.c.b16 %v3465, %v3464
        %v3486 = vpack.c.b16 %v3467, %v3466
        %v3487 = vpack.c.b16 %v3469, %v3468
        %v3488 = vpack.c.b16 %v3471, %v3470
        %v3489 = vpack.c.b16 %v3473, %v3472
        %3506 = vmatprep.subr.bf16.mxu0 0
        %3507 = vmatpush1.bf16.msra.mxu0 %v3481
        %3508 = vmatprep.subr.bf16.mxu0 0
        %3509 = vmatpush1.bf16.msra.mxu0 %v3480
        %3510 = vmatprep.subr.bf16.mxu0 0
        %3511 = vmatpush1.bf16.msra.mxu0 %v3479
        %3512 = vmatprep.subr.bf16.mxu0 0
        %3513 = vmatpush1.bf16.msra.mxu0 %v3478
        %3514 = vmatprep.subr.bf16.mxu0 0
        %3515 = vmatpush1.bf16.msra.mxu0 %v3477
        %3516 = vmatprep.subr.bf16.mxu0 0
        %3517 = vmatpush1.bf16.msra.mxu0 %v3476
        %3518 = vmatprep.subr.bf16.mxu0 0
        %3519 = vmatpush1.bf16.msra.mxu0 %v3475
        %3520 = vmatprep.subr.bf16.mxu0 0
        %3521 = vmatpush1.bf16.msra.mxu0 %v3474
        %3522 = vmatprep.subr.bf16.mxu0 0
        %3523 = vmatpush2.bf16.msra.mxu0 %v3489
        %3524 = vmatprep.subr.bf16.mxu0 0
        %3525 = vmatpush2.bf16.msra.mxu0 %v3488
        %3526 = vmatprep.subr.bf16.mxu0 0
        %3527 = vmatpush2.bf16.msra.mxu0 %v3487
        %3528 = vmatprep.subr.bf16.mxu0 0
        %3529 = vmatpush2.bf16.msra.mxu0 %v3486
        %3530 = vmatprep.subr.bf16.mxu0 0
        %3531 = vmatpush2.bf16.msra.mxu0 %v3485
        %3532 = vmatprep.subr.bf16.mxu0 0
        %3533 = vmatpush2.bf16.msra.mxu0 %v3484
        %3534 = vmatprep.subr.bf16.mxu0 0
        %3535 = vmatpush2.bf16.msra.mxu0 %v3483
        %3536 = vmatprep.subr.bf16.mxu0 0
        %3537 = vmatpush2.bf16.msra.mxu0 %v3482
        %3538 = vmatprep.mubr.bf16.mxu0 %v3395
        %3539 = vmatmul.mubr.bf16.gmra.mxu0 %v3394
        %v3540 = vpop.f32.mrf.mxu0
        %v3541 = vadd.f32 %v3408, %v3540
        %v3542 = vpop.f32.mrf.mxu0
        %v3543 = vpop.f32.mrf.mxu0
        %v3544 = vadd.f32 %v3408, %v3543
        %v3545 = vpop.f32.mrf.mxu0
        %3546 = vmatprep.mubr.bf16.mxu0 %v3397
        %3547 = vmatmul.mubr.bf16.gmra.mxu0 %v3396
        %v3548 = vpop.f32.mrf.mxu0
        %v3549 = vadd.f32 %v3408, %v3548
        %v3550 = vpop.f32.mrf.mxu0
        %v3551 = vpop.f32.mrf.mxu0
        %v3552 = vadd.f32 %v3408, %v3551
        %v3553 = vpop.f32.mrf.mxu0
        %3554 = vmatprep.mubr.bf16.mxu0 %v3399
        %3555 = vmatmul.mubr.bf16.gmra.mxu0 %v3398
        %v3556 = vpop.f32.mrf.mxu0
        %v3557 = vadd.f32 %v3408, %v3556
        %v3558 = vpop.f32.mrf.mxu0
        %v3559 = vpop.f32.mrf.mxu0
        %v3560 = vadd.f32 %v3408, %v3559
        %v3561 = vpop.f32.mrf.mxu0
        %3562 = vmatprep.mubr.bf16.mxu0 %v3401
        %3563 = vmatmul.mubr.bf16.gmra.mxu0 %v3400
        %v3564 = vpop.f32.mrf.mxu0
        %v3565 = vadd.f32 %v3408, %v3564
        %v3566 = vpop.f32.mrf.mxu0
        %v3567 = vpop.f32.mrf.mxu0
        %v3568 = vadd.f32 %v3408, %v3567
        %v3569 = vpop.f32.mrf.mxu0
        %3570 = vdwg.mxu0
        %v3571 = vmax.f32 %v3541, -20.0
        %v3572 = vmax.f32 %v3544, -20.0
        %v3573 = vmax.f32 %v3549, -20.0
        %v3574 = vmax.f32 %v3552, -20.0
        %v3575 = vmax.f32 %v3557, -20.0
        %v3576 = vmax.f32 %v3560, -20.0
        %v3577 = vmax.f32 %v3565, -20.0
        %v3578 = vmax.f32 %v3568, -20.0
        %v3579 = vmin.f32 %v3571, 20.0
        %v3580 = vmin.f32 %v3572, 20.0
        %v3581 = vmin.f32 %v3573, 20.0
        %v3582 = vmin.f32 %v3574, 20.0
        %v3583 = vmin.f32 %v3575, 20.0
        %v3584 = vmin.f32 %v3576, 20.0
        %v3585 = vmin.f32 %v3577, 20.0
        %v3586 = vmin.f32 %v3578, 20.0
        %v3587 = vmul.f32 %v3579, 1.442695
        %v3588 = vpow.pop %v3587
        %v3589 = vmul.f32 %v3580, 1.442695
        %v3590 = vpow.pop %v3589
        %v3591 = vmul.f32 %v3581, 1.442695
        %v3592 = vpow.pop %v3591
        %v3593 = vmul.f32 %v3582, 1.442695
        %v3594 = vpow.pop %v3593
        %v3595 = vmul.f32 %v3583, 1.442695
        %v3596 = vpow.pop %v3595
        %v3597 = vmul.f32 %v3584, 1.442695
        %v3598 = vpow.pop %v3597
        %v3599 = vmul.f32 %v3585, 1.442695
        %v3600 = vpow.pop %v3599
        %v3601 = vmul.f32 %v3586, 1.442695
        %v3602 = vpow.pop %v3601
        %v3603 = vsub.f32 %v3588, 1.0
        %v3604 = vsub.f32 %v3590, 1.0
        %v3605 = vsub.f32 %v3592, 1.0
        %v3606 = vsub.f32 %v3594, 1.0
        %v3607 = vsub.f32 %v3596, 1.0
        %v3608 = vsub.f32 %v3598, 1.0
        %v3609 = vsub.f32 %v3600, 1.0
        %v3610 = vsub.f32 %v3602, 1.0
        %v3611 = vmul.f32 %v3588, %v3603
        %v3612 = vmul.f32 %v3590, %v3604
        %v3613 = vmul.f32 %v3592, %v3605
        %v3614 = vmul.f32 %v3594, %v3606
        %v3615 = vmul.f32 %v3596, %v3607
        %v3616 = vmul.f32 %v3598, %v3608
        %v3617 = vmul.f32 %v3600, %v3609
        %v3618 = vmul.f32 %v3602, %v3610
        %v3619 = vmul.f32 %v3588, %v3588
        %v3620 = vmul.f32 %v3590, %v3590
        %v3621 = vmul.f32 %v3592, %v3592
        %v3622 = vmul.f32 %v3594, %v3594
        %v3623 = vmul.f32 %v3596, %v3596
        %v3624 = vmul.f32 %v3598, %v3598
        %v3625 = vmul.f32 %v3600, %v3600
        %v3626 = vmul.f32 %v3602, %v3602
        %v3627 = vadd.f32 %v3619, 1.0
        %v3628 = vadd.f32 %v3620, 1.0
        %v3629 = vadd.f32 %v3621, 1.0
        %v3630 = vadd.f32 %v3622, 1.0
        %v3631 = vadd.f32 %v3623, 1.0
        %v3632 = vadd.f32 %v3624, 1.0
        %v3633 = vadd.f32 %v3625, 1.0
        %v3634 = vadd.f32 %v3626, 1.0
        %v3635 = vrcp.pop %v3627
        %v3636 = vrcp.pop %v3628
        %v3637 = vrcp.pop %v3629
        %v3638 = vrcp.pop %v3630
        %v3639 = vrcp.pop %v3631
        %v3640 = vrcp.pop %v3632
        %v3641 = vrcp.pop %v3633
        %v3642 = vrcp.pop %v3634
        %v3643 = vmul.f32 %v3611, %v3635
        %v3644 = vmul.f32 %v3612, %v3636
        %v3645 = vmul.f32 %v3613, %v3637
        %v3646 = vmul.f32 %v3614, %v3638
        %v3647 = vmul.f32 %v3615, %v3639
        %v3648 = vmul.f32 %v3616, %v3640
        %v3649 = vmul.f32 %v3617, %v3641
        %v3650 = vmul.f32 %v3618, %v3642
        %s3651 = scalar_lea.vmem [#allocation10], 256
        %v3652 = vld [vmem:[%s3651] sm:$0xf]
        %v3653 = vld [vmem:[%s3651 + $0x4] sm:$0xf]
        %v3654 = vld [vmem:[%s3651 + $0x8] sm:$0xf]
        %v3655 = vld [vmem:[%s3651 + $0xc] sm:$0xf]
        %v3656 = vld [vmem:[%s3651 + $0x10] sm:$0xf]
        %v3657 = vld [vmem:[%s3651 + $0x14] sm:$0xf]
        %v3658 = vld [vmem:[%s3651 + $0x18] sm:$0xf]
        %v3659 = vld [vmem:[%s3651 + $0x1c] sm:$0xf]
        %v3660 = vld [vmem:[%s3651 + $0x20] sm:$0xf]
        %v3661 = vld [vmem:[%s3651 + $0x24] sm:$0xf]
        %v3662 = vld [vmem:[%s3651 + $0x28] sm:$0xf]
        %v3663 = vld [vmem:[%s3651 + $0x2c] sm:$0xf]
        %v3664 = vld [vmem:[%s3651 + $0x30] sm:$0xf]
        %v3665 = vld [vmem:[%s3651 + $0x34] sm:$0xf]
        %v3666 = vld [vmem:[%s3651 + $0x38] sm:$0xf]
        %v3667 = vld [vmem:[%s3651 + $0x3c] sm:$0xf]
        %v3668 = vpack.c.bf16 %v3644, %v3643
        %v3669 = vpack.c.bf16 %v3646, %v3645
        %v3670 = vpack.c.bf16 %v3648, %v3647
        %v3671 = vpack.c.bf16 %v3650, %v3649
        %v3688 = vunpack.c.l.b16 %v3652
        %v3689 = vunpack.c.l.b16 %v3653
        %v3690 = vunpack.c.l.b16 %v3654
        %v3691 = vunpack.c.l.b16 %v3655
        %v3692 = vunpack.c.l.b16 %v3656
        %v3693 = vunpack.c.l.b16 %v3657
        %v3694 = vunpack.c.l.b16 %v3658
        %v3695 = vunpack.c.l.b16 %v3659
        %v3696 = vunpack.c.l.b16 %v3660
        %v3697 = vunpack.c.l.b16 %v3661
        %v3698 = vunpack.c.l.b16 %v3662
        %v3699 = vunpack.c.l.b16 %v3663
        %v3700 = vunpack.c.l.b16 %v3664
        %v3701 = vunpack.c.l.b16 %v3665
        %v3702 = vunpack.c.l.b16 %v3666
        %v3703 = vunpack.c.l.b16 %v3667
        %v3704 = vpack.c.b16 %v3689, %v3688
        %v3705 = vpack.c.b16 %v3691, %v3690
        %v3706 = vpack.c.b16 %v3693, %v3692
        %v3707 = vpack.c.b16 %v3695, %v3694
        %v3708 = vpack.c.b16 %v3697, %v3696
        %v3709 = vpack.c.b16 %v3699, %v3698
        %v3710 = vpack.c.b16 %v3701, %v3700
        %v3711 = vpack.c.b16 %v3703, %v3702
        %3720 = vmatprep.subr.bf16.mxu0 0
        %3721 = vmatpush1.bf16.msra.mxu0 %v3711
        %3722 = vmatprep.subr.bf16.mxu0 0
        %3723 = vmatpush1.bf16.msra.mxu0 %v3710
        %3724 = vmatprep.subr.bf16.mxu0 0
        %3725 = vmatpush1.bf16.msra.mxu0 %v3709
        %3726 = vmatprep.subr.bf16.mxu0 0
        %3727 = vmatpush1.bf16.msra.mxu0 %v3708
        %3728 = vmatprep.subr.bf16.mxu0 0
        %3729 = vmatpush1.bf16.msra.mxu0 %v3707
        %3730 = vmatprep.subr.bf16.mxu0 0
        %3731 = vmatpush1.bf16.msra.mxu0 %v3706
        %3732 = vmatprep.subr.bf16.mxu0 0
        %3733 = vmatpush1.bf16.msra.mxu0 %v3705
        %3734 = vmatprep.subr.bf16.mxu0 0
        %3735 = vmatpush1.bf16.msra.mxu0 %v3704
        %3736 = vmatprep.subr.bf16.mxu0 0
        %3737 = vmatpush2.bf16.msra.mxu0 0
        %3738 = vmatprep.subr.bf16.mxu0 0
        %3739 = vmatpush2.bf16.msra.mxu0 0
        %3740 = vmatprep.subr.bf16.mxu0 0
        %3741 = vmatpush2.bf16.msra.mxu0 0
        %3742 = vmatprep.subr.bf16.mxu0 0
        %3743 = vmatpush2.bf16.msra.mxu0 0
        %3744 = vmatprep.subr.bf16.mxu0 0
        %3745 = vmatpush2.bf16.msra.mxu0 0
        %3746 = vmatprep.subr.bf16.mxu0 0
        %3747 = vmatpush2.bf16.msra.mxu0 0
        %3748 = vmatprep.subr.bf16.mxu0 0
        %3749 = vmatpush2.bf16.msra.mxu0 0
        %3750 = vmatprep.subr.bf16.mxu0 0
        %3751 = vmatpush2.bf16.msra.mxu0 0
        %3752 = vmatprep.mubr.bf16.mxu0 0
        %3753 = vmatmul.mubr.bf16.gmra.mxu0 %v3668
        %v3754 = vpop.f32.mrf.mxu0
        %v3755 = vadd.f32 0.0, %v3754
        %v3756 = vpop.f32.mrf.mxu0
        %v3757 = vpop.f32.mrf.mxu0
        %v3758 = vadd.f32 0.0, %v3757
        %v3759 = vpop.f32.mrf.mxu0
        %3760 = vmatprep.mubr.bf16.mxu0 0
        %3761 = vmatmul.mubr.bf16.gmra.mxu0 %v3669
        %v3762 = vpop.f32.mrf.mxu0
        %v3763 = vadd.f32 0.0, %v3762
        %v3764 = vpop.f32.mrf.mxu0
        %v3765 = vpop.f32.mrf.mxu0
        %v3766 = vadd.f32 0.0, %v3765
        %v3767 = vpop.f32.mrf.mxu0
        %3768 = vmatprep.mubr.bf16.mxu0 0
        %3769 = vmatmul.mubr.bf16.gmra.mxu0 %v3670
        %v3770 = vpop.f32.mrf.mxu0
        %v3771 = vadd.f32 0.0, %v3770
        %v3772 = vpop.f32.mrf.mxu0
        %v3773 = vpop.f32.mrf.mxu0
        %v3774 = vadd.f32 0.0, %v3773
        %v3775 = vpop.f32.mrf.mxu0
        %3776 = vmatprep.mubr.bf16.mxu0 0
        %3777 = vmatmul.mubr.bf16.gmra.mxu0 %v3671
        %v3778 = vpop.f32.mrf.mxu0
        %v3779 = vadd.f32 0.0, %v3778
        %v3780 = vpop.f32.mrf.mxu0
        %v3781 = vpop.f32.mrf.mxu0
        %v3782 = vadd.f32 0.0, %v3781
        %v3783 = vpop.f32.mrf.mxu0
        %3784 = vdwg.mxu0
        %v3785 = vadd.f32 %v3321, %v3755
        %v3786 = vadd.f32 %v3322, %v3758
        %v3787 = vadd.f32 %v3323, %v3763
        %v3788 = vadd.f32 %v3324, %v3766
        %v3789 = vadd.f32 %v3325, %v3771
        %v3790 = vadd.f32 %v3326, %v3774
        %v3791 = vadd.f32 %v3327, %v3779
        %v3792 = vadd.f32 %v3328, %v3782
        %v3793 = vadd.f32 %v3329, %v3755
        %v3794 = vadd.f32 %v3330, %v3758
        %v3795 = vadd.f32 %v3331, %v3763
        %v3796 = vadd.f32 %v3332, %v3766
        %v3797 = vadd.f32 %v3333, %v3771
        %v3798 = vadd.f32 %v3334, %v3774
        %v3799 = vadd.f32 %v3335, %v3779
        %v3800 = vadd.f32 %v3336, %v3782
        %v3801 = vrot.slane %v3785, 4
        %v3802 = vrot.slane %v3786, 4
        %v3803 = vrot.slane %v3787, 4
        %v3804 = vrot.slane %v3788, 4
        %v3805 = vrot.slane %v3789, 4
        %v3806 = vrot.slane %v3790, 4
        %v3807 = vrot.slane %v3791, 4
        %v3808 = vrot.slane %v3792, 4
        %v3809 = vsel %vm2408, %v3807, %v3808
        %v3810 = vsel %vm2408, %v3806, %v3807
        %v3811 = vsel %vm2408, %v3805, %v3806
        %v3812 = vsel %vm2408, %v3804, %v3805
        %v3813 = vsel %vm2408, %v3803, %v3804
        %v3814 = vsel %vm2408, %v3802, %v3803
        %v3815 = vsel %vm2408, %v3801, %v3802
        %v3816 = vsel %vm2408, %v3808, %v3801
        %v3817 = vsel %vm2417, %v3816, 0.0
        %v3818 = vsel %vm2418, %v3815, 0.0
        %v3819 = vsel %vm2419, %v3814, 0.0
        %v3820 = vsel %vm2420, %v3813, 0.0
        %v3821 = vsel %vm2421, %v3812, 0.0
        %v3822 = vsel %vm2422, %v3811, 0.0
        %v3823 = vsel %vm2423, %v3810, 0.0
        %v3824 = vsel %vm2424, %v3809, 0.0
        %s3825 = scalar_lea.vmem [#allocation7], 640
        %v3826 = vld [vmem:[%s3825] sm:$0xf]
        %v3827 = vld [vmem:[%s3825 + $0x4] sm:$0xf]
        %v3828 = vld [vmem:[%s3825 + $0x8] sm:$0xf]
        %v3829 = vld [vmem:[%s3825 + $0xc] sm:$0xf]
        %v3830 = vld [vmem:[%s3825 + $0x10] sm:$0xf]
        %v3831 = vld [vmem:[%s3825 + $0x14] sm:$0xf]
        %v3832 = vld [vmem:[%s3825 + $0x18] sm:$0xf]
        %v3833 = vld [vmem:[%s3825 + $0x1c] sm:$0xf]
        %v3834 = vld [vmem:[%s3825 + $0x20] sm:$0xf]
        %v3835 = vld [vmem:[%s3825 + $0x24] sm:$0xf]
        %v3836 = vld [vmem:[%s3825 + $0x28] sm:$0xf]
        %v3837 = vld [vmem:[%s3825 + $0x2c] sm:$0xf]
        %v3838 = vld [vmem:[%s3825 + $0x30] sm:$0xf]
        %v3839 = vld [vmem:[%s3825 + $0x34] sm:$0xf]
        %v3840 = vld [vmem:[%s3825 + $0x38] sm:$0xf]
        %v3841 = vld [vmem:[%s3825 + $0x3c] sm:$0xf]
        %v3842 = vld [vmem:[%s3825 + $0x40] sm:$0xf]
        %v3843 = vld [vmem:[%s3825 + $0x44] sm:$0xf]
        %v3844 = vld [vmem:[%s3825 + $0x48] sm:$0xf]
        %v3845 = vld [vmem:[%s3825 + $0x4c] sm:$0xf]
        %v3846 = vld [vmem:[%s3825 + $0x50] sm:$0xf]
        %v3847 = vld [vmem:[%s3825 + $0x54] sm:$0xf]
        %v3848 = vld [vmem:[%s3825 + $0x58] sm:$0xf]
        %v3849 = vld [vmem:[%s3825 + $0x5c] sm:$0xf]
        %v3850 = vld [vmem:[%s3825 + $0x60] sm:$0xf]
        %v3851 = vld [vmem:[%s3825 + $0x64] sm:$0xf]
        %v3852 = vld [vmem:[%s3825 + $0x68] sm:$0xf]
        %v3853 = vld [vmem:[%s3825 + $0x6c] sm:$0xf]
        %v3854 = vld [vmem:[%s3825 + $0x70] sm:$0xf]
        %v3855 = vld [vmem:[%s3825 + $0x74] sm:$0xf]
        %v3856 = vld [vmem:[%s3825 + $0x78] sm:$0xf]
        %v3857 = vld [vmem:[%s3825 + $0x7c] sm:$0xf]
        %v3858 = vpack.c.bf16 %v3818, %v3817
        %v3859 = vpack.c.bf16 %v3786, %v3785
        %v3860 = vpack.c.bf16 %v3820, %v3819
        %v3861 = vpack.c.bf16 %v3788, %v3787
        %v3862 = vpack.c.bf16 %v3822, %v3821
        %v3863 = vpack.c.bf16 %v3790, %v3789
        %v3864 = vpack.c.bf16 %v3824, %v3823
        %v3865 = vpack.c.bf16 %v3792, %v3791
        %s3866 = scalar_lea.vmem [#allocation8], 5
        %v3867 = vld [vmem:[%s3866] sm:$0x1]
        %v3869 = vlaneseq
        %v3870 = vshrl.u32 %v3869, 7
        %v3871 = vsub.s32 0, %v3870
        %v3872 = vrot.slane %v3867, %v3871
        %v3906 = vunpack.c.l.b16 %v3826
        %v3907 = vunpack.c.l.b16 %v3827
        %v3908 = vunpack.c.l.b16 %v3828
        %v3909 = vunpack.c.l.b16 %v3829
        %v3910 = vunpack.c.l.b16 %v3830
        %v3911 = vunpack.c.l.b16 %v3831
        %v3912 = vunpack.c.l.b16 %v3832
        %v3913 = vunpack.c.l.b16 %v3833
        %v3914 = vunpack.c.l.b16 %v3834
        %v3915 = vunpack.c.l.b16 %v3835
        %v3916 = vunpack.c.l.b16 %v3836
        %v3917 = vunpack.c.l.b16 %v3837
        %v3918 = vunpack.c.l.b16 %v3838
        %v3919 = vunpack.c.l.b16 %v3839
        %v3920 = vunpack.c.l.b16 %v3840
        %v3921 = vunpack.c.l.b16 %v3841
        %v3922 = vunpack.c.l.b16 %v3842
        %v3923 = vunpack.c.l.b16 %v3843
        %v3924 = vunpack.c.l.b16 %v3844
        %v3925 = vunpack.c.l.b16 %v3845
        %v3926 = vunpack.c.l.b16 %v3846
        %v3927 = vunpack.c.l.b16 %v3847
        %v3928 = vunpack.c.l.b16 %v3848
        %v3929 = vunpack.c.l.b16 %v3849
        %v3930 = vunpack.c.l.b16 %v3850
        %v3931 = vunpack.c.l.b16 %v3851
        %v3932 = vunpack.c.l.b16 %v3852
        %v3933 = vunpack.c.l.b16 %v3853
        %v3934 = vunpack.c.l.b16 %v3854
        %v3935 = vunpack.c.l.b16 %v3855
        %v3936 = vunpack.c.l.b16 %v3856
        %v3937 = vunpack.c.l.b16 %v3857
        %v3938 = vpack.c.b16 %v3907, %v3906
        %v3939 = vpack.c.b16 %v3909, %v3908
        %v3940 = vpack.c.b16 %v3911, %v3910
        %v3941 = vpack.c.b16 %v3913, %v3912
        %v3942 = vpack.c.b16 %v3915, %v3914
        %v3943 = vpack.c.b16 %v3917, %v3916
        %v3944 = vpack.c.b16 %v3919, %v3918
        %v3945 = vpack.c.b16 %v3921, %v3920
        %v3946 = vpack.c.b16 %v3923, %v3922
        %v3947 = vpack.c.b16 %v3925, %v3924
        %v3948 = vpack.c.b16 %v3927, %v3926
        %v3949 = vpack.c.b16 %v3929, %v3928
        %v3950 = vpack.c.b16 %v3931, %v3930
        %v3951 = vpack.c.b16 %v3933, %v3932
        %v3952 = vpack.c.b16 %v3935, %v3934
        %v3953 = vpack.c.b16 %v3937, %v3936
        %3970 = vmatprep.subr.bf16.mxu0 0
        %3971 = vmatpush1.bf16.msra.mxu0 %v3945
        %3972 = vmatprep.subr.bf16.mxu0 0
        %3973 = vmatpush1.bf16.msra.mxu0 %v3944
        %3974 = vmatprep.subr.bf16.mxu0 0
        %3975 = vmatpush1.bf16.msra.mxu0 %v3943
        %3976 = vmatprep.subr.bf16.mxu0 0
        %3977 = vmatpush1.bf16.msra.mxu0 %v3942
        %3978 = vmatprep.subr.bf16.mxu0 0
        %3979 = vmatpush1.bf16.msra.mxu0 %v3941
        %3980 = vmatprep.subr.bf16.mxu0 0
        %3981 = vmatpush1.bf16.msra.mxu0 %v3940
        %3982 = vmatprep.subr.bf16.mxu0 0
        %3983 = vmatpush1.bf16.msra.mxu0 %v3939
        %3984 = vmatprep.subr.bf16.mxu0 0
        %3985 = vmatpush1.bf16.msra.mxu0 %v3938
        %3986 = vmatprep.subr.bf16.mxu0 0
        %3987 = vmatpush2.bf16.msra.mxu0 %v3953
        %3988 = vmatprep.subr.bf16.mxu0 0
        %3989 = vmatpush2.bf16.msra.mxu0 %v3952
        %3990 = vmatprep.subr.bf16.mxu0 0
        %3991 = vmatpush2.bf16.msra.mxu0 %v3951
        %3992 = vmatprep.subr.bf16.mxu0 0
        %3993 = vmatpush2.bf16.msra.mxu0 %v3950
        %3994 = vmatprep.subr.bf16.mxu0 0
        %3995 = vmatpush2.bf16.msra.mxu0 %v3949
        %3996 = vmatprep.subr.bf16.mxu0 0
        %3997 = vmatpush2.bf16.msra.mxu0 %v3948
        %3998 = vmatprep.subr.bf16.mxu0 0
        %3999 = vmatpush2.bf16.msra.mxu0 %v3947
        %4000 = vmatprep.subr.bf16.mxu0 0
        %4001 = vmatpush2.bf16.msra.mxu0 %v3946
        %4002 = vmatprep.mubr.bf16.mxu0 %v3859
        %4003 = vmatmul.mubr.bf16.gmra.mxu0 %v3858
        %v4004 = vpop.f32.mrf.mxu0
        %v4005 = vadd.f32 %v3872, %v4004
        %v4006 = vpop.f32.mrf.mxu0
        %v4007 = vpop.f32.mrf.mxu0
        %v4008 = vadd.f32 %v3872, %v4007
        %v4009 = vpop.f32.mrf.mxu0
        %4010 = vmatprep.mubr.bf16.mxu0 %v3861
        %4011 = vmatmul.mubr.bf16.gmra.mxu0 %v3860
        %v4012 = vpop.f32.mrf.mxu0
        %v4013 = vadd.f32 %v3872, %v4012
        %v4014 = vpop.f32.mrf.mxu0
        %v4015 = vpop.f32.mrf.mxu0
        %v4016 = vadd.f32 %v3872, %v4015
        %v4017 = vpop.f32.mrf.mxu0
        %4018 = vmatprep.mubr.bf16.mxu0 %v3863
        %4019 = vmatmul.mubr.bf16.gmra.mxu0 %v3862
        %v4020 = vpop.f32.mrf.mxu0
        %v4021 = vadd.f32 %v3872, %v4020
        %v4022 = vpop.f32.mrf.mxu0
        %v4023 = vpop.f32.mrf.mxu0
        %v4024 = vadd.f32 %v3872, %v4023
        %v4025 = vpop.f32.mrf.mxu0
        %4026 = vmatprep.mubr.bf16.mxu0 %v3865
        %4027 = vmatmul.mubr.bf16.gmra.mxu0 %v3864
        %v4028 = vpop.f32.mrf.mxu0
        %v4029 = vadd.f32 %v3872, %v4028
        %v4030 = vpop.f32.mrf.mxu0
        %v4031 = vpop.f32.mrf.mxu0
        %v4032 = vadd.f32 %v3872, %v4031
        %v4033 = vpop.f32.mrf.mxu0
        %4034 = vdwg.mxu0
        %v4035 = vmax.f32 %v4005, -20.0
        %v4036 = vmax.f32 %v4008, -20.0
        %v4037 = vmax.f32 %v4013, -20.0
        %v4038 = vmax.f32 %v4016, -20.0
        %v4039 = vmax.f32 %v4021, -20.0
        %v4040 = vmax.f32 %v4024, -20.0
        %v4041 = vmax.f32 %v4029, -20.0
        %v4042 = vmax.f32 %v4032, -20.0
        %v4043 = vmin.f32 %v4035, 20.0
        %v4044 = vmin.f32 %v4036, 20.0
        %v4045 = vmin.f32 %v4037, 20.0
        %v4046 = vmin.f32 %v4038, 20.0
        %v4047 = vmin.f32 %v4039, 20.0
        %v4048 = vmin.f32 %v4040, 20.0
        %v4049 = vmin.f32 %v4041, 20.0
        %v4050 = vmin.f32 %v4042, 20.0
        %v4051 = vmul.f32 %v4043, 1.442695
        %v4052 = vpow.pop %v4051
        %v4053 = vmul.f32 %v4044, 1.442695
        %v4054 = vpow.pop %v4053
        %v4055 = vmul.f32 %v4045, 1.442695
        %v4056 = vpow.pop %v4055
        %v4057 = vmul.f32 %v4046, 1.442695
        %v4058 = vpow.pop %v4057
        %v4059 = vmul.f32 %v4047, 1.442695
        %v4060 = vpow.pop %v4059
        %v4061 = vmul.f32 %v4048, 1.442695
        %v4062 = vpow.pop %v4061
        %v4063 = vmul.f32 %v4049, 1.442695
        %v4064 = vpow.pop %v4063
        %v4065 = vmul.f32 %v4050, 1.442695
        %v4066 = vpow.pop %v4065
        %v4067 = vsub.f32 %v4052, 1.0
        %v4068 = vsub.f32 %v4054, 1.0
        %v4069 = vsub.f32 %v4056, 1.0
        %v4070 = vsub.f32 %v4058, 1.0
        %v4071 = vsub.f32 %v4060, 1.0
        %v4072 = vsub.f32 %v4062, 1.0
        %v4073 = vsub.f32 %v4064, 1.0
        %v4074 = vsub.f32 %v4066, 1.0
        %v4075 = vmul.f32 %v4052, %v4067
        %v4076 = vmul.f32 %v4054, %v4068
        %v4077 = vmul.f32 %v4056, %v4069
        %v4078 = vmul.f32 %v4058, %v4070
        %v4079 = vmul.f32 %v4060, %v4071
        %v4080 = vmul.f32 %v4062, %v4072
        %v4081 = vmul.f32 %v4064, %v4073
        %v4082 = vmul.f32 %v4066, %v4074
        %v4083 = vmul.f32 %v4052, %v4052
        %v4084 = vmul.f32 %v4054, %v4054
        %v4085 = vmul.f32 %v4056, %v4056
        %v4086 = vmul.f32 %v4058, %v4058
        %v4087 = vmul.f32 %v4060, %v4060
        %v4088 = vmul.f32 %v4062, %v4062
        %v4089 = vmul.f32 %v4064, %v4064
        %v4090 = vmul.f32 %v4066, %v4066
        %v4091 = vadd.f32 %v4083, 1.0
        %v4092 = vadd.f32 %v4084, 1.0
        %v4093 = vadd.f32 %v4085, 1.0
        %v4094 = vadd.f32 %v4086, 1.0
        %v4095 = vadd.f32 %v4087, 1.0
        %v4096 = vadd.f32 %v4088, 1.0
        %v4097 = vadd.f32 %v4089, 1.0
        %v4098 = vadd.f32 %v4090, 1.0
        %v4099 = vrcp.pop %v4091
        %v4100 = vrcp.pop %v4092
        %v4101 = vrcp.pop %v4093
        %v4102 = vrcp.pop %v4094
        %v4103 = vrcp.pop %v4095
        %v4104 = vrcp.pop %v4096
        %v4105 = vrcp.pop %v4097
        %v4106 = vrcp.pop %v4098
        %v4107 = vmul.f32 %v4075, %v4099
        %v4108 = vmul.f32 %v4076, %v4100
        %v4109 = vmul.f32 %v4077, %v4101
        %v4110 = vmul.f32 %v4078, %v4102
        %v4111 = vmul.f32 %v4079, %v4103
        %v4112 = vmul.f32 %v4080, %v4104
        %v4113 = vmul.f32 %v4081, %v4105
        %v4114 = vmul.f32 %v4082, %v4106
        %s4115 = scalar_lea.vmem [#allocation10], 320
        %v4116 = vld [vmem:[%s4115] sm:$0xf]
        %v4117 = vld [vmem:[%s4115 + $0x4] sm:$0xf]
        %v4118 = vld [vmem:[%s4115 + $0x8] sm:$0xf]
        %v4119 = vld [vmem:[%s4115 + $0xc] sm:$0xf]
        %v4120 = vld [vmem:[%s4115 + $0x10] sm:$0xf]
        %v4121 = vld [vmem:[%s4115 + $0x14] sm:$0xf]
        %v4122 = vld [vmem:[%s4115 + $0x18] sm:$0xf]
        %v4123 = vld [vmem:[%s4115 + $0x1c] sm:$0xf]
        %v4124 = vld [vmem:[%s4115 + $0x20] sm:$0xf]
        %v4125 = vld [vmem:[%s4115 + $0x24] sm:$0xf]
        %v4126 = vld [vmem:[%s4115 + $0x28] sm:$0xf]
        %v4127 = vld [vmem:[%s4115 + $0x2c] sm:$0xf]
        %v4128 = vld [vmem:[%s4115 + $0x30] sm:$0xf]
        %v4129 = vld [vmem:[%s4115 + $0x34] sm:$0xf]
        %v4130 = vld [vmem:[%s4115 + $0x38] sm:$0xf]
        %v4131 = vld [vmem:[%s4115 + $0x3c] sm:$0xf]
        %v4132 = vpack.c.bf16 %v4108, %v4107
        %v4133 = vpack.c.bf16 %v4110, %v4109
        %v4134 = vpack.c.bf16 %v4112, %v4111
        %v4135 = vpack.c.bf16 %v4114, %v4113
        %v4152 = vunpack.c.l.b16 %v4116
        %v4153 = vunpack.c.l.b16 %v4117
        %v4154 = vunpack.c.l.b16 %v4118
        %v4155 = vunpack.c.l.b16 %v4119
        %v4156 = vunpack.c.l.b16 %v4120
        %v4157 = vunpack.c.l.b16 %v4121
        %v4158 = vunpack.c.l.b16 %v4122
        %v4159 = vunpack.c.l.b16 %v4123
        %v4160 = vunpack.c.l.b16 %v4124
        %v4161 = vunpack.c.l.b16 %v4125
        %v4162 = vunpack.c.l.b16 %v4126
        %v4163 = vunpack.c.l.b16 %v4127
        %v4164 = vunpack.c.l.b16 %v4128
        %v4165 = vunpack.c.l.b16 %v4129
        %v4166 = vunpack.c.l.b16 %v4130
        %v4167 = vunpack.c.l.b16 %v4131
        %v4168 = vpack.c.b16 %v4153, %v4152
        %v4169 = vpack.c.b16 %v4155, %v4154
        %v4170 = vpack.c.b16 %v4157, %v4156
        %v4171 = vpack.c.b16 %v4159, %v4158
        %v4172 = vpack.c.b16 %v4161, %v4160
        %v4173 = vpack.c.b16 %v4163, %v4162
        %v4174 = vpack.c.b16 %v4165, %v4164
        %v4175 = vpack.c.b16 %v4167, %v4166
        %4184 = vmatprep.subr.bf16.mxu0 0
        %4185 = vmatpush1.bf16.msra.mxu0 %v4175
        %4186 = vmatprep.subr.bf16.mxu0 0
        %4187 = vmatpush1.bf16.msra.mxu0 %v4174
        %4188 = vmatprep.subr.bf16.mxu0 0
        %4189 = vmatpush1.bf16.msra.mxu0 %v4173
        %4190 = vmatprep.subr.bf16.mxu0 0
        %4191 = vmatpush1.bf16.msra.mxu0 %v4172
        %4192 = vmatprep.subr.bf16.mxu0 0
        %4193 = vmatpush1.bf16.msra.mxu0 %v4171
        %4194 = vmatprep.subr.bf16.mxu0 0
        %4195 = vmatpush1.bf16.msra.mxu0 %v4170
        %4196 = vmatprep.subr.bf16.mxu0 0
        %4197 = vmatpush1.bf16.msra.mxu0 %v4169
        %4198 = vmatprep.subr.bf16.mxu0 0
        %4199 = vmatpush1.bf16.msra.mxu0 %v4168
        %4200 = vmatprep.subr.bf16.mxu0 0
        %4201 = vmatpush2.bf16.msra.mxu0 0
        %4202 = vmatprep.subr.bf16.mxu0 0
        %4203 = vmatpush2.bf16.msra.mxu0 0
        %4204 = vmatprep.subr.bf16.mxu0 0
        %4205 = vmatpush2.bf16.msra.mxu0 0
        %4206 = vmatprep.subr.bf16.mxu0 0
        %4207 = vmatpush2.bf16.msra.mxu0 0
        %4208 = vmatprep.subr.bf16.mxu0 0
        %4209 = vmatpush2.bf16.msra.mxu0 0
        %4210 = vmatprep.subr.bf16.mxu0 0
        %4211 = vmatpush2.bf16.msra.mxu0 0
        %4212 = vmatprep.subr.bf16.mxu0 0
        %4213 = vmatpush2.bf16.msra.mxu0 0
        %4214 = vmatprep.subr.bf16.mxu0 0
        %4215 = vmatpush2.bf16.msra.mxu0 0
        %4216 = vmatprep.mubr.bf16.mxu0 0
        %4217 = vmatmul.mubr.bf16.gmra.mxu0 %v4132
        %v4218 = vpop.f32.mrf.mxu0
        %v4219 = vadd.f32 0.0, %v4218
        %v4220 = vpop.f32.mrf.mxu0
        %v4221 = vpop.f32.mrf.mxu0
        %v4222 = vadd.f32 0.0, %v4221
        %v4223 = vpop.f32.mrf.mxu0
        %4224 = vmatprep.mubr.bf16.mxu0 0
        %4225 = vmatmul.mubr.bf16.gmra.mxu0 %v4133
        %v4226 = vpop.f32.mrf.mxu0
        %v4227 = vadd.f32 0.0, %v4226
        %v4228 = vpop.f32.mrf.mxu0
        %v4229 = vpop.f32.mrf.mxu0
        %v4230 = vadd.f32 0.0, %v4229
        %v4231 = vpop.f32.mrf.mxu0
        %4232 = vmatprep.mubr.bf16.mxu0 0
        %4233 = vmatmul.mubr.bf16.gmra.mxu0 %v4134
        %v4234 = vpop.f32.mrf.mxu0
        %v4235 = vadd.f32 0.0, %v4234
        %v4236 = vpop.f32.mrf.mxu0
        %v4237 = vpop.f32.mrf.mxu0
        %v4238 = vadd.f32 0.0, %v4237
        %v4239 = vpop.f32.mrf.mxu0
        %4240 = vmatprep.mubr.bf16.mxu0 0
        %4241 = vmatmul.mubr.bf16.gmra.mxu0 %v4135
        %v4242 = vpop.f32.mrf.mxu0
        %v4243 = vadd.f32 0.0, %v4242
        %v4244 = vpop.f32.mrf.mxu0
        %v4245 = vpop.f32.mrf.mxu0
        %v4246 = vadd.f32 0.0, %v4245
        %v4247 = vpop.f32.mrf.mxu0
        %4248 = vdwg.mxu0
        %v4249 = vadd.f32 %v3793, %v4219
        %v4250 = vadd.f32 %v3794, %v4222
        %v4251 = vadd.f32 %v3795, %v4227
        %v4252 = vadd.f32 %v3796, %v4230
        %v4253 = vadd.f32 %v3797, %v4235
        %v4254 = vadd.f32 %v3798, %v4238
        %v4255 = vadd.f32 %v3799, %v4243
        %v4256 = vadd.f32 %v3800, %v4246
        %v4257 = vmax.f32 %v4249, 0.0
        %v4258 = vmax.f32 %v4250, 0.0
        %v4259 = vmax.f32 %v4251, 0.0
        %v4260 = vmax.f32 %v4252, 0.0
        %v4261 = vmax.f32 %v4253, 0.0
        %v4262 = vmax.f32 %v4254, 0.0
        %v4263 = vmax.f32 %v4255, 0.0
        %v4264 = vmax.f32 %v4256, 0.0
        %v4265 = vld [vmem:[#allocation11] sm:$0xff]
        %v4266 = vld [vmem:[#allocation11 + $0x8] sm:$0xff]
        %v4267 = vld [vmem:[#allocation11 + $0x10] sm:$0xff]
        %v4268 = vld [vmem:[#allocation11 + $0x18] sm:$0xff]
        %v4269 = vld [vmem:[#allocation11 + $0x20] sm:$0xff]
        %v4270 = vld [vmem:[#allocation11 + $0x28] sm:$0xff]
        %v4271 = vld [vmem:[#allocation11 + $0x30] sm:$0xff]
        %v4272 = vld [vmem:[#allocation11 + $0x38] sm:$0xff]
        %v4273 = vld [vmem:[#allocation11 + $0x40] sm:$0xff]
        %v4274 = vld [vmem:[#allocation11 + $0x48] sm:$0xff]
        %v4275 = vld [vmem:[#allocation11 + $0x50] sm:$0xff]
        %v4276 = vld [vmem:[#allocation11 + $0x58] sm:$0xff]
        %v4277 = vld [vmem:[#allocation11 + $0x60] sm:$0xff]
        %v4278 = vld [vmem:[#allocation11 + $0x68] sm:$0xff]
        %v4279 = vld [vmem:[#allocation11 + $0x70] sm:$0xff]
        %v4280 = vld [vmem:[#allocation11 + $0x78] sm:$0xff]
        %v4281 = vld [vmem:[#allocation11 + $0x80] sm:$0xff]
        %v4282 = vld [vmem:[#allocation11 + $0x88] sm:$0xff]
        %v4283 = vld [vmem:[#allocation11 + $0x90] sm:$0xff]
        %v4284 = vld [vmem:[#allocation11 + $0x98] sm:$0xff]
        %v4285 = vld [vmem:[#allocation11 + $0xa0] sm:$0xff]
        %v4286 = vld [vmem:[#allocation11 + $0xa8] sm:$0xff]
        %v4287 = vld [vmem:[#allocation11 + $0xb0] sm:$0xff]
        %v4288 = vld [vmem:[#allocation11 + $0xb8] sm:$0xff]
        %v4289 = vld [vmem:[#allocation11 + $0xc0] sm:$0xff]
        %v4290 = vld [vmem:[#allocation11 + $0xc8] sm:$0xff]
        %v4291 = vld [vmem:[#allocation11 + $0xd0] sm:$0xff]
        %v4292 = vld [vmem:[#allocation11 + $0xd8] sm:$0xff]
        %v4293 = vld [vmem:[#allocation11 + $0xe0] sm:$0xff]
        %v4294 = vld [vmem:[#allocation11 + $0xe8] sm:$0xff]
        %v4295 = vld [vmem:[#allocation11 + $0xf0] sm:$0xff]
        %v4296 = vld [vmem:[#allocation11 + $0xf8] sm:$0xff]
        %v4297 = vld [vmem:[#allocation11 + $0x100] sm:$0xff]
        %v4298 = vld [vmem:[#allocation11 + $0x108] sm:$0xff]
        %v4299 = vld [vmem:[#allocation11 + $0x110] sm:$0xff]
        %v4300 = vld [vmem:[#allocation11 + $0x118] sm:$0xff]
        %v4301 = vld [vmem:[#allocation11 + $0x120] sm:$0xff]
        %v4302 = vld [vmem:[#allocation11 + $0x128] sm:$0xff]
        %v4303 = vld [vmem:[#allocation11 + $0x130] sm:$0xff]
        %v4304 = vld [vmem:[#allocation11 + $0x138] sm:$0xff]
        %v4305 = vld [vmem:[#allocation11 + $0x140] sm:$0xff]
        %v4306 = vld [vmem:[#allocation11 + $0x148] sm:$0xff]
        %v4307 = vld [vmem:[#allocation11 + $0x150] sm:$0xff]
        %v4308 = vld [vmem:[#allocation11 + $0x158] sm:$0xff]
        %v4309 = vld [vmem:[#allocation11 + $0x160] sm:$0xff]
        %v4310 = vld [vmem:[#allocation11 + $0x168] sm:$0xff]
        %v4311 = vld [vmem:[#allocation11 + $0x170] sm:$0xff]
        %v4312 = vld [vmem:[#allocation11 + $0x178] sm:$0xff]
        %v4313 = vld [vmem:[#allocation11 + $0x180] sm:$0xff]
        %v4314 = vld [vmem:[#allocation11 + $0x188] sm:$0xff]
        %v4315 = vld [vmem:[#allocation11 + $0x190] sm:$0xff]
        %v4316 = vld [vmem:[#allocation11 + $0x198] sm:$0xff]
        %v4317 = vld [vmem:[#allocation11 + $0x1a0] sm:$0xff]
        %v4318 = vld [vmem:[#allocation11 + $0x1a8] sm:$0xff]
        %v4319 = vld [vmem:[#allocation11 + $0x1b0] sm:$0xff]
        %v4320 = vld [vmem:[#allocation11 + $0x1b8] sm:$0xff]
        %v4321 = vld [vmem:[#allocation11 + $0x1c0] sm:$0xff]
        %v4322 = vld [vmem:[#allocation11 + $0x1c8] sm:$0xff]
        %v4323 = vld [vmem:[#allocation11 + $0x1d0] sm:$0xff]
        %v4324 = vld [vmem:[#allocation11 + $0x1d8] sm:$0xff]
        %v4325 = vld [vmem:[#allocation11 + $0x1e0] sm:$0xff]
        %v4326 = vld [vmem:[#allocation11 + $0x1e8] sm:$0xff]
        %v4327 = vld [vmem:[#allocation11 + $0x1f0] sm:$0xff]
        %v4328 = vld [vmem:[#allocation11 + $0x1f8] sm:$0xff]
        %v4329 = vpack.c.bf16 %v4258, %v4257
        %v4330 = vpack.c.bf16 %v4260, %v4259
        %v4331 = vpack.c.bf16 %v4262, %v4261
        %v4332 = vpack.c.bf16 %v4264, %v4263
        %v4397 = vunpack.c.l.b16 %v4265
        %v4398 = vunpack.c.h.b16 %v4265
        %v4399 = vunpack.c.l.b16 %v4266
        %v4400 = vunpack.c.h.b16 %v4266
        %v4401 = vunpack.c.l.b16 %v4267
        %v4402 = vunpack.c.h.b16 %v4267
        %v4403 = vunpack.c.l.b16 %v4268
        %v4404 = vunpack.c.h.b16 %v4268
        %v4405 = vunpack.c.l.b16 %v4269
        %v4406 = vunpack.c.h.b16 %v4269
        %v4407 = vunpack.c.l.b16 %v4270
        %v4408 = vunpack.c.h.b16 %v4270
        %v4409 = vunpack.c.l.b16 %v4271
        %v4410 = vunpack.c.h.b16 %v4271
        %v4411 = vunpack.c.l.b16 %v4272
        %v4412 = vunpack.c.h.b16 %v4272
        %v4413 = vunpack.c.l.b16 %v4273
        %v4414 = vunpack.c.h.b16 %v4273
        %v4415 = vunpack.c.l.b16 %v4274
        %v4416 = vunpack.c.h.b16 %v4274
        %v4417 = vunpack.c.l.b16 %v4275
        %v4418 = vunpack.c.h.b16 %v4275
        %v4419 = vunpack.c.l.b16 %v4276
        %v4420 = vunpack.c.h.b16 %v4276
        %v4421 = vunpack.c.l.b16 %v4277
        %v4422 = vunpack.c.h.b16 %v4277
        %v4423 = vunpack.c.l.b16 %v4278
        %v4424 = vunpack.c.h.b16 %v4278
        %v4425 = vunpack.c.l.b16 %v4279
        %v4426 = vunpack.c.h.b16 %v4279
        %v4427 = vunpack.c.l.b16 %v4280
        %v4428 = vunpack.c.h.b16 %v4280
        %v4429 = vunpack.c.l.b16 %v4281
        %v4430 = vunpack.c.h.b16 %v4281
        %v4431 = vunpack.c.l.b16 %v4282
        %v4432 = vunpack.c.h.b16 %v4282
        %v4433 = vunpack.c.l.b16 %v4283
        %v4434 = vunpack.c.h.b16 %v4283
        %v4435 = vunpack.c.l.b16 %v4284
        %v4436 = vunpack.c.h.b16 %v4284
        %v4437 = vunpack.c.l.b16 %v4285
        %v4438 = vunpack.c.h.b16 %v4285
        %v4439 = vunpack.c.l.b16 %v4286
        %v4440 = vunpack.c.h.b16 %v4286
        %v4441 = vunpack.c.l.b16 %v4287
        %v4442 = vunpack.c.h.b16 %v4287
        %v4443 = vunpack.c.l.b16 %v4288
        %v4444 = vunpack.c.h.b16 %v4288
        %v4445 = vunpack.c.l.b16 %v4289
        %v4446 = vunpack.c.h.b16 %v4289
        %v4447 = vunpack.c.l.b16 %v4290
        %v4448 = vunpack.c.h.b16 %v4290
        %v4449 = vunpack.c.l.b16 %v4291
        %v4450 = vunpack.c.h.b16 %v4291
        %v4451 = vunpack.c.l.b16 %v4292
        %v4452 = vunpack.c.h.b16 %v4292
        %v4453 = vunpack.c.l.b16 %v4293
        %v4454 = vunpack.c.h.b16 %v4293
        %v4455 = vunpack.c.l.b16 %v4294
        %v4456 = vunpack.c.h.b16 %v4294
        %v4457 = vunpack.c.l.b16 %v4295
        %v4458 = vunpack.c.h.b16 %v4295
        %v4459 = vunpack.c.l.b16 %v4296
        %v4460 = vunpack.c.h.b16 %v4296
        %v4461 = vunpack.c.l.b16 %v4297
        %v4462 = vunpack.c.h.b16 %v4297
        %v4463 = vunpack.c.l.b16 %v4298
        %v4464 = vunpack.c.h.b16 %v4298
        %v4465 = vunpack.c.l.b16 %v4299
        %v4466 = vunpack.c.h.b16 %v4299
        %v4467 = vunpack.c.l.b16 %v4300
        %v4468 = vunpack.c.h.b16 %v4300
        %v4469 = vunpack.c.l.b16 %v4301
        %v4470 = vunpack.c.h.b16 %v4301
        %v4471 = vunpack.c.l.b16 %v4302
        %v4472 = vunpack.c.h.b16 %v4302
        %v4473 = vunpack.c.l.b16 %v4303
        %v4474 = vunpack.c.h.b16 %v4303
        %v4475 = vunpack.c.l.b16 %v4304
        %v4476 = vunpack.c.h.b16 %v4304
        %v4477 = vunpack.c.l.b16 %v4305
        %v4478 = vunpack.c.h.b16 %v4305
        %v4479 = vunpack.c.l.b16 %v4306
        %v4480 = vunpack.c.h.b16 %v4306
        %v4481 = vunpack.c.l.b16 %v4307
        %v4482 = vunpack.c.h.b16 %v4307
        %v4483 = vunpack.c.l.b16 %v4308
        %v4484 = vunpack.c.h.b16 %v4308
        %v4485 = vunpack.c.l.b16 %v4309
        %v4486 = vunpack.c.h.b16 %v4309
        %v4487 = vunpack.c.l.b16 %v4310
        %v4488 = vunpack.c.h.b16 %v4310
        %v4489 = vunpack.c.l.b16 %v4311
        %v4490 = vunpack.c.h.b16 %v4311
        %v4491 = vunpack.c.l.b16 %v4312
        %v4492 = vunpack.c.h.b16 %v4312
        %v4493 = vunpack.c.l.b16 %v4313
        %v4494 = vunpack.c.h.b16 %v4313
        %v4495 = vunpack.c.l.b16 %v4314
        %v4496 = vunpack.c.h.b16 %v4314
        %v4497 = vunpack.c.l.b16 %v4315
        %v4498 = vunpack.c.h.b16 %v4315
        %v4499 = vunpack.c.l.b16 %v4316
        %v4500 = vunpack.c.h.b16 %v4316
        %v4501 = vunpack.c.l.b16 %v4317
        %v4502 = vunpack.c.h.b16 %v4317
        %v4503 = vunpack.c.l.b16 %v4318
        %v4504 = vunpack.c.h.b16 %v4318
        %v4505 = vunpack.c.l.b16 %v4319
        %v4506 = vunpack.c.h.b16 %v4319
        %v4507 = vunpack.c.l.b16 %v4320
        %v4508 = vunpack.c.h.b16 %v4320
        %v4509 = vunpack.c.l.b16 %v4321
        %v4510 = vunpack.c.h.b16 %v4321
        %v4511 = vunpack.c.l.b16 %v4322
        %v4512 = vunpack.c.h.b16 %v4322
        %v4513 = vunpack.c.l.b16 %v4323
        %v4514 = vunpack.c.h.b16 %v4323
        %v4515 = vunpack.c.l.b16 %v4324
        %v4516 = vunpack.c.h.b16 %v4324
        %v4517 = vunpack.c.l.b16 %v4325
        %v4518 = vunpack.c.h.b16 %v4325
        %v4519 = vunpack.c.l.b16 %v4326
        %v4520 = vunpack.c.h.b16 %v4326
        %v4521 = vunpack.c.l.b16 %v4327
        %v4522 = vunpack.c.h.b16 %v4327
        %v4523 = vunpack.c.l.b16 %v4328
        %v4524 = vunpack.c.h.b16 %v4328
        %v4525 = vpack.c.b16 %v4405, %v4397
        %v4526 = vpack.c.b16 %v4406, %v4398
        %v4527 = vpack.c.b16 %v4407, %v4399
        %v4528 = vpack.c.b16 %v4408, %v4400
        %v4529 = vpack.c.b16 %v4409, %v4401
        %v4530 = vpack.c.b16 %v4410, %v4402
        %v4531 = vpack.c.b16 %v4411, %v4403
        %v4532 = vpack.c.b16 %v4412, %v4404
        %v4533 = vpack.c.b16 %v4421, %v4413
        %v4534 = vpack.c.b16 %v4422, %v4414
        %v4535 = vpack.c.b16 %v4423, %v4415
        %v4536 = vpack.c.b16 %v4424, %v4416
        %v4537 = vpack.c.b16 %v4425, %v4417
        %v4538 = vpack.c.b16 %v4426, %v4418
        %v4539 = vpack.c.b16 %v4427, %v4419
        %v4540 = vpack.c.b16 %v4428, %v4420
        %v4541 = vpack.c.b16 %v4437, %v4429
        %v4542 = vpack.c.b16 %v4438, %v4430
        %v4543 = vpack.c.b16 %v4439, %v4431
        %v4544 = vpack.c.b16 %v4440, %v4432
        %v4545 = vpack.c.b16 %v4441, %v4433
        %v4546 = vpack.c.b16 %v4442, %v4434
        %v4547 = vpack.c.b16 %v4443, %v4435
        %v4548 = vpack.c.b16 %v4444, %v4436
        %v4549 = vpack.c.b16 %v4453, %v4445
        %v4550 = vpack.c.b16 %v4454, %v4446
        %v4551 = vpack.c.b16 %v4455, %v4447
        %v4552 = vpack.c.b16 %v4456, %v4448
        %v4553 = vpack.c.b16 %v4457, %v4449
        %v4554 = vpack.c.b16 %v4458, %v4450
        %v4555 = vpack.c.b16 %v4459, %v4451
        %v4556 = vpack.c.b16 %v4460, %v4452
        %v4557 = vpack.c.b16 %v4469, %v4461
        %v4558 = vpack.c.b16 %v4470, %v4462
        %v4559 = vpack.c.b16 %v4471, %v4463
        %v4560 = vpack.c.b16 %v4472, %v4464
        %v4561 = vpack.c.b16 %v4473, %v4465
        %v4562 = vpack.c.b16 %v4474, %v4466
        %v4563 = vpack.c.b16 %v4475, %v4467
        %v4564 = vpack.c.b16 %v4476, %v4468
        %v4565 = vpack.c.b16 %v4485, %v4477
        %v4566 = vpack.c.b16 %v4486, %v4478
        %v4567 = vpack.c.b16 %v4487, %v4479
        %v4568 = vpack.c.b16 %v4488, %v4480
        %v4569 = vpack.c.b16 %v4489, %v4481
        %v4570 = vpack.c.b16 %v4490, %v4482
        %v4571 = vpack.c.b16 %v4491, %v4483
        %v4572 = vpack.c.b16 %v4492, %v4484
        %v4573 = vpack.c.b16 %v4501, %v4493
        %v4574 = vpack.c.b16 %v4502, %v4494
        %v4575 = vpack.c.b16 %v4503, %v4495
        %v4576 = vpack.c.b16 %v4504, %v4496
        %v4577 = vpack.c.b16 %v4505, %v4497
        %v4578 = vpack.c.b16 %v4506, %v4498
        %v4579 = vpack.c.b16 %v4507, %v4499
        %v4580 = vpack.c.b16 %v4508, %v4500
        %v4581 = vpack.c.b16 %v4517, %v4509
        %v4582 = vpack.c.b16 %v4518, %v4510
        %v4583 = vpack.c.b16 %v4519, %v4511
        %v4584 = vpack.c.b16 %v4520, %v4512
        %v4585 = vpack.c.b16 %v4521, %v4513
        %v4586 = vpack.c.b16 %v4522, %v4514
        %v4587 = vpack.c.b16 %v4523, %v4515
        %v4588 = vpack.c.b16 %v4524, %v4516
        %4653 = vmatprep.subr.bf16.mxu0 %v4582
        %4654 = vmatpush1.bf16.msra.mxu0 %v4581
        %4655 = vmatprep.subr.bf16.mxu0 %v4574
        %4656 = vmatpush1.bf16.msra.mxu0 %v4573
        %4657 = vmatprep.subr.bf16.mxu0 %v4566
        %4658 = vmatpush1.bf16.msra.mxu0 %v4565
        %4659 = vmatprep.subr.bf16.mxu0 %v4558
        %4660 = vmatpush1.bf16.msra.mxu0 %v4557
        %4661 = vmatprep.subr.bf16.mxu0 %v4550
        %4662 = vmatpush1.bf16.msra.mxu0 %v4549
        %4663 = vmatprep.subr.bf16.mxu0 %v4542
        %4664 = vmatpush1.bf16.msra.mxu0 %v4541
        %4665 = vmatprep.subr.bf16.mxu0 %v4534
        %4666 = vmatpush1.bf16.msra.mxu0 %v4533
        %4667 = vmatprep.subr.bf16.mxu0 %v4526
        %4668 = vmatpush1.bf16.msra.mxu0 %v4525
        %4669 = vmatprep.subr.bf16.mxu0 0
        %4670 = vmatpush2.bf16.msra.mxu0 0
        %4671 = vmatprep.subr.bf16.mxu0 0
        %4672 = vmatpush2.bf16.msra.mxu0 0
        %4673 = vmatprep.subr.bf16.mxu0 0
        %4674 = vmatpush2.bf16.msra.mxu0 0
        %4675 = vmatprep.subr.bf16.mxu0 0
        %4676 = vmatpush2.bf16.msra.mxu0 0
        %4677 = vmatprep.subr.bf16.mxu0 0
        %4678 = vmatpush2.bf16.msra.mxu0 0
        %4679 = vmatprep.subr.bf16.mxu0 0
        %4680 = vmatpush2.bf16.msra.mxu0 0
        %4681 = vmatprep.subr.bf16.mxu0 0
        %4682 = vmatpush2.bf16.msra.mxu0 0
        %4683 = vmatprep.subr.bf16.mxu0 0
        %4684 = vmatpush2.bf16.msra.mxu0 0
        %4685 = vmatprep.mubr.bf16.mxu0 0
        %4686 = vmatmul.mubr.bf16.gmra.mxu0 %v4329
        %v4687 = vpop.f32.mrf.mxu0
        %v4688 = vadd.f32 0.0, %v4687
        %v4689 = vpop.f32.mrf.mxu0
        %v4690 = vadd.f32 0.0, %v4689
        %v4691 = vpop.f32.mrf.mxu0
        %v4692 = vadd.f32 0.0, %v4691
        %v4693 = vpop.f32.mrf.mxu0
        %v4694 = vadd.f32 0.0, %v4693
        %4695 = vmatprep.mubr.bf16.mxu0 0
        %4696 = vmatmul.mubr.bf16.gmra.mxu0 %v4330
        %v4697 = vpop.f32.mrf.mxu0
        %v4698 = vadd.f32 0.0, %v4697
        %v4699 = vpop.f32.mrf.mxu0
        %v4700 = vadd.f32 0.0, %v4699
        %v4701 = vpop.f32.mrf.mxu0
        %v4702 = vadd.f32 0.0, %v4701
        %v4703 = vpop.f32.mrf.mxu0
        %v4704 = vadd.f32 0.0, %v4703
        %4705 = vmatprep.mubr.bf16.mxu0 0
        %4706 = vmatmul.mubr.bf16.gmra.mxu0 %v4331
        %v4707 = vpop.f32.mrf.mxu0
        %v4708 = vadd.f32 0.0, %v4707
        %v4709 = vpop.f32.mrf.mxu0
        %v4710 = vadd.f32 0.0, %v4709
        %v4711 = vpop.f32.mrf.mxu0
        %v4712 = vadd.f32 0.0, %v4711
        %v4713 = vpop.f32.mrf.mxu0
        %v4714 = vadd.f32 0.0, %v4713
        %4715 = vmatprep.mubr.bf16.mxu0 0
        %4716 = vmatmul.mubr.bf16.gmra.mxu0 %v4332
        %v4717 = vpop.f32.mrf.mxu0
        %v4718 = vadd.f32 0.0, %v4717
        %v4719 = vpop.f32.mrf.mxu0
        %v4720 = vadd.f32 0.0, %v4719
        %v4721 = vpop.f32.mrf.mxu0
        %v4722 = vadd.f32 0.0, %v4721
        %v4723 = vpop.f32.mrf.mxu0
        %v4724 = vadd.f32 0.0, %v4723
        %4725 = vdwg.mxu0
        %4726 = vmatprep.subr.bf16.mxu0 %v4584
        %4727 = vmatpush1.bf16.msra.mxu0 %v4583
        %4728 = vmatprep.subr.bf16.mxu0 %v4576
        %4729 = vmatpush1.bf16.msra.mxu0 %v4575
        %4730 = vmatprep.subr.bf16.mxu0 %v4568
        %4731 = vmatpush1.bf16.msra.mxu0 %v4567
        %4732 = vmatprep.subr.bf16.mxu0 %v4560
        %4733 = vmatpush1.bf16.msra.mxu0 %v4559
        %4734 = vmatprep.subr.bf16.mxu0 %v4552
        %4735 = vmatpush1.bf16.msra.mxu0 %v4551
        %4736 = vmatprep.subr.bf16.mxu0 %v4544
        %4737 = vmatpush1.bf16.msra.mxu0 %v4543
        %4738 = vmatprep.subr.bf16.mxu0 %v4536
        %4739 = vmatpush1.bf16.msra.mxu0 %v4535
        %4740 = vmatprep.subr.bf16.mxu0 %v4528
        %4741 = vmatpush1.bf16.msra.mxu0 %v4527
        %4742 = vmatprep.subr.bf16.mxu0 0
        %4743 = vmatpush2.bf16.msra.mxu0 0
        %4744 = vmatprep.subr.bf16.mxu0 0
        %4745 = vmatpush2.bf16.msra.mxu0 0
        %4746 = vmatprep.subr.bf16.mxu0 0
        %4747 = vmatpush2.bf16.msra.mxu0 0
        %4748 = vmatprep.subr.bf16.mxu0 0
        %4749 = vmatpush2.bf16.msra.mxu0 0
        %4750 = vmatprep.subr.bf16.mxu0 0
        %4751 = vmatpush2.bf16.msra.mxu0 0
        %4752 = vmatprep.subr.bf16.mxu0 0
        %4753 = vmatpush2.bf16.msra.mxu0 0
        %4754 = vmatprep.subr.bf16.mxu0 0
        %4755 = vmatpush2.bf16.msra.mxu0 0
        %4756 = vmatprep.subr.bf16.mxu0 0
        %4757 = vmatpush2.bf16.msra.mxu0 0
        %4758 = vmatprep.mubr.bf16.mxu0 0
        %4759 = vmatmul.mubr.bf16.gmra.mxu0 %v4329
        %v4760 = vpop.f32.mrf.mxu0
        %v4761 = vadd.f32 0.0, %v4760
        %v4762 = vpop.f32.mrf.mxu0
        %v4763 = vadd.f32 0.0, %v4762
        %v4764 = vpop.f32.mrf.mxu0
        %v4765 = vadd.f32 0.0, %v4764
        %v4766 = vpop.f32.mrf.mxu0
        %v4767 = vadd.f32 0.0, %v4766
        %4768 = vmatprep.mubr.bf16.mxu0 0
        %4769 = vmatmul.mubr.bf16.gmra.mxu0 %v4330
        %v4770 = vpop.f32.mrf.mxu0
        %v4771 = vadd.f32 0.0, %v4770
        %v4772 = vpop.f32.mrf.mxu0
        %v4773 = vadd.f32 0.0, %v4772
        %v4774 = vpop.f32.mrf.mxu0
        %v4775 = vadd.f32 0.0, %v4774
        %v4776 = vpop.f32.mrf.mxu0
        %v4777 = vadd.f32 0.0, %v4776
        %4778 = vmatprep.mubr.bf16.mxu0 0
        %4779 = vmatmul.mubr.bf16.gmra.mxu0 %v4331
        %v4780 = vpop.f32.mrf.mxu0
        %v4781 = vadd.f32 0.0, %v4780
        %v4782 = vpop.f32.mrf.mxu0
        %v4783 = vadd.f32 0.0, %v4782
        %v4784 = vpop.f32.mrf.mxu0
        %v4785 = vadd.f32 0.0, %v4784
        %v4786 = vpop.f32.mrf.mxu0
        %v4787 = vadd.f32 0.0, %v4786
        %4788 = vmatprep.mubr.bf16.mxu0 0
        %4789 = vmatmul.mubr.bf16.gmra.mxu0 %v4332
        %v4790 = vpop.f32.mrf.mxu0
        %v4791 = vadd.f32 0.0, %v4790
        %v4792 = vpop.f32.mrf.mxu0
        %v4793 = vadd.f32 0.0, %v4792
        %v4794 = vpop.f32.mrf.mxu0
        %v4795 = vadd.f32 0.0, %v4794
        %v4796 = vpop.f32.mrf.mxu0
        %v4797 = vadd.f32 0.0, %v4796
        %4798 = vdwg.mxu0
        %4799 = vmatprep.subr.bf16.mxu0 %v4586
        %4800 = vmatpush1.bf16.msra.mxu0 %v4585
        %4801 = vmatprep.subr.bf16.mxu0 %v4578
        %4802 = vmatpush1.bf16.msra.mxu0 %v4577
        %4803 = vmatprep.subr.bf16.mxu0 %v4570
        %4804 = vmatpush1.bf16.msra.mxu0 %v4569
        %4805 = vmatprep.subr.bf16.mxu0 %v4562
        %4806 = vmatpush1.bf16.msra.mxu0 %v4561
        %4807 = vmatprep.subr.bf16.mxu0 %v4554
        %4808 = vmatpush1.bf16.msra.mxu0 %v4553
        %4809 = vmatprep.subr.bf16.mxu0 %v4546
        %4810 = vmatpush1.bf16.msra.mxu0 %v4545
        %4811 = vmatprep.subr.bf16.mxu0 %v4538
        %4812 = vmatpush1.bf16.msra.mxu0 %v4537
        %4813 = vmatprep.subr.bf16.mxu0 %v4530
        %4814 = vmatpush1.bf16.msra.mxu0 %v4529
        %4815 = vmatprep.subr.bf16.mxu0 0
        %4816 = vmatpush2.bf16.msra.mxu0 0
        %4817 = vmatprep.subr.bf16.mxu0 0
        %4818 = vmatpush2.bf16.msra.mxu0 0
        %4819 = vmatprep.subr.bf16.mxu0 0
        %4820 = vmatpush2.bf16.msra.mxu0 0
        %4821 = vmatprep.subr.bf16.mxu0 0
        %4822 = vmatpush2.bf16.msra.mxu0 0
        %4823 = vmatprep.subr.bf16.mxu0 0
        %4824 = vmatpush2.bf16.msra.mxu0 0
        %4825 = vmatprep.subr.bf16.mxu0 0
        %4826 = vmatpush2.bf16.msra.mxu0 0
        %4827 = vmatprep.subr.bf16.mxu0 0
        %4828 = vmatpush2.bf16.msra.mxu0 0
        %4829 = vmatprep.subr.bf16.mxu0 0
        %4830 = vmatpush2.bf16.msra.mxu0 0
        %4831 = vmatprep.mubr.bf16.mxu0 0
        %4832 = vmatmul.mubr.bf16.gmra.mxu0 %v4329
        %v4833 = vpop.f32.mrf.mxu0
        %v4834 = vadd.f32 0.0, %v4833
        %v4835 = vpop.f32.mrf.mxu0
        %v4836 = vadd.f32 0.0, %v4835
        %v4837 = vpop.f32.mrf.mxu0
        %v4838 = vadd.f32 0.0, %v4837
        %v4839 = vpop.f32.mrf.mxu0
        %v4840 = vadd.f32 0.0, %v4839
        %4841 = vmatprep.mubr.bf16.mxu0 0
        %4842 = vmatmul.mubr.bf16.gmra.mxu0 %v4330
        %v4843 = vpop.f32.mrf.mxu0
        %v4844 = vadd.f32 0.0, %v4843
        %v4845 = vpop.f32.mrf.mxu0
        %v4846 = vadd.f32 0.0, %v4845
        %v4847 = vpop.f32.mrf.mxu0
        %v4848 = vadd.f32 0.0, %v4847
        %v4849 = vpop.f32.mrf.mxu0
        %v4850 = vadd.f32 0.0, %v4849
        %4851 = vmatprep.mubr.bf16.mxu0 0
        %4852 = vmatmul.mubr.bf16.gmra.mxu0 %v4331
        %v4853 = vpop.f32.mrf.mxu0
        %v4854 = vadd.f32 0.0, %v4853
        %v4855 = vpop.f32.mrf.mxu0
        %v4856 = vadd.f32 0.0, %v4855
        %v4857 = vpop.f32.mrf.mxu0
        %v4858 = vadd.f32 0.0, %v4857
        %v4859 = vpop.f32.mrf.mxu0
        %v4860 = vadd.f32 0.0, %v4859
        %4861 = vmatprep.mubr.bf16.mxu0 0
        %4862 = vmatmul.mubr.bf16.gmra.mxu0 %v4332
        %v4863 = vpop.f32.mrf.mxu0
        %v4864 = vadd.f32 0.0, %v4863
        %v4865 = vpop.f32.mrf.mxu0
        %v4866 = vadd.f32 0.0, %v4865
        %v4867 = vpop.f32.mrf.mxu0
        %v4868 = vadd.f32 0.0, %v4867
        %v4869 = vpop.f32.mrf.mxu0
        %v4870 = vadd.f32 0.0, %v4869
        %4871 = vdwg.mxu0
        %4872 = vmatprep.subr.bf16.mxu0 %v4588
        %4873 = vmatpush1.bf16.msra.mxu0 %v4587
        %4874 = vmatprep.subr.bf16.mxu0 %v4580
        %4875 = vmatpush1.bf16.msra.mxu0 %v4579
        %4876 = vmatprep.subr.bf16.mxu0 %v4572
        %4877 = vmatpush1.bf16.msra.mxu0 %v4571
        %4878 = vmatprep.subr.bf16.mxu0 %v4564
        %4879 = vmatpush1.bf16.msra.mxu0 %v4563
        %4880 = vmatprep.subr.bf16.mxu0 %v4556
        %4881 = vmatpush1.bf16.msra.mxu0 %v4555
        %4882 = vmatprep.subr.bf16.mxu0 %v4548
        %4883 = vmatpush1.bf16.msra.mxu0 %v4547
        %4884 = vmatprep.subr.bf16.mxu0 %v4540
        %4885 = vmatpush1.bf16.msra.mxu0 %v4539
        %4886 = vmatprep.subr.bf16.mxu0 %v4532
        %4887 = vmatpush1.bf16.msra.mxu0 %v4531
        %4888 = vmatprep.subr.bf16.mxu0 0
        %4889 = vmatpush2.bf16.msra.mxu0 0
        %4890 = vmatprep.subr.bf16.mxu0 0
        %4891 = vmatpush2.bf16.msra.mxu0 0
        %4892 = vmatprep.subr.bf16.mxu0 0
        %4893 = vmatpush2.bf16.msra.mxu0 0
        %4894 = vmatprep.subr.bf16.mxu0 0
        %4895 = vmatpush2.bf16.msra.mxu0 0
        %4896 = vmatprep.subr.bf16.mxu0 0
        %4897 = vmatpush2.bf16.msra.mxu0 0
        %4898 = vmatprep.subr.bf16.mxu0 0
        %4899 = vmatpush2.bf16.msra.mxu0 0
        %4900 = vmatprep.subr.bf16.mxu0 0
        %4901 = vmatpush2.bf16.msra.mxu0 0
        %4902 = vmatprep.subr.bf16.mxu0 0
        %4903 = vmatpush2.bf16.msra.mxu0 0
        %4904 = vmatprep.mubr.bf16.mxu0 0
        %4905 = vmatmul.mubr.bf16.gmra.mxu0 %v4329
        %v4906 = vpop.f32.mrf.mxu0
        %v4907 = vadd.f32 0.0, %v4906
        %v4908 = vpop.f32.mrf.mxu0
        %v4909 = vadd.f32 0.0, %v4908
        %v4910 = vpop.f32.mrf.mxu0
        %v4911 = vadd.f32 0.0, %v4910
        %v4912 = vpop.f32.mrf.mxu0
        %v4913 = vadd.f32 0.0, %v4912
        %4914 = vmatprep.mubr.bf16.mxu0 0
        %4915 = vmatmul.mubr.bf16.gmra.mxu0 %v4330
        %v4916 = vpop.f32.mrf.mxu0
        %v4917 = vadd.f32 0.0, %v4916
        %v4918 = vpop.f32.mrf.mxu0
        %v4919 = vadd.f32 0.0, %v4918
        %v4920 = vpop.f32.mrf.mxu0
        %v4921 = vadd.f32 0.0, %v4920
        %v4922 = vpop.f32.mrf.mxu0
        %v4923 = vadd.f32 0.0, %v4922
        %4924 = vmatprep.mubr.bf16.mxu0 0
        %4925 = vmatmul.mubr.bf16.gmra.mxu0 %v4331
        %v4926 = vpop.f32.mrf.mxu0
        %v4927 = vadd.f32 0.0, %v4926
        %v4928 = vpop.f32.mrf.mxu0
        %v4929 = vadd.f32 0.0, %v4928
        %v4930 = vpop.f32.mrf.mxu0
        %v4931 = vadd.f32 0.0, %v4930
        %v4932 = vpop.f32.mrf.mxu0
        %v4933 = vadd.f32 0.0, %v4932
        %4934 = vmatprep.mubr.bf16.mxu0 0
        %4935 = vmatmul.mubr.bf16.gmra.mxu0 %v4332
        %v4936 = vpop.f32.mrf.mxu0
        %v4937 = vadd.f32 0.0, %v4936
        %v4938 = vpop.f32.mrf.mxu0
        %v4939 = vadd.f32 0.0, %v4938
        %v4940 = vpop.f32.mrf.mxu0
        %v4941 = vadd.f32 0.0, %v4940
        %v4942 = vpop.f32.mrf.mxu0
        %v4943 = vadd.f32 0.0, %v4942
        %4944 = vdwg.mxu0
        %v4945 = vmax.f32 %v4688, 0.0
        %v4946 = vmax.f32 %v4690, 0.0
        %v4947 = vmax.f32 %v4761, 0.0
        %v4948 = vmax.f32 %v4763, 0.0
        %v4949 = vmax.f32 %v4834, 0.0
        %v4950 = vmax.f32 %v4836, 0.0
        %v4951 = vmax.f32 %v4907, 0.0
        %v4952 = vmax.f32 %v4909, 0.0
        %v4953 = vmax.f32 %v4692, 0.0
        %v4954 = vmax.f32 %v4694, 0.0
        %v4955 = vmax.f32 %v4765, 0.0
        %v4956 = vmax.f32 %v4767, 0.0
        %v4957 = vmax.f32 %v4838, 0.0
        %v4958 = vmax.f32 %v4840, 0.0
        %v4959 = vmax.f32 %v4911, 0.0
        %v4960 = vmax.f32 %v4913, 0.0
        %v4961 = vmax.f32 %v4698, 0.0
        %v4962 = vmax.f32 %v4700, 0.0
        %v4963 = vmax.f32 %v4771, 0.0
        %v4964 = vmax.f32 %v4773, 0.0
        %v4965 = vmax.f32 %v4844, 0.0
        %v4966 = vmax.f32 %v4846, 0.0
        %v4967 = vmax.f32 %v4917, 0.0
        %v4968 = vmax.f32 %v4919, 0.0
        %v4969 = vmax.f32 %v4702, 0.0
        %v4970 = vmax.f32 %v4704, 0.0
        %v4971 = vmax.f32 %v4775, 0.0
        %v4972 = vmax.f32 %v4777, 0.0
        %v4973 = vmax.f32 %v4848, 0.0
        %v4974 = vmax.f32 %v4850, 0.0
        %v4975 = vmax.f32 %v4921, 0.0
        %v4976 = vmax.f32 %v4923, 0.0
        %v4977 = vmax.f32 %v4708, 0.0
        %v4978 = vmax.f32 %v4710, 0.0
        %v4979 = vmax.f32 %v4781, 0.0
        %v4980 = vmax.f32 %v4783, 0.0
        %v4981 = vmax.f32 %v4854, 0.0
        %v4982 = vmax.f32 %v4856, 0.0
        %v4983 = vmax.f32 %v4927, 0.0
        %v4984 = vmax.f32 %v4929, 0.0
        %v4985 = vmax.f32 %v4712, 0.0
        %v4986 = vmax.f32 %v4714, 0.0
        %v4987 = vmax.f32 %v4785, 0.0
        %v4988 = vmax.f32 %v4787, 0.0
        %v4989 = vmax.f32 %v4858, 0.0
        %v4990 = vmax.f32 %v4860, 0.0
        %v4991 = vmax.f32 %v4931, 0.0
        %v4992 = vmax.f32 %v4933, 0.0
        %v4993 = vmax.f32 %v4718, 0.0
        %v4994 = vmax.f32 %v4720, 0.0
        %v4995 = vmax.f32 %v4791, 0.0
        %v4996 = vmax.f32 %v4793, 0.0
        %v4997 = vmax.f32 %v4864, 0.0
        %v4998 = vmax.f32 %v4866, 0.0
        %v4999 = vmax.f32 %v4937, 0.0
        %v5000 = vmax.f32 %v4939, 0.0
        %v5001 = vmax.f32 %v4722, 0.0
        %v5002 = vmax.f32 %v4724, 0.0
        %v5003 = vmax.f32 %v4795, 0.0
        %v5004 = vmax.f32 %v4797, 0.0
        %v5005 = vmax.f32 %v4868, 0.0
        %v5006 = vmax.f32 %v4870, 0.0
        %v5007 = vmax.f32 %v4941, 0.0
        %v5008 = vmax.f32 %v4943, 0.0
        %v5009 = vld [vmem:[#allocation13] sm:$0xff]
        %v5010 = vld [vmem:[#allocation13 + $0x8] sm:$0xff]
        %v5011 = vld [vmem:[#allocation13 + $0x10] sm:$0xff]
        %v5012 = vld [vmem:[#allocation13 + $0x18] sm:$0xff]
        %v5013 = vld [vmem:[#allocation13 + $0x20] sm:$0xff]
        %v5014 = vld [vmem:[#allocation13 + $0x28] sm:$0xff]
        %v5015 = vld [vmem:[#allocation13 + $0x30] sm:$0xff]
        %v5016 = vld [vmem:[#allocation13 + $0x38] sm:$0xff]
        %v5017 = vld [vmem:[#allocation13 + $0x40] sm:$0xff]
        %v5018 = vld [vmem:[#allocation13 + $0x48] sm:$0xff]
        %v5019 = vld [vmem:[#allocation13 + $0x50] sm:$0xff]
        %v5020 = vld [vmem:[#allocation13 + $0x58] sm:$0xff]
        %v5021 = vld [vmem:[#allocation13 + $0x60] sm:$0xff]
        %v5022 = vld [vmem:[#allocation13 + $0x68] sm:$0xff]
        %v5023 = vld [vmem:[#allocation13 + $0x70] sm:$0xff]
        %v5024 = vld [vmem:[#allocation13 + $0x78] sm:$0xff]
        %v5025 = vld [vmem:[#allocation13 + $0x80] sm:$0xff]
        %v5026 = vld [vmem:[#allocation13 + $0x88] sm:$0xff]
        %v5027 = vld [vmem:[#allocation13 + $0x90] sm:$0xff]
        %v5028 = vld [vmem:[#allocation13 + $0x98] sm:$0xff]
        %v5029 = vld [vmem:[#allocation13 + $0xa0] sm:$0xff]
        %v5030 = vld [vmem:[#allocation13 + $0xa8] sm:$0xff]
        %v5031 = vld [vmem:[#allocation13 + $0xb0] sm:$0xff]
        %v5032 = vld [vmem:[#allocation13 + $0xb8] sm:$0xff]
        %v5033 = vld [vmem:[#allocation13 + $0xc0] sm:$0xff]
        %v5034 = vld [vmem:[#allocation13 + $0xc8] sm:$0xff]
        %v5035 = vld [vmem:[#allocation13 + $0xd0] sm:$0xff]
        %v5036 = vld [vmem:[#allocation13 + $0xd8] sm:$0xff]
        %v5037 = vld [vmem:[#allocation13 + $0xe0] sm:$0xff]
        %v5038 = vld [vmem:[#allocation13 + $0xe8] sm:$0xff]
        %v5039 = vld [vmem:[#allocation13 + $0xf0] sm:$0xff]
        %v5040 = vld [vmem:[#allocation13 + $0xf8] sm:$0xff]
        %v5041 = vpack.c.bf16 %v4953, %v4945
        %v5042 = vpack.c.bf16 %v4954, %v4946
        %v5043 = vpack.c.bf16 %v4969, %v4961
        %v5044 = vpack.c.bf16 %v4970, %v4962
        %v5045 = vpack.c.bf16 %v4985, %v4977
        %v5046 = vpack.c.bf16 %v4986, %v4978
        %v5047 = vpack.c.bf16 %v5001, %v4993
        %v5048 = vpack.c.bf16 %v5002, %v4994
        %v5081 = vunpack.c.l.b16 %v5009
        %v5082 = vunpack.c.h.b16 %v5009
        %v5083 = vunpack.c.l.b16 %v5010
        %v5084 = vunpack.c.h.b16 %v5010
        %v5085 = vunpack.c.l.b16 %v5011
        %v5086 = vunpack.c.h.b16 %v5011
        %v5087 = vunpack.c.l.b16 %v5012
        %v5088 = vunpack.c.h.b16 %v5012
        %v5089 = vunpack.c.l.b16 %v5013
        %v5090 = vunpack.c.h.b16 %v5013
        %v5091 = vunpack.c.l.b16 %v5014
        %v5092 = vunpack.c.h.b16 %v5014
        %v5093 = vunpack.c.l.b16 %v5015
        %v5094 = vunpack.c.h.b16 %v5015
        %v5095 = vunpack.c.l.b16 %v5016
        %v5096 = vunpack.c.h.b16 %v5016
        %v5097 = vunpack.c.l.b16 %v5017
        %v5098 = vunpack.c.h.b16 %v5017
        %v5099 = vunpack.c.l.b16 %v5018
        %v5100 = vunpack.c.h.b16 %v5018
        %v5101 = vunpack.c.l.b16 %v5019
        %v5102 = vunpack.c.h.b16 %v5019
        %v5103 = vunpack.c.l.b16 %v5020
        %v5104 = vunpack.c.h.b16 %v5020
        %v5105 = vunpack.c.l.b16 %v5021
        %v5106 = vunpack.c.h.b16 %v5021
        %v5107 = vunpack.c.l.b16 %v5022
        %v5108 = vunpack.c.h.b16 %v5022
        %v5109 = vunpack.c.l.b16 %v5023
        %v5110 = vunpack.c.h.b16 %v5023
        %v5111 = vunpack.c.l.b16 %v5024
        %v5112 = vunpack.c.h.b16 %v5024
        %v5113 = vunpack.c.l.b16 %v5025
        %v5114 = vunpack.c.h.b16 %v5025
        %v5115 = vunpack.c.l.b16 %v5026
        %v5116 = vunpack.c.h.b16 %v5026
        %v5117 = vunpack.c.l.b16 %v5027
        %v5118 = vunpack.c.h.b16 %v5027
        %v5119 = vunpack.c.l.b16 %v5028
        %v5120 = vunpack.c.h.b16 %v5028
        %v5121 = vunpack.c.l.b16 %v5029
        %v5122 = vunpack.c.h.b16 %v5029
        %v5123 = vunpack.c.l.b16 %v5030
        %v5124 = vunpack.c.h.b16 %v5030
        %v5125 = vunpack.c.l.b16 %v5031
        %v5126 = vunpack.c.h.b16 %v5031
        %v5127 = vunpack.c.l.b16 %v5032
        %v5128 = vunpack.c.h.b16 %v5032
        %v5129 = vunpack.c.l.b16 %v5033
        %v5130 = vunpack.c.h.b16 %v5033
        %v5131 = vunpack.c.l.b16 %v5034
        %v5132 = vunpack.c.h.b16 %v5034
        %v5133 = vunpack.c.l.b16 %v5035
        %v5134 = vunpack.c.h.b16 %v5035
        %v5135 = vunpack.c.l.b16 %v5036
        %v5136 = vunpack.c.h.b16 %v5036
        %v5137 = vunpack.c.l.b16 %v5037
        %v5138 = vunpack.c.h.b16 %v5037
        %v5139 = vunpack.c.l.b16 %v5038
        %v5140 = vunpack.c.h.b16 %v5038
        %v5141 = vunpack.c.l.b16 %v5039
        %v5142 = vunpack.c.h.b16 %v5039
        %v5143 = vunpack.c.l.b16 %v5040
        %v5144 = vunpack.c.h.b16 %v5040
        %v5145 = vpack.c.b16 %v5083, %v5081
        %v5146 = vpack.c.b16 %v5084, %v5082
        %v5147 = vpack.c.b16 %v5087, %v5085
        %v5148 = vpack.c.b16 %v5088, %v5086
        %v5149 = vpack.c.b16 %v5091, %v5089
        %v5150 = vpack.c.b16 %v5092, %v5090
        %v5151 = vpack.c.b16 %v5095, %v5093
        %v5152 = vpack.c.b16 %v5096, %v5094
        %v5153 = vpack.c.b16 %v5099, %v5097
        %v5154 = vpack.c.b16 %v5100, %v5098
        %v5155 = vpack.c.b16 %v5103, %v5101
        %v5156 = vpack.c.b16 %v5104, %v5102
        %v5157 = vpack.c.b16 %v5107, %v5105
        %v5158 = vpack.c.b16 %v5108, %v5106
        %v5159 = vpack.c.b16 %v5111, %v5109
        %v5160 = vpack.c.b16 %v5112, %v5110
        %v5161 = vpack.c.b16 %v5115, %v5113
        %v5162 = vpack.c.b16 %v5116, %v5114
        %v5163 = vpack.c.b16 %v5119, %v5117
        %v5164 = vpack.c.b16 %v5120, %v5118
        %v5165 = vpack.c.b16 %v5123, %v5121
        %v5166 = vpack.c.b16 %v5124, %v5122
        %v5167 = vpack.c.b16 %v5127, %v5125
        %v5168 = vpack.c.b16 %v5128, %v5126
        %v5169 = vpack.c.b16 %v5131, %v5129
        %v5170 = vpack.c.b16 %v5132, %v5130
        %v5171 = vpack.c.b16 %v5135, %v5133
        %v5172 = vpack.c.b16 %v5136, %v5134
        %v5173 = vpack.c.b16 %v5139, %v5137
        %v5174 = vpack.c.b16 %v5140, %v5138
        %v5175 = vpack.c.b16 %v5143, %v5141
        %v5176 = vpack.c.b16 %v5144, %v5142
        %5209 = vmatprep.subr.bf16.mxu0 %v5160
        %5210 = vmatpush1.bf16.msra.mxu0 %v5159
        %5211 = vmatprep.subr.bf16.mxu0 %v5158
        %5212 = vmatpush1.bf16.msra.mxu0 %v5157
        %5213 = vmatprep.subr.bf16.mxu0 %v5156
        %5214 = vmatpush1.bf16.msra.mxu0 %v5155
        %5215 = vmatprep.subr.bf16.mxu0 %v5154
        %5216 = vmatpush1.bf16.msra.mxu0 %v5153
        %5217 = vmatprep.subr.bf16.mxu0 %v5152
        %5218 = vmatpush1.bf16.msra.mxu0 %v5151
        %5219 = vmatprep.subr.bf16.mxu0 %v5150
        %5220 = vmatpush1.bf16.msra.mxu0 %v5149
        %5221 = vmatprep.subr.bf16.mxu0 %v5148
        %5222 = vmatpush1.bf16.msra.mxu0 %v5147
        %5223 = vmatprep.subr.bf16.mxu0 %v5146
        %5224 = vmatpush1.bf16.msra.mxu0 %v5145
        %5225 = vmatprep.subr.bf16.mxu0 %v5176
        %5226 = vmatpush2.bf16.msra.mxu0 %v5175
        %5227 = vmatprep.subr.bf16.mxu0 %v5174
        %5228 = vmatpush2.bf16.msra.mxu0 %v5173
        %5229 = vmatprep.subr.bf16.mxu0 %v5172
        %5230 = vmatpush2.bf16.msra.mxu0 %v5171
        %5231 = vmatprep.subr.bf16.mxu0 %v5170
        %5232 = vmatpush2.bf16.msra.mxu0 %v5169
        %5233 = vmatprep.subr.bf16.mxu0 %v5168
        %5234 = vmatpush2.bf16.msra.mxu0 %v5167
        %5235 = vmatprep.subr.bf16.mxu0 %v5166
        %5236 = vmatpush2.bf16.msra.mxu0 %v5165
        %5237 = vmatprep.subr.bf16.mxu0 %v5164
        %5238 = vmatpush2.bf16.msra.mxu0 %v5163
        %5239 = vmatprep.subr.bf16.mxu0 %v5162
        %5240 = vmatpush2.bf16.msra.mxu0 %v5161
        %5241 = vmatprep.mubr.bf16.mxu0 %v5042
        %5242 = vmatmul.mubr.bf16.gmra.mxu0 %v5041
        %v5243 = vpop.f32.mrf.mxu0
        %v5244 = vadd.f32 0.0, %v5243
        %v5245 = vpop.f32.mrf.mxu0
        %v5246 = vadd.f32 0.0, %v5245
        %v5247 = vpop.f32.mrf.mxu0
        %v5248 = vadd.f32 0.0, %v5247
        %v5249 = vpop.f32.mrf.mxu0
        %v5250 = vadd.f32 0.0, %v5249
        %5251 = vmatprep.mubr.bf16.mxu0 %v5044
        %5252 = vmatmul.mubr.bf16.gmra.mxu0 %v5043
        %v5253 = vpop.f32.mrf.mxu0
        %v5254 = vadd.f32 0.0, %v5253
        %v5255 = vpop.f32.mrf.mxu0
        %v5256 = vadd.f32 0.0, %v5255
        %v5257 = vpop.f32.mrf.mxu0
        %v5258 = vadd.f32 0.0, %v5257
        %v5259 = vpop.f32.mrf.mxu0
        %v5260 = vadd.f32 0.0, %v5259
        %5261 = vmatprep.mubr.bf16.mxu0 %v5046
        %5262 = vmatmul.mubr.bf16.gmra.mxu0 %v5045
        %v5263 = vpop.f32.mrf.mxu0
        %v5264 = vadd.f32 0.0, %v5263
        %v5265 = vpop.f32.mrf.mxu0
        %v5266 = vadd.f32 0.0, %v5265
        %v5267 = vpop.f32.mrf.mxu0
        %v5268 = vadd.f32 0.0, %v5267
        %v5269 = vpop.f32.mrf.mxu0
        %v5270 = vadd.f32 0.0, %v5269
        %5271 = vmatprep.mubr.bf16.mxu0 %v5048
        %5272 = vmatmul.mubr.bf16.gmra.mxu0 %v5047
        %v5273 = vpop.f32.mrf.mxu0
        %v5274 = vadd.f32 0.0, %v5273
        %v5275 = vpop.f32.mrf.mxu0
        %v5276 = vadd.f32 0.0, %v5275
        %v5277 = vpop.f32.mrf.mxu0
        %v5278 = vadd.f32 0.0, %v5277
        %v5279 = vpop.f32.mrf.mxu0
        %v5280 = vadd.f32 0.0, %v5279
        %5281 = vdwg.mxu0
        %5282 = vst [vmem:[%s384] sm:$0xff] %v5244
        %5283 = vst [vmem:[%s384 + $0x8] sm:$0xff] %v5246
        %5284 = vst [vmem:[%s384 + $0x40] sm:$0xff] %v5248
        %5285 = vst [vmem:[%s384 + $0x48] sm:$0xff] %v5250
        %5286 = vst [vmem:[%s384 + $0x80] sm:$0xff] %v5254
        %5287 = vst [vmem:[%s384 + $0x88] sm:$0xff] %v5256
        %5288 = vst [vmem:[%s384 + $0xc0] sm:$0xff] %v5258
        %5289 = vst [vmem:[%s384 + $0xc8] sm:$0xff] %v5260
        %5290 = vst [vmem:[%s384 + $0x100] sm:$0xff] %v5264
        %5291 = vst [vmem:[%s384 + $0x108] sm:$0xff] %v5266
        %5292 = vst [vmem:[%s384 + $0x140] sm:$0xff] %v5268
        %5293 = vst [vmem:[%s384 + $0x148] sm:$0xff] %v5270
        %5294 = vst [vmem:[%s384 + $0x180] sm:$0xff] %v5274
        %5295 = vst [vmem:[%s384 + $0x188] sm:$0xff] %v5276
        %5296 = vst [vmem:[%s384 + $0x1c0] sm:$0xff] %v5278
        %5297 = vst [vmem:[%s384 + $0x1c8] sm:$0xff] %v5280
        %v5298 = vld [vmem:[#allocation13] sm:$0xff]
        %v5299 = vld [vmem:[#allocation13 + $0x8] sm:$0xff]
        %v5300 = vld [vmem:[#allocation13 + $0x10] sm:$0xff]
        %v5301 = vld [vmem:[#allocation13 + $0x18] sm:$0xff]
        %v5302 = vld [vmem:[#allocation13 + $0x20] sm:$0xff]
        %v5303 = vld [vmem:[#allocation13 + $0x28] sm:$0xff]
        %v5304 = vld [vmem:[#allocation13 + $0x30] sm:$0xff]
        %v5305 = vld [vmem:[#allocation13 + $0x38] sm:$0xff]
        %v5306 = vld [vmem:[#allocation13 + $0x40] sm:$0xff]
        %v5307 = vld [vmem:[#allocation13 + $0x48] sm:$0xff]
        %v5308 = vld [vmem:[#allocation13 + $0x50] sm:$0xff]
        %v5309 = vld [vmem:[#allocation13 + $0x58] sm:$0xff]
        %v5310 = vld [vmem:[#allocation13 + $0x60] sm:$0xff]
        %v5311 = vld [vmem:[#allocation13 + $0x68] sm:$0xff]
        %v5312 = vld [vmem:[#allocation13 + $0x70] sm:$0xff]
        %v5313 = vld [vmem:[#allocation13 + $0x78] sm:$0xff]
        %v5314 = vld [vmem:[#allocation13 + $0x80] sm:$0xff]
        %v5315 = vld [vmem:[#allocation13 + $0x88] sm:$0xff]
        %v5316 = vld [vmem:[#allocation13 + $0x90] sm:$0xff]
        %v5317 = vld [vmem:[#allocation13 + $0x98] sm:$0xff]
        %v5318 = vld [vmem:[#allocation13 + $0xa0] sm:$0xff]
        %v5319 = vld [vmem:[#allocation13 + $0xa8] sm:$0xff]
        %v5320 = vld [vmem:[#allocation13 + $0xb0] sm:$0xff]
        %v5321 = vld [vmem:[#allocation13 + $0xb8] sm:$0xff]
        %v5322 = vld [vmem:[#allocation13 + $0xc0] sm:$0xff]
        %v5323 = vld [vmem:[#allocation13 + $0xc8] sm:$0xff]
        %v5324 = vld [vmem:[#allocation13 + $0xd0] sm:$0xff]
        %v5325 = vld [vmem:[#allocation13 + $0xd8] sm:$0xff]
        %v5326 = vld [vmem:[#allocation13 + $0xe0] sm:$0xff]
        %v5327 = vld [vmem:[#allocation13 + $0xe8] sm:$0xff]
        %v5328 = vld [vmem:[#allocation13 + $0xf0] sm:$0xff]
        %v5329 = vld [vmem:[#allocation13 + $0xf8] sm:$0xff]
        %v5330 = vpack.c.bf16 %v4955, %v4947
        %v5331 = vpack.c.bf16 %v4956, %v4948
        %v5332 = vpack.c.bf16 %v4971, %v4963
        %v5333 = vpack.c.bf16 %v4972, %v4964
        %v5334 = vpack.c.bf16 %v4987, %v4979
        %v5335 = vpack.c.bf16 %v4988, %v4980
        %v5336 = vpack.c.bf16 %v5003, %v4995
        %v5337 = vpack.c.bf16 %v5004, %v4996
        %v5370 = vunpack.c.l.b16 %v5298
        %v5371 = vunpack.c.h.b16 %v5298
        %v5372 = vunpack.c.l.b16 %v5299
        %v5373 = vunpack.c.h.b16 %v5299
        %v5374 = vunpack.c.l.b16 %v5300
        %v5375 = vunpack.c.h.b16 %v5300
        %v5376 = vunpack.c.l.b16 %v5301
        %v5377 = vunpack.c.h.b16 %v5301
        %v5378 = vunpack.c.l.b16 %v5302
        %v5379 = vunpack.c.h.b16 %v5302
        %v5380 = vunpack.c.l.b16 %v5303
        %v5381 = vunpack.c.h.b16 %v5303
        %v5382 = vunpack.c.l.b16 %v5304
        %v5383 = vunpack.c.h.b16 %v5304
        %v5384 = vunpack.c.l.b16 %v5305
        %v5385 = vunpack.c.h.b16 %v5305
        %v5386 = vunpack.c.l.b16 %v5306
        %v5387 = vunpack.c.h.b16 %v5306
        %v5388 = vunpack.c.l.b16 %v5307
        %v5389 = vunpack.c.h.b16 %v5307
        %v5390 = vunpack.c.l.b16 %v5308
        %v5391 = vunpack.c.h.b16 %v5308
        %v5392 = vunpack.c.l.b16 %v5309
        %v5393 = vunpack.c.h.b16 %v5309
        %v5394 = vunpack.c.l.b16 %v5310
        %v5395 = vunpack.c.h.b16 %v5310
        %v5396 = vunpack.c.l.b16 %v5311
        %v5397 = vunpack.c.h.b16 %v5311
        %v5398 = vunpack.c.l.b16 %v5312
        %v5399 = vunpack.c.h.b16 %v5312
        %v5400 = vunpack.c.l.b16 %v5313
        %v5401 = vunpack.c.h.b16 %v5313
        %v5402 = vunpack.c.l.b16 %v5314
        %v5403 = vunpack.c.h.b16 %v5314
        %v5404 = vunpack.c.l.b16 %v5315
        %v5405 = vunpack.c.h.b16 %v5315
        %v5406 = vunpack.c.l.b16 %v5316
        %v5407 = vunpack.c.h.b16 %v5316
        %v5408 = vunpack.c.l.b16 %v5317
        %v5409 = vunpack.c.h.b16 %v5317
        %v5410 = vunpack.c.l.b16 %v5318
        %v5411 = vunpack.c.h.b16 %v5318
        %v5412 = vunpack.c.l.b16 %v5319
        %v5413 = vunpack.c.h.b16 %v5319
        %v5414 = vunpack.c.l.b16 %v5320
        %v5415 = vunpack.c.h.b16 %v5320
        %v5416 = vunpack.c.l.b16 %v5321
        %v5417 = vunpack.c.h.b16 %v5321
        %v5418 = vunpack.c.l.b16 %v5322
        %v5419 = vunpack.c.h.b16 %v5322
        %v5420 = vunpack.c.l.b16 %v5323
        %v5421 = vunpack.c.h.b16 %v5323
        %v5422 = vunpack.c.l.b16 %v5324
        %v5423 = vunpack.c.h.b16 %v5324
        %v5424 = vunpack.c.l.b16 %v5325
        %v5425 = vunpack.c.h.b16 %v5325
        %v5426 = vunpack.c.l.b16 %v5326
        %v5427 = vunpack.c.h.b16 %v5326
        %v5428 = vunpack.c.l.b16 %v5327
        %v5429 = vunpack.c.h.b16 %v5327
        %v5430 = vunpack.c.l.b16 %v5328
        %v5431 = vunpack.c.h.b16 %v5328
        %v5432 = vunpack.c.l.b16 %v5329
        %v5433 = vunpack.c.h.b16 %v5329
        %v5434 = vpack.c.b16 %v5372, %v5370
        %v5435 = vpack.c.b16 %v5373, %v5371
        %v5436 = vpack.c.b16 %v5376, %v5374
        %v5437 = vpack.c.b16 %v5377, %v5375
        %v5438 = vpack.c.b16 %v5380, %v5378
        %v5439 = vpack.c.b16 %v5381, %v5379
        %v5440 = vpack.c.b16 %v5384, %v5382
        %v5441 = vpack.c.b16 %v5385, %v5383
        %v5442 = vpack.c.b16 %v5388, %v5386
        %v5443 = vpack.c.b16 %v5389, %v5387
        %v5444 = vpack.c.b16 %v5392, %v5390
        %v5445 = vpack.c.b16 %v5393, %v5391
        %v5446 = vpack.c.b16 %v5396, %v5394
        %v5447 = vpack.c.b16 %v5397, %v5395
        %v5448 = vpack.c.b16 %v5400, %v5398
        %v5449 = vpack.c.b16 %v5401, %v5399
        %v5450 = vpack.c.b16 %v5404, %v5402
        %v5451 = vpack.c.b16 %v5405, %v5403
        %v5452 = vpack.c.b16 %v5408, %v5406
        %v5453 = vpack.c.b16 %v5409, %v5407
        %v5454 = vpack.c.b16 %v5412, %v5410
        %v5455 = vpack.c.b16 %v5413, %v5411
        %v5456 = vpack.c.b16 %v5416, %v5414
        %v5457 = vpack.c.b16 %v5417, %v5415
        %v5458 = vpack.c.b16 %v5420, %v5418
        %v5459 = vpack.c.b16 %v5421, %v5419
        %v5460 = vpack.c.b16 %v5424, %v5422
        %v5461 = vpack.c.b16 %v5425, %v5423
        %v5462 = vpack.c.b16 %v5428, %v5426
        %v5463 = vpack.c.b16 %v5429, %v5427
        %v5464 = vpack.c.b16 %v5432, %v5430
        %v5465 = vpack.c.b16 %v5433, %v5431
        %5498 = vmatprep.subr.bf16.mxu0 %v5449
        %5499 = vmatpush1.bf16.msra.mxu0 %v5448
        %5500 = vmatprep.subr.bf16.mxu0 %v5447
        %5501 = vmatpush1.bf16.msra.mxu0 %v5446
        %5502 = vmatprep.subr.bf16.mxu0 %v5445
        %5503 = vmatpush1.bf16.msra.mxu0 %v5444
        %5504 = vmatprep.subr.bf16.mxu0 %v5443
        %5505 = vmatpush1.bf16.msra.mxu0 %v5442
        %5506 = vmatprep.subr.bf16.mxu0 %v5441
        %5507 = vmatpush1.bf16.msra.mxu0 %v5440
        %5508 = vmatprep.subr.bf16.mxu0 %v5439
        %5509 = vmatpush1.bf16.msra.mxu0 %v5438
        %5510 = vmatprep.subr.bf16.mxu0 %v5437
        %5511 = vmatpush1.bf16.msra.mxu0 %v5436
        %5512 = vmatprep.subr.bf16.mxu0 %v5435
        %5513 = vmatpush1.bf16.msra.mxu0 %v5434
        %5514 = vmatprep.subr.bf16.mxu0 %v5465
        %5515 = vmatpush2.bf16.msra.mxu0 %v5464
        %5516 = vmatprep.subr.bf16.mxu0 %v5463
        %5517 = vmatpush2.bf16.msra.mxu0 %v5462
        %5518 = vmatprep.subr.bf16.mxu0 %v5461
        %5519 = vmatpush2.bf16.msra.mxu0 %v5460
        %5520 = vmatprep.subr.bf16.mxu0 %v5459
        %5521 = vmatpush2.bf16.msra.mxu0 %v5458
        %5522 = vmatprep.subr.bf16.mxu0 %v5457
        %5523 = vmatpush2.bf16.msra.mxu0 %v5456
        %5524 = vmatprep.subr.bf16.mxu0 %v5455
        %5525 = vmatpush2.bf16.msra.mxu0 %v5454
        %5526 = vmatprep.subr.bf16.mxu0 %v5453
        %5527 = vmatpush2.bf16.msra.mxu0 %v5452
        %5528 = vmatprep.subr.bf16.mxu0 %v5451
        %5529 = vmatpush2.bf16.msra.mxu0 %v5450
        %5530 = vmatprep.mubr.bf16.mxu0 %v5331
        %5531 = vmatmul.mubr.bf16.gmra.mxu0 %v5330
        %v5532 = vpop.f32.mrf.mxu0
        %v5533 = vadd.f32 0.0, %v5532
        %v5534 = vpop.f32.mrf.mxu0
        %v5535 = vadd.f32 0.0, %v5534
        %v5536 = vpop.f32.mrf.mxu0
        %v5537 = vadd.f32 0.0, %v5536
        %v5538 = vpop.f32.mrf.mxu0
        %v5539 = vadd.f32 0.0, %v5538
        %5540 = vmatprep.mubr.bf16.mxu0 %v5333
        %5541 = vmatmul.mubr.bf16.gmra.mxu0 %v5332
        %v5542 = vpop.f32.mrf.mxu0
        %v5543 = vadd.f32 0.0, %v5542
        %v5544 = vpop.f32.mrf.mxu0
        %v5545 = vadd.f32 0.0, %v5544
        %v5546 = vpop.f32.mrf.mxu0
        %v5547 = vadd.f32 0.0, %v5546
        %v5548 = vpop.f32.mrf.mxu0
        %v5549 = vadd.f32 0.0, %v5548
        %5550 = vmatprep.mubr.bf16.mxu0 %v5335
        %5551 = vmatmul.mubr.bf16.gmra.mxu0 %v5334
        %v5552 = vpop.f32.mrf.mxu0
        %v5553 = vadd.f32 0.0, %v5552
        %v5554 = vpop.f32.mrf.mxu0
        %v5555 = vadd.f32 0.0, %v5554
        %v5556 = vpop.f32.mrf.mxu0
        %v5557 = vadd.f32 0.0, %v5556
        %v5558 = vpop.f32.mrf.mxu0
        %v5559 = vadd.f32 0.0, %v5558
        %5560 = vmatprep.mubr.bf16.mxu0 %v5337
        %5561 = vmatmul.mubr.bf16.gmra.mxu0 %v5336
        %v5562 = vpop.f32.mrf.mxu0
        %v5563 = vadd.f32 0.0, %v5562
        %v5564 = vpop.f32.mrf.mxu0
        %v5565 = vadd.f32 0.0, %v5564
        %v5566 = vpop.f32.mrf.mxu0
        %v5567 = vadd.f32 0.0, %v5566
        %v5568 = vpop.f32.mrf.mxu0
        %v5569 = vadd.f32 0.0, %v5568
        %5570 = vdwg.mxu0
        %5571 = vst [vmem:[%s384 + $0x10] sm:$0xff] %v5533
        %5572 = vst [vmem:[%s384 + $0x18] sm:$0xff] %v5535
        %5573 = vst [vmem:[%s384 + $0x50] sm:$0xff] %v5537
        %5574 = vst [vmem:[%s384 + $0x58] sm:$0xff] %v5539
        %5575 = vst [vmem:[%s384 + $0x90] sm:$0xff] %v5543
        %5576 = vst [vmem:[%s384 + $0x98] sm:$0xff] %v5545
        %5577 = vst [vmem:[%s384 + $0xd0] sm:$0xff] %v5547
        %5578 = vst [vmem:[%s384 + $0xd8] sm:$0xff] %v5549
        %5579 = vst [vmem:[%s384 + $0x110] sm:$0xff] %v5553
        %5580 = vst [vmem:[%s384 + $0x118] sm:$0xff] %v5555
        %5581 = vst [vmem:[%s384 + $0x150] sm:$0xff] %v5557
        %5582 = vst [vmem:[%s384 + $0x158] sm:$0xff] %v5559
        %5583 = vst [vmem:[%s384 + $0x190] sm:$0xff] %v5563
        %5584 = vst [vmem:[%s384 + $0x198] sm:$0xff] %v5565
        %5585 = vst [vmem:[%s384 + $0x1d0] sm:$0xff] %v5567
        %5586 = vst [vmem:[%s384 + $0x1d8] sm:$0xff] %v5569
        %v5587 = vld [vmem:[#allocation13] sm:$0xff]
        %v5588 = vld [vmem:[#allocation13 + $0x8] sm:$0xff]
        %v5589 = vld [vmem:[#allocation13 + $0x10] sm:$0xff]
        %v5590 = vld [vmem:[#allocation13 + $0x18] sm:$0xff]
        %v5591 = vld [vmem:[#allocation13 + $0x20] sm:$0xff]
        %v5592 = vld [vmem:[#allocation13 + $0x28] sm:$0xff]
        %v5593 = vld [vmem:[#allocation13 + $0x30] sm:$0xff]
        %v5594 = vld [vmem:[#allocation13 + $0x38] sm:$0xff]
        %v5595 = vld [vmem:[#allocation13 + $0x40] sm:$0xff]
        %v5596 = vld [vmem:[#allocation13 + $0x48] sm:$0xff]
        %v5597 = vld [vmem:[#allocation13 + $0x50] sm:$0xff]
        %v5598 = vld [vmem:[#allocation13 + $0x58] sm:$0xff]
        %v5599 = vld [vmem:[#allocation13 + $0x60] sm:$0xff]
        %v5600 = vld [vmem:[#allocation13 + $0x68] sm:$0xff]
        %v5601 = vld [vmem:[#allocation13 + $0x70] sm:$0xff]
        %v5602 = vld [vmem:[#allocation13 + $0x78] sm:$0xff]
        %v5603 = vld [vmem:[#allocation13 + $0x80] sm:$0xff]
        %v5604 = vld [vmem:[#allocation13 + $0x88] sm:$0xff]
        %v5605 = vld [vmem:[#allocation13 + $0x90] sm:$0xff]
        %v5606 = vld [vmem:[#allocation13 + $0x98] sm:$0xff]
        %v5607 = vld [vmem:[#allocation13 + $0xa0] sm:$0xff]
        %v5608 = vld [vmem:[#allocation13 + $0xa8] sm:$0xff]
        %v5609 = vld [vmem:[#allocation13 + $0xb0] sm:$0xff]
        %v5610 = vld [vmem:[#allocation13 + $0xb8] sm:$0xff]
        %v5611 = vld [vmem:[#allocation13 + $0xc0] sm:$0xff]
        %v5612 = vld [vmem:[#allocation13 + $0xc8] sm:$0xff]
        %v5613 = vld [vmem:[#allocation13 + $0xd0] sm:$0xff]
        %v5614 = vld [vmem:[#allocation13 + $0xd8] sm:$0xff]
        %v5615 = vld [vmem:[#allocation13 + $0xe0] sm:$0xff]
        %v5616 = vld [vmem:[#allocation13 + $0xe8] sm:$0xff]
        %v5617 = vld [vmem:[#allocation13 + $0xf0] sm:$0xff]
        %v5618 = vld [vmem:[#allocation13 + $0xf8] sm:$0xff]
        %v5619 = vpack.c.bf16 %v4957, %v4949
        %v5620 = vpack.c.bf16 %v4958, %v4950
        %v5621 = vpack.c.bf16 %v4973, %v4965
        %v5622 = vpack.c.bf16 %v4974, %v4966
        %v5623 = vpack.c.bf16 %v4989, %v4981
        %v5624 = vpack.c.bf16 %v4990, %v4982
        %v5625 = vpack.c.bf16 %v5005, %v4997
        %v5626 = vpack.c.bf16 %v5006, %v4998
        %v5659 = vunpack.c.l.b16 %v5587
        %v5660 = vunpack.c.h.b16 %v5587
        %v5661 = vunpack.c.l.b16 %v5588
        %v5662 = vunpack.c.h.b16 %v5588
        %v5663 = vunpack.c.l.b16 %v5589
        %v5664 = vunpack.c.h.b16 %v5589
        %v5665 = vunpack.c.l.b16 %v5590
        %v5666 = vunpack.c.h.b16 %v5590
        %v5667 = vunpack.c.l.b16 %v5591
        %v5668 = vunpack.c.h.b16 %v5591
        %v5669 = vunpack.c.l.b16 %v5592
        %v5670 = vunpack.c.h.b16 %v5592
        %v5671 = vunpack.c.l.b16 %v5593
        %v5672 = vunpack.c.h.b16 %v5593
        %v5673 = vunpack.c.l.b16 %v5594
        %v5674 = vunpack.c.h.b16 %v5594
        %v5675 = vunpack.c.l.b16 %v5595
        %v5676 = vunpack.c.h.b16 %v5595
        %v5677 = vunpack.c.l.b16 %v5596
        %v5678 = vunpack.c.h.b16 %v5596
        %v5679 = vunpack.c.l.b16 %v5597
        %v5680 = vunpack.c.h.b16 %v5597
        %v5681 = vunpack.c.l.b16 %v5598
        %v5682 = vunpack.c.h.b16 %v5598
        %v5683 = vunpack.c.l.b16 %v5599
        %v5684 = vunpack.c.h.b16 %v5599
        %v5685 = vunpack.c.l.b16 %v5600
        %v5686 = vunpack.c.h.b16 %v5600
        %v5687 = vunpack.c.l.b16 %v5601
        %v5688 = vunpack.c.h.b16 %v5601
        %v5689 = vunpack.c.l.b16 %v5602
        %v5690 = vunpack.c.h.b16 %v5602
        %v5691 = vunpack.c.l.b16 %v5603
        %v5692 = vunpack.c.h.b16 %v5603
        %v5693 = vunpack.c.l.b16 %v5604
        %v5694 = vunpack.c.h.b16 %v5604
        %v5695 = vunpack.c.l.b16 %v5605
        %v5696 = vunpack.c.h.b16 %v5605
        %v5697 = vunpack.c.l.b16 %v5606
        %v5698 = vunpack.c.h.b16 %v5606
        %v5699 = vunpack.c.l.b16 %v5607
        %v5700 = vunpack.c.h.b16 %v5607
        %v5701 = vunpack.c.l.b16 %v5608
        %v5702 = vunpack.c.h.b16 %v5608
        %v5703 = vunpack.c.l.b16 %v5609
        %v5704 = vunpack.c.h.b16 %v5609
        %v5705 = vunpack.c.l.b16 %v5610
        %v5706 = vunpack.c.h.b16 %v5610
        %v5707 = vunpack.c.l.b16 %v5611
        %v5708 = vunpack.c.h.b16 %v5611
        %v5709 = vunpack.c.l.b16 %v5612
        %v5710 = vunpack.c.h.b16 %v5612
        %v5711 = vunpack.c.l.b16 %v5613
        %v5712 = vunpack.c.h.b16 %v5613
        %v5713 = vunpack.c.l.b16 %v5614
        %v5714 = vunpack.c.h.b16 %v5614
        %v5715 = vunpack.c.l.b16 %v5615
        %v5716 = vunpack.c.h.b16 %v5615
        %v5717 = vunpack.c.l.b16 %v5616
        %v5718 = vunpack.c.h.b16 %v5616
        %v5719 = vunpack.c.l.b16 %v5617
        %v5720 = vunpack.c.h.b16 %v5617
        %v5721 = vunpack.c.l.b16 %v5618
        %v5722 = vunpack.c.h.b16 %v5618
        %v5723 = vpack.c.b16 %v5661, %v5659
        %v5724 = vpack.c.b16 %v5662, %v5660
        %v5725 = vpack.c.b16 %v5665, %v5663
        %v5726 = vpack.c.b16 %v5666, %v5664
        %v5727 = vpack.c.b16 %v5669, %v5667
        %v5728 = vpack.c.b16 %v5670, %v5668
        %v5729 = vpack.c.b16 %v5673, %v5671
        %v5730 = vpack.c.b16 %v5674, %v5672
        %v5731 = vpack.c.b16 %v5677, %v5675
        %v5732 = vpack.c.b16 %v5678, %v5676
        %v5733 = vpack.c.b16 %v5681, %v5679
        %v5734 = vpack.c.b16 %v5682, %v5680
        %v5735 = vpack.c.b16 %v5685, %v5683
        %v5736 = vpack.c.b16 %v5686, %v5684
        %v5737 = vpack.c.b16 %v5689, %v5687
        %v5738 = vpack.c.b16 %v5690, %v5688
        %v5739 = vpack.c.b16 %v5693, %v5691
        %v5740 = vpack.c.b16 %v5694, %v5692
        %v5741 = vpack.c.b16 %v5697, %v5695
        %v5742 = vpack.c.b16 %v5698, %v5696
        %v5743 = vpack.c.b16 %v5701, %v5699
        %v5744 = vpack.c.b16 %v5702, %v5700
        %v5745 = vpack.c.b16 %v5705, %v5703
        %v5746 = vpack.c.b16 %v5706, %v5704
        %v5747 = vpack.c.b16 %v5709, %v5707
        %v5748 = vpack.c.b16 %v5710, %v5708
        %v5749 = vpack.c.b16 %v5713, %v5711
        %v5750 = vpack.c.b16 %v5714, %v5712
        %v5751 = vpack.c.b16 %v5717, %v5715
        %v5752 = vpack.c.b16 %v5718, %v5716
        %v5753 = vpack.c.b16 %v5721, %v5719
        %v5754 = vpack.c.b16 %v5722, %v5720
        %5787 = vmatprep.subr.bf16.mxu0 %v5738
        %5788 = vmatpush1.bf16.msra.mxu0 %v5737
        %5789 = vmatprep.subr.bf16.mxu0 %v5736
        %5790 = vmatpush1.bf16.msra.mxu0 %v5735
        %5791 = vmatprep.subr.bf16.mxu0 %v5734
        %5792 = vmatpush1.bf16.msra.mxu0 %v5733
        %5793 = vmatprep.subr.bf16.mxu0 %v5732
        %5794 = vmatpush1.bf16.msra.mxu0 %v5731
        %5795 = vmatprep.subr.bf16.mxu0 %v5730
        %5796 = vmatpush1.bf16.msra.mxu0 %v5729
        %5797 = vmatprep.subr.bf16.mxu0 %v5728
        %5798 = vmatpush1.bf16.msra.mxu0 %v5727
        %5799 = vmatprep.subr.bf16.mxu0 %v5726
        %5800 = vmatpush1.bf16.msra.mxu0 %v5725
        %5801 = vmatprep.subr.bf16.mxu0 %v5724
        %5802 = vmatpush1.bf16.msra.mxu0 %v5723
        %5803 = vmatprep.subr.bf16.mxu0 %v5754
        %5804 = vmatpush2.bf16.msra.mxu0 %v5753
        %5805 = vmatprep.subr.bf16.mxu0 %v5752
        %5806 = vmatpush2.bf16.msra.mxu0 %v5751
        %5807 = vmatprep.subr.bf16.mxu0 %v5750
        %5808 = vmatpush2.bf16.msra.mxu0 %v5749
        %5809 = vmatprep.subr.bf16.mxu0 %v5748
        %5810 = vmatpush2.bf16.msra.mxu0 %v5747
        %5811 = vmatprep.subr.bf16.mxu0 %v5746
        %5812 = vmatpush2.bf16.msra.mxu0 %v5745
        %5813 = vmatprep.subr.bf16.mxu0 %v5744
        %5814 = vmatpush2.bf16.msra.mxu0 %v5743
        %5815 = vmatprep.subr.bf16.mxu0 %v5742
        %5816 = vmatpush2.bf16.msra.mxu0 %v5741
        %5817 = vmatprep.subr.bf16.mxu0 %v5740
        %5818 = vmatpush2.bf16.msra.mxu0 %v5739
        %5819 = vmatprep.mubr.bf16.mxu0 %v5620
        %5820 = vmatmul.mubr.bf16.gmra.mxu0 %v5619
        %v5821 = vpop.f32.mrf.mxu0
        %v5822 = vadd.f32 0.0, %v5821
        %v5823 = vpop.f32.mrf.mxu0
        %v5824 = vadd.f32 0.0, %v5823
        %v5825 = vpop.f32.mrf.mxu0
        %v5826 = vadd.f32 0.0, %v5825
        %v5827 = vpop.f32.mrf.mxu0
        %v5828 = vadd.f32 0.0, %v5827
        %5829 = vmatprep.mubr.bf16.mxu0 %v5622
        %5830 = vmatmul.mubr.bf16.gmra.mxu0 %v5621
        %v5831 = vpop.f32.mrf.mxu0
        %v5832 = vadd.f32 0.0, %v5831
        %v5833 = vpop.f32.mrf.mxu0
        %v5834 = vadd.f32 0.0, %v5833
        %v5835 = vpop.f32.mrf.mxu0
        %v5836 = vadd.f32 0.0, %v5835
        %v5837 = vpop.f32.mrf.mxu0
        %v5838 = vadd.f32 0.0, %v5837
        %5839 = vmatprep.mubr.bf16.mxu0 %v5624
        %5840 = vmatmul.mubr.bf16.gmra.mxu0 %v5623
        %v5841 = vpop.f32.mrf.mxu0
        %v5842 = vadd.f32 0.0, %v5841
        %v5843 = vpop.f32.mrf.mxu0
        %v5844 = vadd.f32 0.0, %v5843
        %v5845 = vpop.f32.mrf.mxu0
        %v5846 = vadd.f32 0.0, %v5845
        %v5847 = vpop.f32.mrf.mxu0
        %v5848 = vadd.f32 0.0, %v5847
        %5849 = vmatprep.mubr.bf16.mxu0 %v5626
        %5850 = vmatmul.mubr.bf16.gmra.mxu0 %v5625
        %v5851 = vpop.f32.mrf.mxu0
        %v5852 = vadd.f32 0.0, %v5851
        %v5853 = vpop.f32.mrf.mxu0
        %v5854 = vadd.f32 0.0, %v5853
        %v5855 = vpop.f32.mrf.mxu0
        %v5856 = vadd.f32 0.0, %v5855
        %v5857 = vpop.f32.mrf.mxu0
        %v5858 = vadd.f32 0.0, %v5857
        %5859 = vdwg.mxu0
        %5860 = vst [vmem:[%s384 + $0x20] sm:$0xff] %v5822
        %5861 = vst [vmem:[%s384 + $0x28] sm:$0xff] %v5824
        %5862 = vst [vmem:[%s384 + $0x60] sm:$0xff] %v5826
        %5863 = vst [vmem:[%s384 + $0x68] sm:$0xff] %v5828
        %5864 = vst [vmem:[%s384 + $0xa0] sm:$0xff] %v5832
        %5865 = vst [vmem:[%s384 + $0xa8] sm:$0xff] %v5834
        %5866 = vst [vmem:[%s384 + $0xe0] sm:$0xff] %v5836
        %5867 = vst [vmem:[%s384 + $0xe8] sm:$0xff] %v5838
        %5868 = vst [vmem:[%s384 + $0x120] sm:$0xff] %v5842
        %5869 = vst [vmem:[%s384 + $0x128] sm:$0xff] %v5844
        %5870 = vst [vmem:[%s384 + $0x160] sm:$0xff] %v5846
        %5871 = vst [vmem:[%s384 + $0x168] sm:$0xff] %v5848
        %5872 = vst [vmem:[%s384 + $0x1a0] sm:$0xff] %v5852
        %5873 = vst [vmem:[%s384 + $0x1a8] sm:$0xff] %v5854
        %5874 = vst [vmem:[%s384 + $0x1e0] sm:$0xff] %v5856
        %5875 = vst [vmem:[%s384 + $0x1e8] sm:$0xff] %v5858
        %v5876 = vld [vmem:[#allocation13] sm:$0xff]
        %v5877 = vld [vmem:[#allocation13 + $0x8] sm:$0xff]
        %v5878 = vld [vmem:[#allocation13 + $0x10] sm:$0xff]
        %v5879 = vld [vmem:[#allocation13 + $0x18] sm:$0xff]
        %v5880 = vld [vmem:[#allocation13 + $0x20] sm:$0xff]
        %v5881 = vld [vmem:[#allocation13 + $0x28] sm:$0xff]
        %v5882 = vld [vmem:[#allocation13 + $0x30] sm:$0xff]
        %v5883 = vld [vmem:[#allocation13 + $0x38] sm:$0xff]
        %v5884 = vld [vmem:[#allocation13 + $0x40] sm:$0xff]
        %v5885 = vld [vmem:[#allocation13 + $0x48] sm:$0xff]
        %v5886 = vld [vmem:[#allocation13 + $0x50] sm:$0xff]
        %v5887 = vld [vmem:[#allocation13 + $0x58] sm:$0xff]
        %v5888 = vld [vmem:[#allocation13 + $0x60] sm:$0xff]
        %v5889 = vld [vmem:[#allocation13 + $0x68] sm:$0xff]
        %v5890 = vld [vmem:[#allocation13 + $0x70] sm:$0xff]
        %v5891 = vld [vmem:[#allocation13 + $0x78] sm:$0xff]
        %v5892 = vld [vmem:[#allocation13 + $0x80] sm:$0xff]
        %v5893 = vld [vmem:[#allocation13 + $0x88] sm:$0xff]
        %v5894 = vld [vmem:[#allocation13 + $0x90] sm:$0xff]
        %v5895 = vld [vmem:[#allocation13 + $0x98] sm:$0xff]
        %v5896 = vld [vmem:[#allocation13 + $0xa0] sm:$0xff]
        %v5897 = vld [vmem:[#allocation13 + $0xa8] sm:$0xff]
        %v5898 = vld [vmem:[#allocation13 + $0xb0] sm:$0xff]
        %v5899 = vld [vmem:[#allocation13 + $0xb8] sm:$0xff]
        %v5900 = vld [vmem:[#allocation13 + $0xc0] sm:$0xff]
        %v5901 = vld [vmem:[#allocation13 + $0xc8] sm:$0xff]
        %v5902 = vld [vmem:[#allocation13 + $0xd0] sm:$0xff]
        %v5903 = vld [vmem:[#allocation13 + $0xd8] sm:$0xff]
        %v5904 = vld [vmem:[#allocation13 + $0xe0] sm:$0xff]
        %v5905 = vld [vmem:[#allocation13 + $0xe8] sm:$0xff]
        %v5906 = vld [vmem:[#allocation13 + $0xf0] sm:$0xff]
        %v5907 = vld [vmem:[#allocation13 + $0xf8] sm:$0xff]
        %v5908 = vpack.c.bf16 %v4959, %v4951
        %v5909 = vpack.c.bf16 %v4960, %v4952
        %v5910 = vpack.c.bf16 %v4975, %v4967
        %v5911 = vpack.c.bf16 %v4976, %v4968
        %v5912 = vpack.c.bf16 %v4991, %v4983
        %v5913 = vpack.c.bf16 %v4992, %v4984
        %v5914 = vpack.c.bf16 %v5007, %v4999
        %v5915 = vpack.c.bf16 %v5008, %v5000
        %v5948 = vunpack.c.l.b16 %v5876
        %v5949 = vunpack.c.h.b16 %v5876
        %v5950 = vunpack.c.l.b16 %v5877
        %v5951 = vunpack.c.h.b16 %v5877
        %v5952 = vunpack.c.l.b16 %v5878
        %v5953 = vunpack.c.h.b16 %v5878
        %v5954 = vunpack.c.l.b16 %v5879
        %v5955 = vunpack.c.h.b16 %v5879
        %v5956 = vunpack.c.l.b16 %v5880
        %v5957 = vunpack.c.h.b16 %v5880
        %v5958 = vunpack.c.l.b16 %v5881
        %v5959 = vunpack.c.h.b16 %v5881
        %v5960 = vunpack.c.l.b16 %v5882
        %v5961 = vunpack.c.h.b16 %v5882
        %v5962 = vunpack.c.l.b16 %v5883
        %v5963 = vunpack.c.h.b16 %v5883
        %v5964 = vunpack.c.l.b16 %v5884
        %v5965 = vunpack.c.h.b16 %v5884
        %v5966 = vunpack.c.l.b16 %v5885
        %v5967 = vunpack.c.h.b16 %v5885
        %v5968 = vunpack.c.l.b16 %v5886
        %v5969 = vunpack.c.h.b16 %v5886
        %v5970 = vunpack.c.l.b16 %v5887
        %v5971 = vunpack.c.h.b16 %v5887
        %v5972 = vunpack.c.l.b16 %v5888
        %v5973 = vunpack.c.h.b16 %v5888
        %v5974 = vunpack.c.l.b16 %v5889
        %v5975 = vunpack.c.h.b16 %v5889
        %v5976 = vunpack.c.l.b16 %v5890
        %v5977 = vunpack.c.h.b16 %v5890
        %v5978 = vunpack.c.l.b16 %v5891
        %v5979 = vunpack.c.h.b16 %v5891
        %v5980 = vunpack.c.l.b16 %v5892
        %v5981 = vunpack.c.h.b16 %v5892
        %v5982 = vunpack.c.l.b16 %v5893
        %v5983 = vunpack.c.h.b16 %v5893
        %v5984 = vunpack.c.l.b16 %v5894
        %v5985 = vunpack.c.h.b16 %v5894
        %v5986 = vunpack.c.l.b16 %v5895
        %v5987 = vunpack.c.h.b16 %v5895
        %v5988 = vunpack.c.l.b16 %v5896
        %v5989 = vunpack.c.h.b16 %v5896
        %v5990 = vunpack.c.l.b16 %v5897
        %v5991 = vunpack.c.h.b16 %v5897
        %v5992 = vunpack.c.l.b16 %v5898
        %v5993 = vunpack.c.h.b16 %v5898
        %v5994 = vunpack.c.l.b16 %v5899
        %v5995 = vunpack.c.h.b16 %v5899
        %v5996 = vunpack.c.l.b16 %v5900
        %v5997 = vunpack.c.h.b16 %v5900
        %v5998 = vunpack.c.l.b16 %v5901
        %v5999 = vunpack.c.h.b16 %v5901
        %v6000 = vunpack.c.l.b16 %v5902
        %v6001 = vunpack.c.h.b16 %v5902
        %v6002 = vunpack.c.l.b16 %v5903
        %v6003 = vunpack.c.h.b16 %v5903
        %v6004 = vunpack.c.l.b16 %v5904
        %v6005 = vunpack.c.h.b16 %v5904
        %v6006 = vunpack.c.l.b16 %v5905
        %v6007 = vunpack.c.h.b16 %v5905
        %v6008 = vunpack.c.l.b16 %v5906
        %v6009 = vunpack.c.h.b16 %v5906
        %v6010 = vunpack.c.l.b16 %v5907
        %v6011 = vunpack.c.h.b16 %v5907
        %v6012 = vpack.c.b16 %v5950, %v5948
        %v6013 = vpack.c.b16 %v5951, %v5949
        %v6014 = vpack.c.b16 %v5954, %v5952
        %v6015 = vpack.c.b16 %v5955, %v5953
        %v6016 = vpack.c.b16 %v5958, %v5956
        %v6017 = vpack.c.b16 %v5959, %v5957
        %v6018 = vpack.c.b16 %v5962, %v5960
        %v6019 = vpack.c.b16 %v5963, %v5961
        %v6020 = vpack.c.b16 %v5966, %v5964
        %v6021 = vpack.c.b16 %v5967, %v5965
        %v6022 = vpack.c.b16 %v5970, %v5968
        %v6023 = vpack.c.b16 %v5971, %v5969
        %v6024 = vpack.c.b16 %v5974, %v5972
        %v6025 = vpack.c.b16 %v5975, %v5973
        %v6026 = vpack.c.b16 %v5978, %v5976
        %v6027 = vpack.c.b16 %v5979, %v5977
        %v6028 = vpack.c.b16 %v5982, %v5980
        %v6029 = vpack.c.b16 %v5983, %v5981
        %v6030 = vpack.c.b16 %v5986, %v5984
        %v6031 = vpack.c.b16 %v5987, %v5985
        %v6032 = vpack.c.b16 %v5990, %v5988
        %v6033 = vpack.c.b16 %v5991, %v5989
        %v6034 = vpack.c.b16 %v5994, %v5992
        %v6035 = vpack.c.b16 %v5995, %v5993
        %v6036 = vpack.c.b16 %v5998, %v5996
        %v6037 = vpack.c.b16 %v5999, %v5997
        %v6038 = vpack.c.b16 %v6002, %v6000
        %v6039 = vpack.c.b16 %v6003, %v6001
        %v6040 = vpack.c.b16 %v6006, %v6004
        %v6041 = vpack.c.b16 %v6007, %v6005
        %v6042 = vpack.c.b16 %v6010, %v6008
        %v6043 = vpack.c.b16 %v6011, %v6009
        %6076 = vmatprep.subr.bf16.mxu0 %v6027
        %6077 = vmatpush1.bf16.msra.mxu0 %v6026
        %6078 = vmatprep.subr.bf16.mxu0 %v6025
        %6079 = vmatpush1.bf16.msra.mxu0 %v6024
        %6080 = vmatprep.subr.bf16.mxu0 %v6023
        %6081 = vmatpush1.bf16.msra.mxu0 %v6022
        %6082 = vmatprep.subr.bf16.mxu0 %v6021
        %6083 = vmatpush1.bf16.msra.mxu0 %v6020
        %6084 = vmatprep.subr.bf16.mxu0 %v6019
        %6085 = vmatpush1.bf16.msra.mxu0 %v6018
        %6086 = vmatprep.subr.bf16.mxu0 %v6017
        %6087 = vmatpush1.bf16.msra.mxu0 %v6016
        %6088 = vmatprep.subr.bf16.mxu0 %v6015
        %6089 = vmatpush1.bf16.msra.mxu0 %v6014
        %6090 = vmatprep.subr.bf16.mxu0 %v6013
        %6091 = vmatpush1.bf16.msra.mxu0 %v6012
        %6092 = vmatprep.subr.bf16.mxu0 %v6043
        %6093 = vmatpush2.bf16.msra.mxu0 %v6042
        %6094 = vmatprep.subr.bf16.mxu0 %v6041
        %6095 = vmatpush2.bf16.msra.mxu0 %v6040
        %6096 = vmatprep.subr.bf16.mxu0 %v6039
        %6097 = vmatpush2.bf16.msra.mxu0 %v6038
        %6098 = vmatprep.subr.bf16.mxu0 %v6037
        %6099 = vmatpush2.bf16.msra.mxu0 %v6036
        %6100 = vmatprep.subr.bf16.mxu0 %v6035
        %6101 = vmatpush2.bf16.msra.mxu0 %v6034
        %6102 = vmatprep.subr.bf16.mxu0 %v6033
        %6103 = vmatpush2.bf16.msra.mxu0 %v6032
        %6104 = vmatprep.subr.bf16.mxu0 %v6031
        %6105 = vmatpush2.bf16.msra.mxu0 %v6030
        %6106 = vmatprep.subr.bf16.mxu0 %v6029
        %6107 = vmatpush2.bf16.msra.mxu0 %v6028
        %6108 = vmatprep.mubr.bf16.mxu0 %v5909
        %6109 = vmatmul.mubr.bf16.gmra.mxu0 %v5908
        %v6110 = vpop.f32.mrf.mxu0
        %v6111 = vadd.f32 0.0, %v6110
        %v6112 = vpop.f32.mrf.mxu0
        %v6113 = vadd.f32 0.0, %v6112
        %v6114 = vpop.f32.mrf.mxu0
        %v6115 = vadd.f32 0.0, %v6114
        %v6116 = vpop.f32.mrf.mxu0
        %v6117 = vadd.f32 0.0, %v6116
        %6118 = vmatprep.mubr.bf16.mxu0 %v5911
        %6119 = vmatmul.mubr.bf16.gmra.mxu0 %v5910
        %v6120 = vpop.f32.mrf.mxu0
        %v6121 = vadd.f32 0.0, %v6120
        %v6122 = vpop.f32.mrf.mxu0
        %v6123 = vadd.f32 0.0, %v6122
        %v6124 = vpop.f32.mrf.mxu0
        %v6125 = vadd.f32 0.0, %v6124
        %v6126 = vpop.f32.mrf.mxu0
        %v6127 = vadd.f32 0.0, %v6126
        %6128 = vmatprep.mubr.bf16.mxu0 %v5913
        %6129 = vmatmul.mubr.bf16.gmra.mxu0 %v5912
        %v6130 = vpop.f32.mrf.mxu0
        %v6131 = vadd.f32 0.0, %v6130
        %v6132 = vpop.f32.mrf.mxu0
        %v6133 = vadd.f32 0.0, %v6132
        %v6134 = vpop.f32.mrf.mxu0
        %v6135 = vadd.f32 0.0, %v6134
        %v6136 = vpop.f32.mrf.mxu0
        %v6137 = vadd.f32 0.0, %v6136
        %6138 = vmatprep.mubr.bf16.mxu0 %v5915
        %6139 = vmatmul.mubr.bf16.gmra.mxu0 %v5914
        %v6140 = vpop.f32.mrf.mxu0
        %v6141 = vadd.f32 0.0, %v6140
        %v6142 = vpop.f32.mrf.mxu0
        %v6143 = vadd.f32 0.0, %v6142
        %v6144 = vpop.f32.mrf.mxu0
        %v6145 = vadd.f32 0.0, %v6144
        %v6146 = vpop.f32.mrf.mxu0
        %v6147 = vadd.f32 0.0, %v6146
        %6148 = vdwg.mxu0
        %6149 = vst [vmem:[%s384 + $0x30] sm:$0xff] %v6111
        %6150 = vst [vmem:[%s384 + $0x38] sm:$0xff] %v6113
        %6151 = vst [vmem:[%s384 + $0x70] sm:$0xff] %v6115
        %6152 = vst [vmem:[%s384 + $0x78] sm:$0xff] %v6117
        %6153 = vst [vmem:[%s384 + $0xb0] sm:$0xff] %v6121
        %6154 = vst [vmem:[%s384 + $0xb8] sm:$0xff] %v6123
        %6155 = vst [vmem:[%s384 + $0xf0] sm:$0xff] %v6125
        %6156 = vst [vmem:[%s384 + $0xf8] sm:$0xff] %v6127
        %6157 = vst [vmem:[%s384 + $0x130] sm:$0xff] %v6131
        %6158 = vst [vmem:[%s384 + $0x138] sm:$0xff] %v6133
        %6159 = vst [vmem:[%s384 + $0x170] sm:$0xff] %v6135
        %6160 = vst [vmem:[%s384 + $0x178] sm:$0xff] %v6137
        %6161 = vst [vmem:[%s384 + $0x1b0] sm:$0xff] %v6141
        %6162 = vst [vmem:[%s384 + $0x1b8] sm:$0xff] %v6143
        %6163 = vst [vmem:[%s384 + $0x1f0] sm:$0xff] %v6145
        %6164 = vst [vmem:[%s384 + $0x1f8] sm:$0xff] %v6147
        %s6165 = sand.u32 %s187, 1
        %s6166 = scalar_lea.sflag [#allocation4], %s6165
        %s6167 = sand.u32 %s187, 1
        %s6168 = smul.addr %s6167, 512
        %s6169 = scalar_lea.vmem [#allocation14], %s6168
        // Predicated region
        $region77: #{tpu_custom_call.1} parent=47 // pred_check
          %p6170 = pneg %p197
        $region78: #{tpu_custom_call.1} parent=47 // pred_check_branch
          %6172 = sbr.rel (%p6170) target = $region80
        $region79: #{tpu_custom_call.1} parent=47 // pred_region
          %s6173 = smul.u32 8, %s27
          %s6175 = ssub.s32 8192, 8192
          %6176 = vsyncadd %s6166, %s6175
          %s6177 = smul.addr %s6173, 8
          %s6178 = smul.addr %s6177, 128
          %s6179 = scalar_lea.hbm %s7, %s6178
          %s6180 = sshll.u32 %s6169, 4
          %s6181 = int_to_ptr.vmem [resolvable:$true] %s6180
          %6186 = dma.vmem_to_hbm [thread:$0]  %s6181, 8192, %s6179, %s6166, 1024, 1024, 64
        $region80: #{tpu_custom_call.1} parent=47 // pred_fallthru
          _
      $region48: #{tpu_custom_call.1} parent=5 // pred_fallthru
        _
      %p6187 = scmp.le.s32.totalorder 2, %s22
      // Predicated region
      $region81: #{tpu_custom_call.1} parent=5 // pred_check
        %p6188 = pneg %p6187
      $region82: #{tpu_custom_call.1} parent=5 // pred_check_branch
        %6190 = sbr.rel (%p6188) target = $region84
      $region83: #{tpu_custom_call.1} parent=5 // pred_region
        %s6191 = ssub.s32 %s22, 2
        // Predicated region
        $region85: #{tpu_custom_call.1} parent=83 // pred_check
          %p6192 = pneg %p203
        $region86: #{tpu_custom_call.1} parent=83 // pred_check_branch
          %6194 = sbr.rel (%p6192) target = $region88
        $region87: #{tpu_custom_call.1} parent=83 // pred_region
          %s6195 = sand.u32 %s188, 1
          %s6196 = scalar_lea.sflag [#allocation4], %s6195
          %s6197 = sand.u32 %s188, 1
          %s6198 = smul.addr %s6197, 512
          %s6199 = scalar_lea.vmem [#allocation14], %s6198
          %6200 = dma.done %s6196, 8192
        $region88: #{tpu_custom_call.1} parent=83 // pred_fallthru
          _
      $region84: #{tpu_custom_call.1} parent=5 // pred_fallthru
        _
    $region6: #{tpu_custom_call.1} parent=1 // loop_footer
      %s26 = sadd.s32 1, %s22
    $region7: #{tpu_custom_call.1} parent=1 // loop_footer_branch
      %21 = sbr.rel target = $region3
    $region8: #{tpu_custom_call.1} parent=1 // loop_exit
      _
    %6201 = vsyncpa [#allocation3], 1
    %s6202 = scalar_lea.sflag [#allocation3], 1
    %6203 = vsyncpa %s6202, 1
    %6204 = vsyncpa [#allocation6], 1
    %6205 = vsyncpa [#allocation9], 1
    %6206 = vsyncpa [#allocation12], 1
    %6207 = vsyncpa [#allocation4], 1
    %s6208 = scalar_lea.sflag [#allocation4], 1
    %6209 = vsyncpa %s6208, 1

</llo_original>
